<compile_context>
chip_gen: v7x
topology: tpu7x:2x2x1
jax: 0.10.0
libtpu: 0.0.40
codegen_flags: <defaults>
</compile_context>

<pallas_src>
import jax
import jax.numpy as jnp
import numpy as np
from jax import lax
from jax.experimental import pallas as pl
from jax.experimental.pallas import tpu as pltpu

CIN, COUT, K = 3, 3, 3
D, H, W = 64, 4, 4
STRIDE, DIL = 2, 2

# conv_transpose3d output dims: (in - 1)*stride + dilation*(K - 1) + 1
OD_F = (D - 1) * STRIDE + DIL * (K - 1) + 1   # 131
OH_F = (H - 1) * STRIDE + DIL * (K - 1) + 1   # 11
OW_F = (W - 1) * STRIDE + DIL * (K - 1) + 1   # 11

# dense (even-index) core of the output
OD, OH, OW = D + K - 1, H + K - 1, W + K - 1  # 66, 6, 6
NP_CORE = OD * OH * OW                        # 2376
KK = CIN * K * K * K                          # 81 (contraction dim)

# lane/sublane-aligned padded sizes for the in-kernel matmul
N_PAD = ((NP_CORE + 127) // 128) * 128        # 2432 = 19 * 128 lanes
K_PAD = ((KK + 7) // 8) * 8                   # 88 (was 128) -> -31% DMA bytes


def convt_matmul_kernel(w_ref, p_ref, out_ref):
    # w_ref:   VMEM (COUT, K_PAD)  f32 -- flipped weights, [co, (ci,kd,kh,kw)], zero-padded
    # p_ref:   VMEM (K_PAD, N_PAD) f32 -- im2col patches, zero-padded
    # out_ref: VMEM (COUT, N_PAD)  f32 -- lane-dense output core
    out_ref[...] = jnp.dot(w_ref[...], p_ref[...],
                           preferred_element_type=jnp.float32)


@jax.jit
def conv_transpose3d_pallas(x, w):
    """x: (1, CIN, D, H, W) f32, w: (CIN, COUT, K, K, K) f32 (PyTorch layout).
    Matches F.conv_transpose3d(x, w, stride=2, padding=0, dilation=2)."""
    x = x.astype(jnp.float32)
    w = w.astype(jnp.float32)

    # zero-pad spatial dims by K-1 on each side (transposed conv == correlation
    # with the spatially flipped kernel on the padded input)
    x_pad = jnp.pad(x[0], ((0, 0), (K - 1, K - 1), (K - 1, K - 1), (K - 1, K - 1)))

    # ---- layout-only glue: im2col patches, lane-dense (KK, NP_CORE) ----------
    patch_list = []
    for kd in range(K):
        for kh in range(K):
            for kw in range(K):
                patch_list.append(
                    x_pad[:, kd:kd + OD, kh:kh + OH, kw:kw + OW].reshape(CIN, NP_CORE))
    # axis-1 ordered (kd, kh, kw); reshape => rows ordered (ci, kd, kh, kw)
    patches_core = jnp.stack(patch_list, axis=1).reshape(KK, NP_CORE)
    # single dynamic-update-slice into a pre-zeroed padded buffer (no second
    # jnp.pad copy); rows KK..K_PAD-1 stay zero, matched by zero weight columns.
    patches = jnp.zeros((K_PAD, N_PAD), jnp.float32).at[:KK, :NP_CORE].set(patches_core)

    # ---- flipped weights as a (COUT, K_PAD) matrix matching the patch order --
    w_flip = w[:, :, ::-1, ::-1, ::-1]
    w_mat = jnp.transpose(w_flip, (1, 0, 2, 3, 4)).reshape(COUT, KK)
    w_mat = jnp.pad(w_mat, ((0, 0), (0, K_PAD - KK)))   # (COUT, K_PAD)

    out_flat = pl.pallas_call(
        convt_matmul_kernel,
        out_shape=jax.ShapeDtypeStruct((COUT, N_PAD), jnp.float32),
        in_specs=[
            pl.BlockSpec(memory_space=pltpu.MemorySpace.VMEM),
            pl.BlockSpec(memory_space=pltpu.MemorySpace.VMEM),
        ],
        out_specs=pl.BlockSpec(memory_space=pltpu.MemorySpace.VMEM),
        compiler_params=pltpu.CompilerParams(
            # let XLA fuse the im2col slice/stack/update producer into the
            # patches operand instead of materializing it in HBM
            allow_input_fusion=[False, True],
        ),
        cost_estimate=pl.CostEstimate(
            flops=2 * COUT * K_PAD * N_PAD,
            transcendentals=0,
            bytes_accessed=4 * (COUT * K_PAD + K_PAD * N_PAD + COUT * N_PAD),
        ),
    )(w_mat, patches)

    out_core = out_flat[:, :NP_CORE].reshape(COUT, OD, OH, OW)

    # zero-dilation back to the full output grid via interior padding:
    # 66 + 65 = 131 ; 6 + 5 = 11  (odd output indices are exactly zero)
    out = lax.pad(out_core, jnp.float32(0.0),
                  ((0, 0, 0),
                   (0, 0, STRIDE - 1), (0, 0, STRIDE - 1), (0, 0, STRIDE - 1)))
    return out[None]


def conv_transpose3d_ref(x, w):
    """Pure-JAX scatter-based reference of F.conv_transpose3d semantics."""
    ref = jnp.zeros((1, COUT, OD_F, OH_F, OW_F), jnp.float32)
    for kd in range(K):
        for kh in range(K):
            for kw in range(K):
                contrib = jnp.einsum('ncdhw,co->nodhw', x, w[:, :, kd, kh, kw])
                ref = ref.at[
                    :, :,
                    DIL * kd:DIL * kd + STRIDE * D:STRIDE,
                    DIL * kh:DIL * kh + STRIDE * H:STRIDE,
                    DIL * kw:DIL * kw + STRIDE * W:STRIDE,
                ].add(contrib)
    return ref


if __name__ == "__main__":
    key = jax.random.PRNGKey(0)
    kx, kw = jax.random.split(key)
    # deterministic stand-ins for torch.randn(1,3,64,4,4) and torch.randn(3,3,3,3,3)
    x = jax.random.normal(kx, (1, CIN, D, H, W), dtype=jnp.float32)
    w = jax.random.normal(kw, (CIN, COUT, K, K, K), dtype=jnp.float32)

    out = jax.block_until_ready(conv_transpose3d_pallas(x, w))
    assert out.shape == (1, COUT, OD_F, OH_F, OW_F), out.shape

    ref = jax.block_until_ready(conv_transpose3d_ref(x, w))
    np.testing.assert_allclose(np.asarray(out), np.asarray(ref), rtol=1e-4, atol=1e-4)

    print("KERNEL_OK")
</pallas_src>

<mosaic_0001>
module attributes {stable_mosaic.version = 11 : i64} {
  func.func @convt_matmul_kernel(%arg0: memref<3x88xf32, #tpu.memory_space<vmem>>, %arg1: memref<88x2432xf32, #tpu.memory_space<vmem>>, %arg2: memref<3x2432xf32, #tpu.memory_space<vmem>>) attributes {dimension_semantics = [], scalar_prefetch = 0 : i64, scratch_operands = 0 : i64, tpu.core_type = #tpu.core_type<tc>} {
    %c0 = arith.constant 0 : index
    %c0_0 = arith.constant 0 : index
    %0 = vector.load %arg0[%c0, %c0_0] : memref<3x88xf32, #tpu.memory_space<vmem>>, vector<3x88xf32>
    %c0_1 = arith.constant 0 : index
    %c0_2 = arith.constant 0 : index
    %1 = vector.load %arg1[%c0_1, %c0_2] : memref<88x2432xf32, #tpu.memory_space<vmem>>, vector<88x2432xf32>
    %cst = arith.constant dense<0.000000e+00> : vector<3x2432xf32>
    %2 = tpu.matmul %0, %1, %cst {dimension_numbers = #tpu.dot_dimension_numbers<[1], [0], [0], [1], [0, 0, 1, 1], [], []>} : vector<3x88xf32>, vector<88x2432xf32>, vector<3x2432xf32> -> vector<3x2432xf32>
    %c0_3 = arith.constant 0 : index
    %c0_4 = arith.constant 0 : index
    %3 = vector.load %arg2[%c0_3, %c0_4] : memref<3x2432xf32, #tpu.memory_space<vmem>>, vector<3x2432xf32>
    tpu.vector_store %arg2[%c0_3, %c0_4], %2 {strides = array<i32>} : memref<3x2432xf32, #tpu.memory_space<vmem>>, vector<3x2432xf32>,
    return
  }
}

</mosaic_0001>

<llo_original>
// kernel: conv_transpose3d_pallas.2
$region0: #{conv_transpose3d_pallas.2}
  #allocation0 [shape = 'u32[]', space=smem, size = 0x4, offset = 0x4, fixed_abs, tag = 'smem constant byte address 0x4 - core index']
  #allocation1 [shape = 'u32[144,128]{1,0:T(1,128)}', space=vmem, size = 0x12000, scoped, tag = 'internal scratch']
  #allocation2 [shape = 'u32[2048]{0}', space=vmem, size = 0x2000, scoped, tag = 'scoped memory for conv_transpose3d_pallas.2']
  #allocation3 [shape = 'u32[2048]{0}', space=vmem, size = 0x2000, scoped, tag = 'scoped memory for conv_transpose3d_pallas.2']
  #allocation4 [shape = 'u32[2048]{0}', space=vmem, size = 0x2000, scoped, tag = 'scoped memory for conv_transpose3d_pallas.2']
  #allocation5 [shape = 'u32[2048]{0}', space=vmem, size = 0x2000, scoped, tag = 'scoped memory for conv_transpose3d_pallas.2']
  #allocation6 [shape = 'u32[2048]{0}', space=vmem, size = 0x2000, scoped, tag = 'scoped memory for conv_transpose3d_pallas.2']
  %s0 = inlined_call_operand.vmem [shape: f32[3,88], index: 0, kind: input, shape index: {}]
  %s1 = inlined_call_operand.vmem [shape: f32[81,2376], index: 1, kind: input, shape index: {}]
  %s2 = inlined_call_operand.<no memory space> [shape: f32[], index: 2, kind: input, shape index: {}]
  %s3 = inlined_call_operand.vmem [shape: f32[3,2432], index: 3, kind: output, shape index: {}]
  %s4 = sld [smem:[#allocation0]]
  $region18: #{conv_transpose3d_pallas.2} parent=0
    _
  %s6 = ssub.s32 1, %s4
  %s7 = scalar_select 0, %s6, %s4
  %v8 = vstv %s2
  $region1: #{conv_transpose3d_pallas.2} parent=0
    #allocation7 [shape = 'u8[856064]{0}', space=vmem, size = 0xd1000, dematerialized = true, scoped, tag = 'FusionAdapter Buffer %fusion.1 = f32[88,2432]{1,0:T(8,128)} fusion(%param_1.28, %param_2), kind=kLoop, calls=%fused_computation.28.clone, metadata={op_name="jit(conv_transpose3d_pallas)/scatter" stack_frame_id=7}']
    // Predicated region
    $region2: #{conv_transpose3d_pallas.2} parent=1 // pred_check
      _
    $region3: #{conv_transpose3d_pallas.2} parent=1 // pred_check_branch
      %10 = sbr.rel (0) target = $region5
    $region4: #{conv_transpose3d_pallas.2} parent=1 // pred_region
      _
    $region5: #{conv_transpose3d_pallas.2} parent=1 // pred_fallthru
      _
    // Predicated region
    $region6: #{conv_transpose3d_pallas.2} parent=1 // pred_check
      _
    $region7: #{conv_transpose3d_pallas.2} parent=1 // pred_check_branch
      %12 = sbr.rel (0) target = $region9
    $region8: #{conv_transpose3d_pallas.2} parent=1 // pred_region
      _
    $region9: #{conv_transpose3d_pallas.2} parent=1 // pred_fallthru
      _
    %v13 = vld [vmem:[%s1] sm:$0xff]
    %v14 = vlaneseq
    %v15 = vshrl.u32 %v14, 7
    %vm17 = vcmp.lt.s32.totalorder %v15, 81
    %v18 = vsel %vm17, %v13, %v8
    %v19 = vlaneseq
    %v20 = vand.u32 %v19, 127
    %vm22 = vcmp.lt.s32.totalorder %v20, 2376
    %v23 = vsel %vm22, %v18, %v8
    %25 = vst [vmem:[#allocation7] sm:$0xff] %v23
    %s26 = scalar_lea.vmem %s1, 8
    %v27 = vld [vmem:[%s26] sm:$0xff]
    %v28 = vlaneseq
    %v29 = vshrl.u32 %v28, 7
    %vm31 = vcmp.lt.s32.totalorder %v29, 81
    %v32 = vsel %vm31, %v27, %v8
    %v33 = vlaneseq
    %v34 = vand.u32 %v33, 127
    %v35 = vadd.s32 %v34, 128
    %vm36 = vcmp.lt.s32.totalorder %v35, 2376
    %v37 = vsel %vm36, %v32, %v8
    %s38 = scalar_lea.vmem [#allocation7], 8
    %40 = vst [vmem:[%s38] sm:$0xff] %v37
    %s41 = scalar_lea.vmem %s1, 16
    %v42 = vld [vmem:[%s41] sm:$0xff]
    %v43 = vlaneseq
    %v44 = vshrl.u32 %v43, 7
    %vm46 = vcmp.lt.s32.totalorder %v44, 81
    %v47 = vsel %vm46, %v42, %v8
    %v48 = vlaneseq
    %v49 = vand.u32 %v48, 127
    %v50 = vadd.s32 %v49, 256
    %vm51 = vcmp.lt.s32.totalorder %v50, 2376
    %v52 = vsel %vm51, %v47, %v8
    %s53 = scalar_lea.vmem [#allocation7], 16
    %55 = vst [vmem:[%s53] sm:$0xff] %v52
    %s56 = scalar_lea.vmem %s1, 24
    %v57 = vld [vmem:[%s56] sm:$0xff]
    %v58 = vlaneseq
    %v59 = vshrl.u32 %v58, 7
    %vm61 = vcmp.lt.s32.totalorder %v59, 81
    %v62 = vsel %vm61, %v57, %v8
    %v63 = vlaneseq
    %v64 = vand.u32 %v63, 127
    %v65 = vadd.s32 %v64, 384
    %vm66 = vcmp.lt.s32.totalorder %v65, 2376
    %v67 = vsel %vm66, %v62, %v8
    %s68 = scalar_lea.vmem [#allocation7], 24
    %70 = vst [vmem:[%s68] sm:$0xff] %v67
    %s71 = scalar_lea.vmem %s1, 32
    %v72 = vld [vmem:[%s71] sm:$0xff]
    %v73 = vlaneseq
    %v74 = vshrl.u32 %v73, 7
    %vm76 = vcmp.lt.s32.totalorder %v74, 81
    %v77 = vsel %vm76, %v72, %v8
    %v78 = vlaneseq
    %v79 = vand.u32 %v78, 127
    %v80 = vadd.s32 %v79, 512
    %vm81 = vcmp.lt.s32.totalorder %v80, 2376
    %v82 = vsel %vm81, %v77, %v8
    %s83 = scalar_lea.vmem [#allocation7], 32
    %85 = vst [vmem:[%s83] sm:$0xff] %v82
    %s86 = scalar_lea.vmem %s1, 40
    %v87 = vld [vmem:[%s86] sm:$0xff]
    %v88 = vlaneseq
    %v89 = vshrl.u32 %v88, 7
    %vm91 = vcmp.lt.s32.totalorder %v89, 81
    %v92 = vsel %vm91, %v87, %v8
    %v93 = vlaneseq
    %v94 = vand.u32 %v93, 127
    %v95 = vadd.s32 %v94, 640
    %vm96 = vcmp.lt.s32.totalorder %v95, 2376
    %v97 = vsel %vm96, %v92, %v8
    %s98 = scalar_lea.vmem [#allocation7], 40
    %100 = vst [vmem:[%s98] sm:$0xff] %v97
    %s101 = scalar_lea.vmem %s1, 48
    %v102 = vld [vmem:[%s101] sm:$0xff]
    %v103 = vlaneseq
    %v104 = vshrl.u32 %v103, 7
    %vm106 = vcmp.lt.s32.totalorder %v104, 81
    %v107 = vsel %vm106, %v102, %v8
    %v108 = vlaneseq
    %v109 = vand.u32 %v108, 127
    %v110 = vadd.s32 %v109, 768
    %vm111 = vcmp.lt.s32.totalorder %v110, 2376
    %v112 = vsel %vm111, %v107, %v8
    %s113 = scalar_lea.vmem [#allocation7], 48
    %115 = vst [vmem:[%s113] sm:$0xff] %v112
    %s116 = scalar_lea.vmem %s1, 56
    %v117 = vld [vmem:[%s116] sm:$0xff]
    %v118 = vlaneseq
    %v119 = vshrl.u32 %v118, 7
    %vm121 = vcmp.lt.s32.totalorder %v119, 81
    %v122 = vsel %vm121, %v117, %v8
    %v123 = vlaneseq
    %v124 = vand.u32 %v123, 127
    %v125 = vadd.s32 %v124, 896
    %vm126 = vcmp.lt.s32.totalorder %v125, 2376
    %v127 = vsel %vm126, %v122, %v8
    %s128 = scalar_lea.vmem [#allocation7], 56
    %130 = vst [vmem:[%s128] sm:$0xff] %v127
    %s131 = scalar_lea.vmem %s1, 64
    %v132 = vld [vmem:[%s131] sm:$0xff]
    %v133 = vlaneseq
    %v134 = vshrl.u32 %v133, 7
    %vm136 = vcmp.lt.s32.totalorder %v134, 81
    %v137 = vsel %vm136, %v132, %v8
    %v138 = vlaneseq
    %v139 = vand.u32 %v138, 127
    %v140 = vadd.s32 %v139, 1024
    %vm141 = vcmp.lt.s32.totalorder %v140, 2376
    %v142 = vsel %vm141, %v137, %v8
    %s143 = scalar_lea.vmem [#allocation7], 64
    %145 = vst [vmem:[%s143] sm:$0xff] %v142
    %s146 = scalar_lea.vmem %s1, 72
    %v147 = vld [vmem:[%s146] sm:$0xff]
    %v148 = vlaneseq
    %v149 = vshrl.u32 %v148, 7
    %vm151 = vcmp.lt.s32.totalorder %v149, 81
    %v152 = vsel %vm151, %v147, %v8
    %v153 = vlaneseq
    %v154 = vand.u32 %v153, 127
    %v155 = vadd.s32 %v154, 1152
    %vm156 = vcmp.lt.s32.totalorder %v155, 2376
    %v157 = vsel %vm156, %v152, %v8
    %s158 = scalar_lea.vmem [#allocation7], 72
    %160 = vst [vmem:[%s158] sm:$0xff] %v157
    %s161 = scalar_lea.vmem %s1, 80
    %v162 = vld [vmem:[%s161] sm:$0xff]
    %v163 = vlaneseq
    %v164 = vshrl.u32 %v163, 7
    %vm166 = vcmp.lt.s32.totalorder %v164, 81
    %v167 = vsel %vm166, %v162, %v8
    %v168 = vlaneseq
    %v169 = vand.u32 %v168, 127
    %v170 = vadd.s32 %v169, 1280
    %vm171 = vcmp.lt.s32.totalorder %v170, 2376
    %v172 = vsel %vm171, %v167, %v8
    %s173 = scalar_lea.vmem [#allocation7], 80
    %175 = vst [vmem:[%s173] sm:$0xff] %v172
    %s176 = scalar_lea.vmem %s1, 88
    %v177 = vld [vmem:[%s176] sm:$0xff]
    %v178 = vlaneseq
    %v179 = vshrl.u32 %v178, 7
    %vm181 = vcmp.lt.s32.totalorder %v179, 81
    %v182 = vsel %vm181, %v177, %v8
    %v183 = vlaneseq
    %v184 = vand.u32 %v183, 127
    %v185 = vadd.s32 %v184, 1408
    %vm186 = vcmp.lt.s32.totalorder %v185, 2376
    %v187 = vsel %vm186, %v182, %v8
    %s188 = scalar_lea.vmem [#allocation7], 88
    %190 = vst [vmem:[%s188] sm:$0xff] %v187
    %s191 = scalar_lea.vmem %s1, 96
    %v192 = vld [vmem:[%s191] sm:$0xff]
    %v193 = vlaneseq
    %v194 = vshrl.u32 %v193, 7
    %vm196 = vcmp.lt.s32.totalorder %v194, 81
    %v197 = vsel %vm196, %v192, %v8
    %v198 = vlaneseq
    %v199 = vand.u32 %v198, 127
    %v200 = vadd.s32 %v199, 1536
    %vm201 = vcmp.lt.s32.totalorder %v200, 2376
    %v202 = vsel %vm201, %v197, %v8
    %s203 = scalar_lea.vmem [#allocation7], 96
    %205 = vst [vmem:[%s203] sm:$0xff] %v202
    %s206 = scalar_lea.vmem %s1, 104
    %v207 = vld [vmem:[%s206] sm:$0xff]
    %v208 = vlaneseq
    %v209 = vshrl.u32 %v208, 7
    %vm211 = vcmp.lt.s32.totalorder %v209, 81
    %v212 = vsel %vm211, %v207, %v8
    %v213 = vlaneseq
    %v214 = vand.u32 %v213, 127
    %v215 = vadd.s32 %v214, 1664
    %vm216 = vcmp.lt.s32.totalorder %v215, 2376
    %v217 = vsel %vm216, %v212, %v8
    %s218 = scalar_lea.vmem [#allocation7], 104
    %220 = vst [vmem:[%s218] sm:$0xff] %v217
    %s221 = scalar_lea.vmem %s1, 112
    %v222 = vld [vmem:[%s221] sm:$0xff]
    %v223 = vlaneseq
    %v224 = vshrl.u32 %v223, 7
    %vm226 = vcmp.lt.s32.totalorder %v224, 81
    %v227 = vsel %vm226, %v222, %v8
    %v228 = vlaneseq
    %v229 = vand.u32 %v228, 127
    %v230 = vadd.s32 %v229, 1792
    %vm231 = vcmp.lt.s32.totalorder %v230, 2376
    %v232 = vsel %vm231, %v227, %v8
    %s233 = scalar_lea.vmem [#allocation7], 112
    %235 = vst [vmem:[%s233] sm:$0xff] %v232
    %s236 = scalar_lea.vmem %s1, 120
    %v237 = vld [vmem:[%s236] sm:$0xff]
    %v238 = vlaneseq
    %v239 = vshrl.u32 %v238, 7
    %vm241 = vcmp.lt.s32.totalorder %v239, 81
    %v242 = vsel %vm241, %v237, %v8
    %v243 = vlaneseq
    %v244 = vand.u32 %v243, 127
    %v245 = vadd.s32 %v244, 1920
    %vm246 = vcmp.lt.s32.totalorder %v245, 2376
    %v247 = vsel %vm246, %v242, %v8
    %s248 = scalar_lea.vmem [#allocation7], 120
    %250 = vst [vmem:[%s248] sm:$0xff] %v247
    %s251 = scalar_lea.vmem %s1, 128
    %v252 = vld [vmem:[%s251] sm:$0xff]
    %v253 = vlaneseq
    %v254 = vshrl.u32 %v253, 7
    %vm256 = vcmp.lt.s32.totalorder %v254, 81
    %v257 = vsel %vm256, %v252, %v8
    %v258 = vlaneseq
    %v259 = vand.u32 %v258, 127
    %v260 = vadd.s32 %v259, 2048
    %vm261 = vcmp.lt.s32.totalorder %v260, 2376
    %v262 = vsel %vm261, %v257, %v8
    %s263 = scalar_lea.vmem [#allocation7], 128
    %265 = vst [vmem:[%s263] sm:$0xff] %v262
    %s266 = scalar_lea.vmem %s1, 136
    %v267 = vld [vmem:[%s266] sm:$0xff]
    %v268 = vlaneseq
    %v269 = vshrl.u32 %v268, 7
    %vm271 = vcmp.lt.s32.totalorder %v269, 81
    %v272 = vsel %vm271, %v267, %v8
    %v273 = vlaneseq
    %v274 = vand.u32 %v273, 127
    %v275 = vadd.s32 %v274, 2176
    %vm276 = vcmp.lt.s32.totalorder %v275, 2376
    %v277 = vsel %vm276, %v272, %v8
    %s278 = scalar_lea.vmem [#allocation7], 136
    %280 = vst [vmem:[%s278] sm:$0xff] %v277
    %s281 = scalar_lea.vmem %s1, 144
    %v282 = vld [vmem:[%s281] sm:$0xff]
    %v283 = vlaneseq
    %v284 = vshrl.u32 %v283, 7
    %vm286 = vcmp.lt.s32.totalorder %v284, 81
    %v287 = vsel %vm286, %v282, %v8
    %v288 = vlaneseq
    %v289 = vand.u32 %v288, 127
    %v290 = vadd.s32 %v289, 2304
    %vm291 = vcmp.lt.s32.totalorder %v290, 2376
    %v292 = vsel %vm291, %v287, %v8
    %s293 = scalar_lea.vmem [#allocation7], 144
    %295 = vst [vmem:[%s293] sm:$0xff] %v292
    %s296 = scalar_lea.vmem %s1, 152
    %v297 = vld [vmem:[%s296] sm:$0xff]
    %v298 = vlaneseq
    %v299 = vshrl.u32 %v298, 7
    %v300 = vadd.s32 %v299, 8
    %vm301 = vcmp.lt.s32.totalorder %v300, 81
    %v302 = vsel %vm301, %v297, %v8
    %v303 = vlaneseq
    %v304 = vand.u32 %v303, 127
    %vm306 = vcmp.lt.s32.totalorder %v304, 2376
    %v307 = vsel %vm306, %v302, %v8
    %s308 = scalar_lea.vmem [#allocation7], 152
    %310 = vst [vmem:[%s308] sm:$0xff] %v307
    %s311 = scalar_lea.vmem %s1, 160
    %v312 = vld [vmem:[%s311] sm:$0xff]
    %v313 = vlaneseq
    %v314 = vshrl.u32 %v313, 7
    %v315 = vadd.s32 %v314, 8
    %vm316 = vcmp.lt.s32.totalorder %v315, 81
    %v317 = vsel %vm316, %v312, %v8
    %v318 = vlaneseq
    %v319 = vand.u32 %v318, 127
    %v320 = vadd.s32 %v319, 128
    %vm321 = vcmp.lt.s32.totalorder %v320, 2376
    %v322 = vsel %vm321, %v317, %v8
    %s323 = scalar_lea.vmem [#allocation7], 160
    %325 = vst [vmem:[%s323] sm:$0xff] %v322
    %s326 = scalar_lea.vmem %s1, 168
    %v327 = vld [vmem:[%s326] sm:$0xff]
    %v328 = vlaneseq
    %v329 = vshrl.u32 %v328, 7
    %v330 = vadd.s32 %v329, 8
    %vm331 = vcmp.lt.s32.totalorder %v330, 81
    %v332 = vsel %vm331, %v327, %v8
    %v333 = vlaneseq
    %v334 = vand.u32 %v333, 127
    %v335 = vadd.s32 %v334, 256
    %vm336 = vcmp.lt.s32.totalorder %v335, 2376
    %v337 = vsel %vm336, %v332, %v8
    %s338 = scalar_lea.vmem [#allocation7], 168
    %340 = vst [vmem:[%s338] sm:$0xff] %v337
    %s341 = scalar_lea.vmem %s1, 176
    %v342 = vld [vmem:[%s341] sm:$0xff]
    %v343 = vlaneseq
    %v344 = vshrl.u32 %v343, 7
    %v345 = vadd.s32 %v344, 8
    %vm346 = vcmp.lt.s32.totalorder %v345, 81
    %v347 = vsel %vm346, %v342, %v8
    %v348 = vlaneseq
    %v349 = vand.u32 %v348, 127
    %v350 = vadd.s32 %v349, 384
    %vm351 = vcmp.lt.s32.totalorder %v350, 2376
    %v352 = vsel %vm351, %v347, %v8
    %s353 = scalar_lea.vmem [#allocation7], 176
    %355 = vst [vmem:[%s353] sm:$0xff] %v352
    %s356 = scalar_lea.vmem %s1, 184
    %v357 = vld [vmem:[%s356] sm:$0xff]
    %v358 = vlaneseq
    %v359 = vshrl.u32 %v358, 7
    %v360 = vadd.s32 %v359, 8
    %vm361 = vcmp.lt.s32.totalorder %v360, 81
    %v362 = vsel %vm361, %v357, %v8
    %v363 = vlaneseq
    %v364 = vand.u32 %v363, 127
    %v365 = vadd.s32 %v364, 512
    %vm366 = vcmp.lt.s32.totalorder %v365, 2376
    %v367 = vsel %vm366, %v362, %v8
    %s368 = scalar_lea.vmem [#allocation7], 184
    %370 = vst [vmem:[%s368] sm:$0xff] %v367
    %s371 = scalar_lea.vmem %s1, 192
    %v372 = vld [vmem:[%s371] sm:$0xff]
    %v373 = vlaneseq
    %v374 = vshrl.u32 %v373, 7
    %v375 = vadd.s32 %v374, 8
    %vm376 = vcmp.lt.s32.totalorder %v375, 81
    %v377 = vsel %vm376, %v372, %v8
    %v378 = vlaneseq
    %v379 = vand.u32 %v378, 127
    %v380 = vadd.s32 %v379, 640
    %vm381 = vcmp.lt.s32.totalorder %v380, 2376
    %v382 = vsel %vm381, %v377, %v8
    %s383 = scalar_lea.vmem [#allocation7], 192
    %385 = vst [vmem:[%s383] sm:$0xff] %v382
    %s386 = scalar_lea.vmem %s1, 200
    %v387 = vld [vmem:[%s386] sm:$0xff]
    %v388 = vlaneseq
    %v389 = vshrl.u32 %v388, 7
    %v390 = vadd.s32 %v389, 8
    %vm391 = vcmp.lt.s32.totalorder %v390, 81
    %v392 = vsel %vm391, %v387, %v8
    %v393 = vlaneseq
    %v394 = vand.u32 %v393, 127
    %v395 = vadd.s32 %v394, 768
    %vm396 = vcmp.lt.s32.totalorder %v395, 2376
    %v397 = vsel %vm396, %v392, %v8
    %s398 = scalar_lea.vmem [#allocation7], 200
    %400 = vst [vmem:[%s398] sm:$0xff] %v397
    %s401 = scalar_lea.vmem %s1, 208
    %v402 = vld [vmem:[%s401] sm:$0xff]
    %v403 = vlaneseq
    %v404 = vshrl.u32 %v403, 7
    %v405 = vadd.s32 %v404, 8
    %vm406 = vcmp.lt.s32.totalorder %v405, 81
    %v407 = vsel %vm406, %v402, %v8
    %v408 = vlaneseq
    %v409 = vand.u32 %v408, 127
    %v410 = vadd.s32 %v409, 896
    %vm411 = vcmp.lt.s32.totalorder %v410, 2376
    %v412 = vsel %vm411, %v407, %v8
    %s413 = scalar_lea.vmem [#allocation7], 208
    %415 = vst [vmem:[%s413] sm:$0xff] %v412
    %s416 = scalar_lea.vmem %s1, 216
    %v417 = vld [vmem:[%s416] sm:$0xff]
    %v418 = vlaneseq
    %v419 = vshrl.u32 %v418, 7
    %v420 = vadd.s32 %v419, 8
    %vm421 = vcmp.lt.s32.totalorder %v420, 81
    %v422 = vsel %vm421, %v417, %v8
    %v423 = vlaneseq
    %v424 = vand.u32 %v423, 127
    %v425 = vadd.s32 %v424, 1024
    %vm426 = vcmp.lt.s32.totalorder %v425, 2376
    %v427 = vsel %vm426, %v422, %v8
    %s428 = scalar_lea.vmem [#allocation7], 216
    %430 = vst [vmem:[%s428] sm:$0xff] %v427
    %s431 = scalar_lea.vmem %s1, 224
    %v432 = vld [vmem:[%s431] sm:$0xff]
    %v433 = vlaneseq
    %v434 = vshrl.u32 %v433, 7
    %v435 = vadd.s32 %v434, 8
    %vm436 = vcmp.lt.s32.totalorder %v435, 81
    %v437 = vsel %vm436, %v432, %v8
    %v438 = vlaneseq
    %v439 = vand.u32 %v438, 127
    %v440 = vadd.s32 %v439, 1152
    %vm441 = vcmp.lt.s32.totalorder %v440, 2376
    %v442 = vsel %vm441, %v437, %v8
    %s443 = scalar_lea.vmem [#allocation7], 224
    %445 = vst [vmem:[%s443] sm:$0xff] %v442
    %s446 = scalar_lea.vmem %s1, 232
    %v447 = vld [vmem:[%s446] sm:$0xff]
    %v448 = vlaneseq
    %v449 = vshrl.u32 %v448, 7
    %v450 = vadd.s32 %v449, 8
    %vm451 = vcmp.lt.s32.totalorder %v450, 81
    %v452 = vsel %vm451, %v447, %v8
    %v453 = vlaneseq
    %v454 = vand.u32 %v453, 127
    %v455 = vadd.s32 %v454, 1280
    %vm456 = vcmp.lt.s32.totalorder %v455, 2376
    %v457 = vsel %vm456, %v452, %v8
    %s458 = scalar_lea.vmem [#allocation7], 232
    %460 = vst [vmem:[%s458] sm:$0xff] %v457
    %s461 = scalar_lea.vmem %s1, 240
    %v462 = vld [vmem:[%s461] sm:$0xff]
    %v463 = vlaneseq
    %v464 = vshrl.u32 %v463, 7
    %v465 = vadd.s32 %v464, 8
    %vm466 = vcmp.lt.s32.totalorder %v465, 81
    %v467 = vsel %vm466, %v462, %v8
    %v468 = vlaneseq
    %v469 = vand.u32 %v468, 127
    %v470 = vadd.s32 %v469, 1408
    %vm471 = vcmp.lt.s32.totalorder %v470, 2376
    %v472 = vsel %vm471, %v467, %v8
    %s473 = scalar_lea.vmem [#allocation7], 240
    %475 = vst [vmem:[%s473] sm:$0xff] %v472
    %s476 = scalar_lea.vmem %s1, 248
    %v477 = vld [vmem:[%s476] sm:$0xff]
    %v478 = vlaneseq
    %v479 = vshrl.u32 %v478, 7
    %v480 = vadd.s32 %v479, 8
    %vm481 = vcmp.lt.s32.totalorder %v480, 81
    %v482 = vsel %vm481, %v477, %v8
    %v483 = vlaneseq
    %v484 = vand.u32 %v483, 127
    %v485 = vadd.s32 %v484, 1536
    %vm486 = vcmp.lt.s32.totalorder %v485, 2376
    %v487 = vsel %vm486, %v482, %v8
    %s488 = scalar_lea.vmem [#allocation7], 248
    %490 = vst [vmem:[%s488] sm:$0xff] %v487
    %s491 = scalar_lea.vmem %s1, 256
    %v492 = vld [vmem:[%s491] sm:$0xff]
    %v493 = vlaneseq
    %v494 = vshrl.u32 %v493, 7
    %v495 = vadd.s32 %v494, 8
    %vm496 = vcmp.lt.s32.totalorder %v495, 81
    %v497 = vsel %vm496, %v492, %v8
    %v498 = vlaneseq
    %v499 = vand.u32 %v498, 127
    %v500 = vadd.s32 %v499, 1664
    %vm501 = vcmp.lt.s32.totalorder %v500, 2376
    %v502 = vsel %vm501, %v497, %v8
    %s503 = scalar_lea.vmem [#allocation7], 256
    %505 = vst [vmem:[%s503] sm:$0xff] %v502
    %s506 = scalar_lea.vmem %s1, 264
    %v507 = vld [vmem:[%s506] sm:$0xff]
    %v508 = vlaneseq
    %v509 = vshrl.u32 %v508, 7
    %v510 = vadd.s32 %v509, 8
    %vm511 = vcmp.lt.s32.totalorder %v510, 81
    %v512 = vsel %vm511, %v507, %v8
    %v513 = vlaneseq
    %v514 = vand.u32 %v513, 127
    %v515 = vadd.s32 %v514, 1792
    %vm516 = vcmp.lt.s32.totalorder %v515, 2376
    %v517 = vsel %vm516, %v512, %v8
    %s518 = scalar_lea.vmem [#allocation7], 264
    %520 = vst [vmem:[%s518] sm:$0xff] %v517
    %s521 = scalar_lea.vmem %s1, 272
    %v522 = vld [vmem:[%s521] sm:$0xff]
    %v523 = vlaneseq
    %v524 = vshrl.u32 %v523, 7
    %v525 = vadd.s32 %v524, 8
    %vm526 = vcmp.lt.s32.totalorder %v525, 81
    %v527 = vsel %vm526, %v522, %v8
    %v528 = vlaneseq
    %v529 = vand.u32 %v528, 127
    %v530 = vadd.s32 %v529, 1920
    %vm531 = vcmp.lt.s32.totalorder %v530, 2376
    %v532 = vsel %vm531, %v527, %v8
    %s533 = scalar_lea.vmem [#allocation7], 272
    %535 = vst [vmem:[%s533] sm:$0xff] %v532
    %s536 = scalar_lea.vmem %s1, 280
    %v537 = vld [vmem:[%s536] sm:$0xff]
    %v538 = vlaneseq
    %v539 = vshrl.u32 %v538, 7
    %v540 = vadd.s32 %v539, 8
    %vm541 = vcmp.lt.s32.totalorder %v540, 81
    %v542 = vsel %vm541, %v537, %v8
    %v543 = vlaneseq
    %v544 = vand.u32 %v543, 127
    %v545 = vadd.s32 %v544, 2048
    %vm546 = vcmp.lt.s32.totalorder %v545, 2376
    %v547 = vsel %vm546, %v542, %v8
    %s548 = scalar_lea.vmem [#allocation7], 280
    %550 = vst [vmem:[%s548] sm:$0xff] %v547
    %s551 = scalar_lea.vmem %s1, 288
    %v552 = vld [vmem:[%s551] sm:$0xff]
    %v553 = vlaneseq
    %v554 = vshrl.u32 %v553, 7
    %v555 = vadd.s32 %v554, 8
    %vm556 = vcmp.lt.s32.totalorder %v555, 81
    %v557 = vsel %vm556, %v552, %v8
    %v558 = vlaneseq
    %v559 = vand.u32 %v558, 127
    %v560 = vadd.s32 %v559, 2176
    %vm561 = vcmp.lt.s32.totalorder %v560, 2376
    %v562 = vsel %vm561, %v557, %v8
    %s563 = scalar_lea.vmem [#allocation7], 288
    %565 = vst [vmem:[%s563] sm:$0xff] %v562
    %s566 = scalar_lea.vmem %s1, 296
    %v567 = vld [vmem:[%s566] sm:$0xff]
    %v568 = vlaneseq
    %v569 = vshrl.u32 %v568, 7
    %v570 = vadd.s32 %v569, 8
    %vm571 = vcmp.lt.s32.totalorder %v570, 81
    %v572 = vsel %vm571, %v567, %v8
    %v573 = vlaneseq
    %v574 = vand.u32 %v573, 127
    %v575 = vadd.s32 %v574, 2304
    %vm576 = vcmp.lt.s32.totalorder %v575, 2376
    %v577 = vsel %vm576, %v572, %v8
    %s578 = scalar_lea.vmem [#allocation7], 296
    %580 = vst [vmem:[%s578] sm:$0xff] %v577
    %s581 = scalar_lea.vmem %s1, 304
    %v582 = vld [vmem:[%s581] sm:$0xff]
    %v583 = vlaneseq
    %v584 = vshrl.u32 %v583, 7
    %v585 = vadd.s32 %v584, 16
    %vm586 = vcmp.lt.s32.totalorder %v585, 81
    %v587 = vsel %vm586, %v582, %v8
    %v588 = vlaneseq
    %v589 = vand.u32 %v588, 127
    %vm591 = vcmp.lt.s32.totalorder %v589, 2376
    %v592 = vsel %vm591, %v587, %v8
    %s593 = scalar_lea.vmem [#allocation7], 304
    %595 = vst [vmem:[%s593] sm:$0xff] %v592
    %s596 = scalar_lea.vmem %s1, 312
    %v597 = vld [vmem:[%s596] sm:$0xff]
    %v598 = vlaneseq
    %v599 = vshrl.u32 %v598, 7
    %v600 = vadd.s32 %v599, 16
    %vm601 = vcmp.lt.s32.totalorder %v600, 81
    %v602 = vsel %vm601, %v597, %v8
    %v603 = vlaneseq
    %v604 = vand.u32 %v603, 127
    %v605 = vadd.s32 %v604, 128
    %vm606 = vcmp.lt.s32.totalorder %v605, 2376
    %v607 = vsel %vm606, %v602, %v8
    %s608 = scalar_lea.vmem [#allocation7], 312
    %610 = vst [vmem:[%s608] sm:$0xff] %v607
    %s611 = scalar_lea.vmem %s1, 320
    %v612 = vld [vmem:[%s611] sm:$0xff]
    %v613 = vlaneseq
    %v614 = vshrl.u32 %v613, 7
    %v615 = vadd.s32 %v614, 16
    %vm616 = vcmp.lt.s32.totalorder %v615, 81
    %v617 = vsel %vm616, %v612, %v8
    %v618 = vlaneseq
    %v619 = vand.u32 %v618, 127
    %v620 = vadd.s32 %v619, 256
    %vm621 = vcmp.lt.s32.totalorder %v620, 2376
    %v622 = vsel %vm621, %v617, %v8
    %s623 = scalar_lea.vmem [#allocation7], 320
    %625 = vst [vmem:[%s623] sm:$0xff] %v622
    %s626 = scalar_lea.vmem %s1, 328
    %v627 = vld [vmem:[%s626] sm:$0xff]
    %v628 = vlaneseq
    %v629 = vshrl.u32 %v628, 7
    %v630 = vadd.s32 %v629, 16
    %vm631 = vcmp.lt.s32.totalorder %v630, 81
    %v632 = vsel %vm631, %v627, %v8
    %v633 = vlaneseq
    %v634 = vand.u32 %v633, 127
    %v635 = vadd.s32 %v634, 384
    %vm636 = vcmp.lt.s32.totalorder %v635, 2376
    %v637 = vsel %vm636, %v632, %v8
    %s638 = scalar_lea.vmem [#allocation7], 328
    %640 = vst [vmem:[%s638] sm:$0xff] %v637
    %s641 = scalar_lea.vmem %s1, 336
    %v642 = vld [vmem:[%s641] sm:$0xff]
    %v643 = vlaneseq
    %v644 = vshrl.u32 %v643, 7
    %v645 = vadd.s32 %v644, 16
    %vm646 = vcmp.lt.s32.totalorder %v645, 81
    %v647 = vsel %vm646, %v642, %v8
    %v648 = vlaneseq
    %v649 = vand.u32 %v648, 127
    %v650 = vadd.s32 %v649, 512
    %vm651 = vcmp.lt.s32.totalorder %v650, 2376
    %v652 = vsel %vm651, %v647, %v8
    %s653 = scalar_lea.vmem [#allocation7], 336
    %655 = vst [vmem:[%s653] sm:$0xff] %v652
    %s656 = scalar_lea.vmem %s1, 344
    %v657 = vld [vmem:[%s656] sm:$0xff]
    %v658 = vlaneseq
    %v659 = vshrl.u32 %v658, 7
    %v660 = vadd.s32 %v659, 16
    %vm661 = vcmp.lt.s32.totalorder %v660, 81
    %v662 = vsel %vm661, %v657, %v8
    %v663 = vlaneseq
    %v664 = vand.u32 %v663, 127
    %v665 = vadd.s32 %v664, 640
    %vm666 = vcmp.lt.s32.totalorder %v665, 2376
    %v667 = vsel %vm666, %v662, %v8
    %s668 = scalar_lea.vmem [#allocation7], 344
    %670 = vst [vmem:[%s668] sm:$0xff] %v667
    %s671 = scalar_lea.vmem %s1, 352
    %v672 = vld [vmem:[%s671] sm:$0xff]
    %v673 = vlaneseq
    %v674 = vshrl.u32 %v673, 7
    %v675 = vadd.s32 %v674, 16
    %vm676 = vcmp.lt.s32.totalorder %v675, 81
    %v677 = vsel %vm676, %v672, %v8
    %v678 = vlaneseq
    %v679 = vand.u32 %v678, 127
    %v680 = vadd.s32 %v679, 768
    %vm681 = vcmp.lt.s32.totalorder %v680, 2376
    %v682 = vsel %vm681, %v677, %v8
    %s683 = scalar_lea.vmem [#allocation7], 352
    %685 = vst [vmem:[%s683] sm:$0xff] %v682
    %s686 = scalar_lea.vmem %s1, 360
    %v687 = vld [vmem:[%s686] sm:$0xff]
    %v688 = vlaneseq
    %v689 = vshrl.u32 %v688, 7
    %v690 = vadd.s32 %v689, 16
    %vm691 = vcmp.lt.s32.totalorder %v690, 81
    %v692 = vsel %vm691, %v687, %v8
    %v693 = vlaneseq
    %v694 = vand.u32 %v693, 127
    %v695 = vadd.s32 %v694, 896
    %vm696 = vcmp.lt.s32.totalorder %v695, 2376
    %v697 = vsel %vm696, %v692, %v8
    %s698 = scalar_lea.vmem [#allocation7], 360
    %700 = vst [vmem:[%s698] sm:$0xff] %v697
    %s701 = scalar_lea.vmem %s1, 368
    %v702 = vld [vmem:[%s701] sm:$0xff]
    %v703 = vlaneseq
    %v704 = vshrl.u32 %v703, 7
    %v705 = vadd.s32 %v704, 16
    %vm706 = vcmp.lt.s32.totalorder %v705, 81
    %v707 = vsel %vm706, %v702, %v8
    %v708 = vlaneseq
    %v709 = vand.u32 %v708, 127
    %v710 = vadd.s32 %v709, 1024
    %vm711 = vcmp.lt.s32.totalorder %v710, 2376
    %v712 = vsel %vm711, %v707, %v8
    %s713 = scalar_lea.vmem [#allocation7], 368
    %715 = vst [vmem:[%s713] sm:$0xff] %v712
    %s716 = scalar_lea.vmem %s1, 376
    %v717 = vld [vmem:[%s716] sm:$0xff]
    %v718 = vlaneseq
    %v719 = vshrl.u32 %v718, 7
    %v720 = vadd.s32 %v719, 16
    %vm721 = vcmp.lt.s32.totalorder %v720, 81
    %v722 = vsel %vm721, %v717, %v8
    %v723 = vlaneseq
    %v724 = vand.u32 %v723, 127
    %v725 = vadd.s32 %v724, 1152
    %vm726 = vcmp.lt.s32.totalorder %v725, 2376
    %v727 = vsel %vm726, %v722, %v8
    %s728 = scalar_lea.vmem [#allocation7], 376
    %730 = vst [vmem:[%s728] sm:$0xff] %v727
    %s731 = scalar_lea.vmem %s1, 384
    %v732 = vld [vmem:[%s731] sm:$0xff]
    %v733 = vlaneseq
    %v734 = vshrl.u32 %v733, 7
    %v735 = vadd.s32 %v734, 16
    %vm736 = vcmp.lt.s32.totalorder %v735, 81
    %v737 = vsel %vm736, %v732, %v8
    %v738 = vlaneseq
    %v739 = vand.u32 %v738, 127
    %v740 = vadd.s32 %v739, 1280
    %vm741 = vcmp.lt.s32.totalorder %v740, 2376
    %v742 = vsel %vm741, %v737, %v8
    %s743 = scalar_lea.vmem [#allocation7], 384
    %745 = vst [vmem:[%s743] sm:$0xff] %v742
    %s746 = scalar_lea.vmem %s1, 392
    %v747 = vld [vmem:[%s746] sm:$0xff]
    %v748 = vlaneseq
    %v749 = vshrl.u32 %v748, 7
    %v750 = vadd.s32 %v749, 16
    %vm751 = vcmp.lt.s32.totalorder %v750, 81
    %v752 = vsel %vm751, %v747, %v8
    %v753 = vlaneseq
    %v754 = vand.u32 %v753, 127
    %v755 = vadd.s32 %v754, 1408
    %vm756 = vcmp.lt.s32.totalorder %v755, 2376
    %v757 = vsel %vm756, %v752, %v8
    %s758 = scalar_lea.vmem [#allocation7], 392
    %760 = vst [vmem:[%s758] sm:$0xff] %v757
    %s761 = scalar_lea.vmem %s1, 400
    %v762 = vld [vmem:[%s761] sm:$0xff]
    %v763 = vlaneseq
    %v764 = vshrl.u32 %v763, 7
    %v765 = vadd.s32 %v764, 16
    %vm766 = vcmp.lt.s32.totalorder %v765, 81
    %v767 = vsel %vm766, %v762, %v8
    %v768 = vlaneseq
    %v769 = vand.u32 %v768, 127
    %v770 = vadd.s32 %v769, 1536
    %vm771 = vcmp.lt.s32.totalorder %v770, 2376
    %v772 = vsel %vm771, %v767, %v8
    %s773 = scalar_lea.vmem [#allocation7], 400
    %775 = vst [vmem:[%s773] sm:$0xff] %v772
    %s776 = scalar_lea.vmem %s1, 408
    %v777 = vld [vmem:[%s776] sm:$0xff]
    %v778 = vlaneseq
    %v779 = vshrl.u32 %v778, 7
    %v780 = vadd.s32 %v779, 16
    %vm781 = vcmp.lt.s32.totalorder %v780, 81
    %v782 = vsel %vm781, %v777, %v8
    %v783 = vlaneseq
    %v784 = vand.u32 %v783, 127
    %v785 = vadd.s32 %v784, 1664
    %vm786 = vcmp.lt.s32.totalorder %v785, 2376
    %v787 = vsel %vm786, %v782, %v8
    %s788 = scalar_lea.vmem [#allocation7], 408
    %790 = vst [vmem:[%s788] sm:$0xff] %v787
    %s791 = scalar_lea.vmem %s1, 416
    %v792 = vld [vmem:[%s791] sm:$0xff]
    %v793 = vlaneseq
    %v794 = vshrl.u32 %v793, 7
    %v795 = vadd.s32 %v794, 16
    %vm796 = vcmp.lt.s32.totalorder %v795, 81
    %v797 = vsel %vm796, %v792, %v8
    %v798 = vlaneseq
    %v799 = vand.u32 %v798, 127
    %v800 = vadd.s32 %v799, 1792
    %vm801 = vcmp.lt.s32.totalorder %v800, 2376
    %v802 = vsel %vm801, %v797, %v8
    %s803 = scalar_lea.vmem [#allocation7], 416
    %805 = vst [vmem:[%s803] sm:$0xff] %v802
    %s806 = scalar_lea.vmem %s1, 424
    %v807 = vld [vmem:[%s806] sm:$0xff]
    %v808 = vlaneseq
    %v809 = vshrl.u32 %v808, 7
    %v810 = vadd.s32 %v809, 16
    %vm811 = vcmp.lt.s32.totalorder %v810, 81
    %v812 = vsel %vm811, %v807, %v8
    %v813 = vlaneseq
    %v814 = vand.u32 %v813, 127
    %v815 = vadd.s32 %v814, 1920
    %vm816 = vcmp.lt.s32.totalorder %v815, 2376
    %v817 = vsel %vm816, %v812, %v8
    %s818 = scalar_lea.vmem [#allocation7], 424
    %820 = vst [vmem:[%s818] sm:$0xff] %v817
    %s821 = scalar_lea.vmem %s1, 432
    %v822 = vld [vmem:[%s821] sm:$0xff]
    %v823 = vlaneseq
    %v824 = vshrl.u32 %v823, 7
    %v825 = vadd.s32 %v824, 16
    %vm826 = vcmp.lt.s32.totalorder %v825, 81
    %v827 = vsel %vm826, %v822, %v8
    %v828 = vlaneseq
    %v829 = vand.u32 %v828, 127
    %v830 = vadd.s32 %v829, 2048
    %vm831 = vcmp.lt.s32.totalorder %v830, 2376
    %v832 = vsel %vm831, %v827, %v8
    %s833 = scalar_lea.vmem [#allocation7], 432
    %835 = vst [vmem:[%s833] sm:$0xff] %v832
    %s836 = scalar_lea.vmem %s1, 440
    %v837 = vld [vmem:[%s836] sm:$0xff]
    %v838 = vlaneseq
    %v839 = vshrl.u32 %v838, 7
    %v840 = vadd.s32 %v839, 16
    %vm841 = vcmp.lt.s32.totalorder %v840, 81
    %v842 = vsel %vm841, %v837, %v8
    %v843 = vlaneseq
    %v844 = vand.u32 %v843, 127
    %v845 = vadd.s32 %v844, 2176
    %vm846 = vcmp.lt.s32.totalorder %v845, 2376
    %v847 = vsel %vm846, %v842, %v8
    %s848 = scalar_lea.vmem [#allocation7], 440
    %850 = vst [vmem:[%s848] sm:$0xff] %v847
    %s851 = scalar_lea.vmem %s1, 448
    %v852 = vld [vmem:[%s851] sm:$0xff]
    %v853 = vlaneseq
    %v854 = vshrl.u32 %v853, 7
    %v855 = vadd.s32 %v854, 16
    %vm856 = vcmp.lt.s32.totalorder %v855, 81
    %v857 = vsel %vm856, %v852, %v8
    %v858 = vlaneseq
    %v859 = vand.u32 %v858, 127
    %v860 = vadd.s32 %v859, 2304
    %vm861 = vcmp.lt.s32.totalorder %v860, 2376
    %v862 = vsel %vm861, %v857, %v8
    %s863 = scalar_lea.vmem [#allocation7], 448
    %865 = vst [vmem:[%s863] sm:$0xff] %v862
    %s866 = scalar_lea.vmem %s1, 456
    %v867 = vld [vmem:[%s866] sm:$0xff]
    %v868 = vlaneseq
    %v869 = vshrl.u32 %v868, 7
    %v870 = vadd.s32 %v869, 24
    %vm871 = vcmp.lt.s32.totalorder %v870, 81
    %v872 = vsel %vm871, %v867, %v8
    %v873 = vlaneseq
    %v874 = vand.u32 %v873, 127
    %vm876 = vcmp.lt.s32.totalorder %v874, 2376
    %v877 = vsel %vm876, %v872, %v8
    %s878 = scalar_lea.vmem [#allocation7], 456
    %880 = vst [vmem:[%s878] sm:$0xff] %v877
    %s881 = scalar_lea.vmem %s1, 464
    %v882 = vld [vmem:[%s881] sm:$0xff]
    %v883 = vlaneseq
    %v884 = vshrl.u32 %v883, 7
    %v885 = vadd.s32 %v884, 24
    %vm886 = vcmp.lt.s32.totalorder %v885, 81
    %v887 = vsel %vm886, %v882, %v8
    %v888 = vlaneseq
    %v889 = vand.u32 %v888, 127
    %v890 = vadd.s32 %v889, 128
    %vm891 = vcmp.lt.s32.totalorder %v890, 2376
    %v892 = vsel %vm891, %v887, %v8
    %s893 = scalar_lea.vmem [#allocation7], 464
    %895 = vst [vmem:[%s893] sm:$0xff] %v892
    %s896 = scalar_lea.vmem %s1, 472
    %v897 = vld [vmem:[%s896] sm:$0xff]
    %v898 = vlaneseq
    %v899 = vshrl.u32 %v898, 7
    %v900 = vadd.s32 %v899, 24
    %vm901 = vcmp.lt.s32.totalorder %v900, 81
    %v902 = vsel %vm901, %v897, %v8
    %v903 = vlaneseq
    %v904 = vand.u32 %v903, 127
    %v905 = vadd.s32 %v904, 256
    %vm906 = vcmp.lt.s32.totalorder %v905, 2376
    %v907 = vsel %vm906, %v902, %v8
    %s908 = scalar_lea.vmem [#allocation7], 472
    %910 = vst [vmem:[%s908] sm:$0xff] %v907
    %s911 = scalar_lea.vmem %s1, 480
    %v912 = vld [vmem:[%s911] sm:$0xff]
    %v913 = vlaneseq
    %v914 = vshrl.u32 %v913, 7
    %v915 = vadd.s32 %v914, 24
    %vm916 = vcmp.lt.s32.totalorder %v915, 81
    %v917 = vsel %vm916, %v912, %v8
    %v918 = vlaneseq
    %v919 = vand.u32 %v918, 127
    %v920 = vadd.s32 %v919, 384
    %vm921 = vcmp.lt.s32.totalorder %v920, 2376
    %v922 = vsel %vm921, %v917, %v8
    %s923 = scalar_lea.vmem [#allocation7], 480
    %925 = vst [vmem:[%s923] sm:$0xff] %v922
    %s926 = scalar_lea.vmem %s1, 488
    %v927 = vld [vmem:[%s926] sm:$0xff]
    %v928 = vlaneseq
    %v929 = vshrl.u32 %v928, 7
    %v930 = vadd.s32 %v929, 24
    %vm931 = vcmp.lt.s32.totalorder %v930, 81
    %v932 = vsel %vm931, %v927, %v8
    %v933 = vlaneseq
    %v934 = vand.u32 %v933, 127
    %v935 = vadd.s32 %v934, 512
    %vm936 = vcmp.lt.s32.totalorder %v935, 2376
    %v937 = vsel %vm936, %v932, %v8
    %s938 = scalar_lea.vmem [#allocation7], 488
    %940 = vst [vmem:[%s938] sm:$0xff] %v937
    %s941 = scalar_lea.vmem %s1, 496
    %v942 = vld [vmem:[%s941] sm:$0xff]
    %v943 = vlaneseq
    %v944 = vshrl.u32 %v943, 7
    %v945 = vadd.s32 %v944, 24
    %vm946 = vcmp.lt.s32.totalorder %v945, 81
    %v947 = vsel %vm946, %v942, %v8
    %v948 = vlaneseq
    %v949 = vand.u32 %v948, 127
    %v950 = vadd.s32 %v949, 640
    %vm951 = vcmp.lt.s32.totalorder %v950, 2376
    %v952 = vsel %vm951, %v947, %v8
    %s953 = scalar_lea.vmem [#allocation7], 496
    %955 = vst [vmem:[%s953] sm:$0xff] %v952
    %s956 = scalar_lea.vmem %s1, 504
    %v957 = vld [vmem:[%s956] sm:$0xff]
    %v958 = vlaneseq
    %v959 = vshrl.u32 %v958, 7
    %v960 = vadd.s32 %v959, 24
    %vm961 = vcmp.lt.s32.totalorder %v960, 81
    %v962 = vsel %vm961, %v957, %v8
    %v963 = vlaneseq
    %v964 = vand.u32 %v963, 127
    %v965 = vadd.s32 %v964, 768
    %vm966 = vcmp.lt.s32.totalorder %v965, 2376
    %v967 = vsel %vm966, %v962, %v8
    %s968 = scalar_lea.vmem [#allocation7], 504
    %970 = vst [vmem:[%s968] sm:$0xff] %v967
    %s971 = scalar_lea.vmem %s1, 512
    %v972 = vld [vmem:[%s971] sm:$0xff]
    %v973 = vlaneseq
    %v974 = vshrl.u32 %v973, 7
    %v975 = vadd.s32 %v974, 24
    %vm976 = vcmp.lt.s32.totalorder %v975, 81
    %v977 = vsel %vm976, %v972, %v8
    %v978 = vlaneseq
    %v979 = vand.u32 %v978, 127
    %v980 = vadd.s32 %v979, 896
    %vm981 = vcmp.lt.s32.totalorder %v980, 2376
    %v982 = vsel %vm981, %v977, %v8
    %s983 = scalar_lea.vmem [#allocation7], 512
    %985 = vst [vmem:[%s983] sm:$0xff] %v982
    %s986 = scalar_lea.vmem %s1, 520
    %v987 = vld [vmem:[%s986] sm:$0xff]
    %v988 = vlaneseq
    %v989 = vshrl.u32 %v988, 7
    %v990 = vadd.s32 %v989, 24
    %vm991 = vcmp.lt.s32.totalorder %v990, 81
    %v992 = vsel %vm991, %v987, %v8
    %v993 = vlaneseq
    %v994 = vand.u32 %v993, 127
    %v995 = vadd.s32 %v994, 1024
    %vm996 = vcmp.lt.s32.totalorder %v995, 2376
    %v997 = vsel %vm996, %v992, %v8
    %s998 = scalar_lea.vmem [#allocation7], 520
    %1000 = vst [vmem:[%s998] sm:$0xff] %v997
    %s1001 = scalar_lea.vmem %s1, 528
    %v1002 = vld [vmem:[%s1001] sm:$0xff]
    %v1003 = vlaneseq
    %v1004 = vshrl.u32 %v1003, 7
    %v1005 = vadd.s32 %v1004, 24
    %vm1006 = vcmp.lt.s32.totalorder %v1005, 81
    %v1007 = vsel %vm1006, %v1002, %v8
    %v1008 = vlaneseq
    %v1009 = vand.u32 %v1008, 127
    %v1010 = vadd.s32 %v1009, 1152
    %vm1011 = vcmp.lt.s32.totalorder %v1010, 2376
    %v1012 = vsel %vm1011, %v1007, %v8
    %s1013 = scalar_lea.vmem [#allocation7], 528
    %1015 = vst [vmem:[%s1013] sm:$0xff] %v1012
    %s1016 = scalar_lea.vmem %s1, 536
    %v1017 = vld [vmem:[%s1016] sm:$0xff]
    %v1018 = vlaneseq
    %v1019 = vshrl.u32 %v1018, 7
    %v1020 = vadd.s32 %v1019, 24
    %vm1021 = vcmp.lt.s32.totalorder %v1020, 81
    %v1022 = vsel %vm1021, %v1017, %v8
    %v1023 = vlaneseq
    %v1024 = vand.u32 %v1023, 127
    %v1025 = vadd.s32 %v1024, 1280
    %vm1026 = vcmp.lt.s32.totalorder %v1025, 2376
    %v1027 = vsel %vm1026, %v1022, %v8
    %s1028 = scalar_lea.vmem [#allocation7], 536
    %1030 = vst [vmem:[%s1028] sm:$0xff] %v1027
    %s1031 = scalar_lea.vmem %s1, 544
    %v1032 = vld [vmem:[%s1031] sm:$0xff]
    %v1033 = vlaneseq
    %v1034 = vshrl.u32 %v1033, 7
    %v1035 = vadd.s32 %v1034, 24
    %vm1036 = vcmp.lt.s32.totalorder %v1035, 81
    %v1037 = vsel %vm1036, %v1032, %v8
    %v1038 = vlaneseq
    %v1039 = vand.u32 %v1038, 127
    %v1040 = vadd.s32 %v1039, 1408
    %vm1041 = vcmp.lt.s32.totalorder %v1040, 2376
    %v1042 = vsel %vm1041, %v1037, %v8
    %s1043 = scalar_lea.vmem [#allocation7], 544
    %1045 = vst [vmem:[%s1043] sm:$0xff] %v1042
    %s1046 = scalar_lea.vmem %s1, 552
    %v1047 = vld [vmem:[%s1046] sm:$0xff]
    %v1048 = vlaneseq
    %v1049 = vshrl.u32 %v1048, 7
    %v1050 = vadd.s32 %v1049, 24
    %vm1051 = vcmp.lt.s32.totalorder %v1050, 81
    %v1052 = vsel %vm1051, %v1047, %v8
    %v1053 = vlaneseq
    %v1054 = vand.u32 %v1053, 127
    %v1055 = vadd.s32 %v1054, 1536
    %vm1056 = vcmp.lt.s32.totalorder %v1055, 2376
    %v1057 = vsel %vm1056, %v1052, %v8
    %s1058 = scalar_lea.vmem [#allocation7], 552
    %1060 = vst [vmem:[%s1058] sm:$0xff] %v1057
    %s1061 = scalar_lea.vmem %s1, 560
    %v1062 = vld [vmem:[%s1061] sm:$0xff]
    %v1063 = vlaneseq
    %v1064 = vshrl.u32 %v1063, 7
    %v1065 = vadd.s32 %v1064, 24
    %vm1066 = vcmp.lt.s32.totalorder %v1065, 81
    %v1067 = vsel %vm1066, %v1062, %v8
    %v1068 = vlaneseq
    %v1069 = vand.u32 %v1068, 127
    %v1070 = vadd.s32 %v1069, 1664
    %vm1071 = vcmp.lt.s32.totalorder %v1070, 2376
    %v1072 = vsel %vm1071, %v1067, %v8
    %s1073 = scalar_lea.vmem [#allocation7], 560
    %1075 = vst [vmem:[%s1073] sm:$0xff] %v1072
    %s1076 = scalar_lea.vmem %s1, 568
    %v1077 = vld [vmem:[%s1076] sm:$0xff]
    %v1078 = vlaneseq
    %v1079 = vshrl.u32 %v1078, 7
    %v1080 = vadd.s32 %v1079, 24
    %vm1081 = vcmp.lt.s32.totalorder %v1080, 81
    %v1082 = vsel %vm1081, %v1077, %v8
    %v1083 = vlaneseq
    %v1084 = vand.u32 %v1083, 127
    %v1085 = vadd.s32 %v1084, 1792
    %vm1086 = vcmp.lt.s32.totalorder %v1085, 2376
    %v1087 = vsel %vm1086, %v1082, %v8
    %s1088 = scalar_lea.vmem [#allocation7], 568
    %1090 = vst [vmem:[%s1088] sm:$0xff] %v1087
    %s1091 = scalar_lea.vmem %s1, 576
    %v1092 = vld [vmem:[%s1091] sm:$0xff]
    %v1093 = vlaneseq
    %v1094 = vshrl.u32 %v1093, 7
    %v1095 = vadd.s32 %v1094, 24
    %vm1096 = vcmp.lt.s32.totalorder %v1095, 81
    %v1097 = vsel %vm1096, %v1092, %v8
    %v1098 = vlaneseq
    %v1099 = vand.u32 %v1098, 127
    %v1100 = vadd.s32 %v1099, 1920
    %vm1101 = vcmp.lt.s32.totalorder %v1100, 2376
    %v1102 = vsel %vm1101, %v1097, %v8
    %s1103 = scalar_lea.vmem [#allocation7], 576
    %1105 = vst [vmem:[%s1103] sm:$0xff] %v1102
    %s1106 = scalar_lea.vmem %s1, 584
    %v1107 = vld [vmem:[%s1106] sm:$0xff]
    %v1108 = vlaneseq
    %v1109 = vshrl.u32 %v1108, 7
    %v1110 = vadd.s32 %v1109, 24
    %vm1111 = vcmp.lt.s32.totalorder %v1110, 81
    %v1112 = vsel %vm1111, %v1107, %v8
    %v1113 = vlaneseq
    %v1114 = vand.u32 %v1113, 127
    %v1115 = vadd.s32 %v1114, 2048
    %vm1116 = vcmp.lt.s32.totalorder %v1115, 2376
    %v1117 = vsel %vm1116, %v1112, %v8
    %s1118 = scalar_lea.vmem [#allocation7], 584
    %1120 = vst [vmem:[%s1118] sm:$0xff] %v1117
    %s1121 = scalar_lea.vmem %s1, 592
    %v1122 = vld [vmem:[%s1121] sm:$0xff]
    %v1123 = vlaneseq
    %v1124 = vshrl.u32 %v1123, 7
    %v1125 = vadd.s32 %v1124, 24
    %vm1126 = vcmp.lt.s32.totalorder %v1125, 81
    %v1127 = vsel %vm1126, %v1122, %v8
    %v1128 = vlaneseq
    %v1129 = vand.u32 %v1128, 127
    %v1130 = vadd.s32 %v1129, 2176
    %vm1131 = vcmp.lt.s32.totalorder %v1130, 2376
    %v1132 = vsel %vm1131, %v1127, %v8
    %s1133 = scalar_lea.vmem [#allocation7], 592
    %1135 = vst [vmem:[%s1133] sm:$0xff] %v1132
    %s1136 = scalar_lea.vmem %s1, 600
    %v1137 = vld [vmem:[%s1136] sm:$0xff]
    %v1138 = vlaneseq
    %v1139 = vshrl.u32 %v1138, 7
    %v1140 = vadd.s32 %v1139, 24
    %vm1141 = vcmp.lt.s32.totalorder %v1140, 81
    %v1142 = vsel %vm1141, %v1137, %v8
    %v1143 = vlaneseq
    %v1144 = vand.u32 %v1143, 127
    %v1145 = vadd.s32 %v1144, 2304
    %vm1146 = vcmp.lt.s32.totalorder %v1145, 2376
    %v1147 = vsel %vm1146, %v1142, %v8
    %s1148 = scalar_lea.vmem [#allocation7], 600
    %1150 = vst [vmem:[%s1148] sm:$0xff] %v1147
    %s1151 = scalar_lea.vmem %s1, 608
    %v1152 = vld [vmem:[%s1151] sm:$0xff]
    %v1153 = vlaneseq
    %v1154 = vshrl.u32 %v1153, 7
    %v1155 = vadd.s32 %v1154, 32
    %vm1156 = vcmp.lt.s32.totalorder %v1155, 81
    %v1157 = vsel %vm1156, %v1152, %v8
    %v1158 = vlaneseq
    %v1159 = vand.u32 %v1158, 127
    %vm1161 = vcmp.lt.s32.totalorder %v1159, 2376
    %v1162 = vsel %vm1161, %v1157, %v8
    %s1163 = scalar_lea.vmem [#allocation7], 608
    %1165 = vst [vmem:[%s1163] sm:$0xff] %v1162
    %s1166 = scalar_lea.vmem %s1, 616
    %v1167 = vld [vmem:[%s1166] sm:$0xff]
    %v1168 = vlaneseq
    %v1169 = vshrl.u32 %v1168, 7
    %v1170 = vadd.s32 %v1169, 32
    %vm1171 = vcmp.lt.s32.totalorder %v1170, 81
    %v1172 = vsel %vm1171, %v1167, %v8
    %v1173 = vlaneseq
    %v1174 = vand.u32 %v1173, 127
    %v1175 = vadd.s32 %v1174, 128
    %vm1176 = vcmp.lt.s32.totalorder %v1175, 2376
    %v1177 = vsel %vm1176, %v1172, %v8
    %s1178 = scalar_lea.vmem [#allocation7], 616
    %1180 = vst [vmem:[%s1178] sm:$0xff] %v1177
    %s1181 = scalar_lea.vmem %s1, 624
    %v1182 = vld [vmem:[%s1181] sm:$0xff]
    %v1183 = vlaneseq
    %v1184 = vshrl.u32 %v1183, 7
    %v1185 = vadd.s32 %v1184, 32
    %vm1186 = vcmp.lt.s32.totalorder %v1185, 81
    %v1187 = vsel %vm1186, %v1182, %v8
    %v1188 = vlaneseq
    %v1189 = vand.u32 %v1188, 127
    %v1190 = vadd.s32 %v1189, 256
    %vm1191 = vcmp.lt.s32.totalorder %v1190, 2376
    %v1192 = vsel %vm1191, %v1187, %v8
    %s1193 = scalar_lea.vmem [#allocation7], 624
    %1195 = vst [vmem:[%s1193] sm:$0xff] %v1192
    %s1196 = scalar_lea.vmem %s1, 632
    %v1197 = vld [vmem:[%s1196] sm:$0xff]
    %v1198 = vlaneseq
    %v1199 = vshrl.u32 %v1198, 7
    %v1200 = vadd.s32 %v1199, 32
    %vm1201 = vcmp.lt.s32.totalorder %v1200, 81
    %v1202 = vsel %vm1201, %v1197, %v8
    %v1203 = vlaneseq
    %v1204 = vand.u32 %v1203, 127
    %v1205 = vadd.s32 %v1204, 384
    %vm1206 = vcmp.lt.s32.totalorder %v1205, 2376
    %v1207 = vsel %vm1206, %v1202, %v8
    %s1208 = scalar_lea.vmem [#allocation7], 632
    %1210 = vst [vmem:[%s1208] sm:$0xff] %v1207
    %s1211 = scalar_lea.vmem %s1, 640
    %v1212 = vld [vmem:[%s1211] sm:$0xff]
    %v1213 = vlaneseq
    %v1214 = vshrl.u32 %v1213, 7
    %v1215 = vadd.s32 %v1214, 32
    %vm1216 = vcmp.lt.s32.totalorder %v1215, 81
    %v1217 = vsel %vm1216, %v1212, %v8
    %v1218 = vlaneseq
    %v1219 = vand.u32 %v1218, 127
    %v1220 = vadd.s32 %v1219, 512
    %vm1221 = vcmp.lt.s32.totalorder %v1220, 2376
    %v1222 = vsel %vm1221, %v1217, %v8
    %s1223 = scalar_lea.vmem [#allocation7], 640
    %1225 = vst [vmem:[%s1223] sm:$0xff] %v1222
    %s1226 = scalar_lea.vmem %s1, 648
    %v1227 = vld [vmem:[%s1226] sm:$0xff]
    %v1228 = vlaneseq
    %v1229 = vshrl.u32 %v1228, 7
    %v1230 = vadd.s32 %v1229, 32
    %vm1231 = vcmp.lt.s32.totalorder %v1230, 81
    %v1232 = vsel %vm1231, %v1227, %v8
    %v1233 = vlaneseq
    %v1234 = vand.u32 %v1233, 127
    %v1235 = vadd.s32 %v1234, 640
    %vm1236 = vcmp.lt.s32.totalorder %v1235, 2376
    %v1237 = vsel %vm1236, %v1232, %v8
    %s1238 = scalar_lea.vmem [#allocation7], 648
    %1240 = vst [vmem:[%s1238] sm:$0xff] %v1237
    %s1241 = scalar_lea.vmem %s1, 656
    %v1242 = vld [vmem:[%s1241] sm:$0xff]
    %v1243 = vlaneseq
    %v1244 = vshrl.u32 %v1243, 7
    %v1245 = vadd.s32 %v1244, 32
    %vm1246 = vcmp.lt.s32.totalorder %v1245, 81
    %v1247 = vsel %vm1246, %v1242, %v8
    %v1248 = vlaneseq
    %v1249 = vand.u32 %v1248, 127
    %v1250 = vadd.s32 %v1249, 768
    %vm1251 = vcmp.lt.s32.totalorder %v1250, 2376
    %v1252 = vsel %vm1251, %v1247, %v8
    %s1253 = scalar_lea.vmem [#allocation7], 656
    %1255 = vst [vmem:[%s1253] sm:$0xff] %v1252
    %s1256 = scalar_lea.vmem %s1, 664
    %v1257 = vld [vmem:[%s1256] sm:$0xff]
    %v1258 = vlaneseq
    %v1259 = vshrl.u32 %v1258, 7
    %v1260 = vadd.s32 %v1259, 32
    %vm1261 = vcmp.lt.s32.totalorder %v1260, 81
    %v1262 = vsel %vm1261, %v1257, %v8
    %v1263 = vlaneseq
    %v1264 = vand.u32 %v1263, 127
    %v1265 = vadd.s32 %v1264, 896
    %vm1266 = vcmp.lt.s32.totalorder %v1265, 2376
    %v1267 = vsel %vm1266, %v1262, %v8
    %s1268 = scalar_lea.vmem [#allocation7], 664
    %1270 = vst [vmem:[%s1268] sm:$0xff] %v1267
    %s1271 = scalar_lea.vmem %s1, 672
    %v1272 = vld [vmem:[%s1271] sm:$0xff]
    %v1273 = vlaneseq
    %v1274 = vshrl.u32 %v1273, 7
    %v1275 = vadd.s32 %v1274, 32
    %vm1276 = vcmp.lt.s32.totalorder %v1275, 81
    %v1277 = vsel %vm1276, %v1272, %v8
    %v1278 = vlaneseq
    %v1279 = vand.u32 %v1278, 127
    %v1280 = vadd.s32 %v1279, 1024
    %vm1281 = vcmp.lt.s32.totalorder %v1280, 2376
    %v1282 = vsel %vm1281, %v1277, %v8
    %s1283 = scalar_lea.vmem [#allocation7], 672
    %1285 = vst [vmem:[%s1283] sm:$0xff] %v1282
    %s1286 = scalar_lea.vmem %s1, 680
    %v1287 = vld [vmem:[%s1286] sm:$0xff]
    %v1288 = vlaneseq
    %v1289 = vshrl.u32 %v1288, 7
    %v1290 = vadd.s32 %v1289, 32
    %vm1291 = vcmp.lt.s32.totalorder %v1290, 81
    %v1292 = vsel %vm1291, %v1287, %v8
    %v1293 = vlaneseq
    %v1294 = vand.u32 %v1293, 127
    %v1295 = vadd.s32 %v1294, 1152
    %vm1296 = vcmp.lt.s32.totalorder %v1295, 2376
    %v1297 = vsel %vm1296, %v1292, %v8
    %s1298 = scalar_lea.vmem [#allocation7], 680
    %1300 = vst [vmem:[%s1298] sm:$0xff] %v1297
    %s1301 = scalar_lea.vmem %s1, 688
    %v1302 = vld [vmem:[%s1301] sm:$0xff]
    %v1303 = vlaneseq
    %v1304 = vshrl.u32 %v1303, 7
    %v1305 = vadd.s32 %v1304, 32
    %vm1306 = vcmp.lt.s32.totalorder %v1305, 81
    %v1307 = vsel %vm1306, %v1302, %v8
    %v1308 = vlaneseq
    %v1309 = vand.u32 %v1308, 127
    %v1310 = vadd.s32 %v1309, 1280
    %vm1311 = vcmp.lt.s32.totalorder %v1310, 2376
    %v1312 = vsel %vm1311, %v1307, %v8
    %s1313 = scalar_lea.vmem [#allocation7], 688
    %1315 = vst [vmem:[%s1313] sm:$0xff] %v1312
    %s1316 = scalar_lea.vmem %s1, 696
    %v1317 = vld [vmem:[%s1316] sm:$0xff]
    %v1318 = vlaneseq
    %v1319 = vshrl.u32 %v1318, 7
    %v1320 = vadd.s32 %v1319, 32
    %vm1321 = vcmp.lt.s32.totalorder %v1320, 81
    %v1322 = vsel %vm1321, %v1317, %v8
    %v1323 = vlaneseq
    %v1324 = vand.u32 %v1323, 127
    %v1325 = vadd.s32 %v1324, 1408
    %vm1326 = vcmp.lt.s32.totalorder %v1325, 2376
    %v1327 = vsel %vm1326, %v1322, %v8
    %s1328 = scalar_lea.vmem [#allocation7], 696
    %1330 = vst [vmem:[%s1328] sm:$0xff] %v1327
    %s1331 = scalar_lea.vmem %s1, 704
    %v1332 = vld [vmem:[%s1331] sm:$0xff]
    %v1333 = vlaneseq
    %v1334 = vshrl.u32 %v1333, 7
    %v1335 = vadd.s32 %v1334, 32
    %vm1336 = vcmp.lt.s32.totalorder %v1335, 81
    %v1337 = vsel %vm1336, %v1332, %v8
    %v1338 = vlaneseq
    %v1339 = vand.u32 %v1338, 127
    %v1340 = vadd.s32 %v1339, 1536
    %vm1341 = vcmp.lt.s32.totalorder %v1340, 2376
    %v1342 = vsel %vm1341, %v1337, %v8
    %s1343 = scalar_lea.vmem [#allocation7], 704
    %1345 = vst [vmem:[%s1343] sm:$0xff] %v1342
    %s1346 = scalar_lea.vmem %s1, 712
    %v1347 = vld [vmem:[%s1346] sm:$0xff]
    %v1348 = vlaneseq
    %v1349 = vshrl.u32 %v1348, 7
    %v1350 = vadd.s32 %v1349, 32
    %vm1351 = vcmp.lt.s32.totalorder %v1350, 81
    %v1352 = vsel %vm1351, %v1347, %v8
    %v1353 = vlaneseq
    %v1354 = vand.u32 %v1353, 127
    %v1355 = vadd.s32 %v1354, 1664
    %vm1356 = vcmp.lt.s32.totalorder %v1355, 2376
    %v1357 = vsel %vm1356, %v1352, %v8
    %s1358 = scalar_lea.vmem [#allocation7], 712
    %1360 = vst [vmem:[%s1358] sm:$0xff] %v1357
    %s1361 = scalar_lea.vmem %s1, 720
    %v1362 = vld [vmem:[%s1361] sm:$0xff]
    %v1363 = vlaneseq
    %v1364 = vshrl.u32 %v1363, 7
    %v1365 = vadd.s32 %v1364, 32
    %vm1366 = vcmp.lt.s32.totalorder %v1365, 81
    %v1367 = vsel %vm1366, %v1362, %v8
    %v1368 = vlaneseq
    %v1369 = vand.u32 %v1368, 127
    %v1370 = vadd.s32 %v1369, 1792
    %vm1371 = vcmp.lt.s32.totalorder %v1370, 2376
    %v1372 = vsel %vm1371, %v1367, %v8
    %s1373 = scalar_lea.vmem [#allocation7], 720
    %1375 = vst [vmem:[%s1373] sm:$0xff] %v1372
    %s1376 = scalar_lea.vmem %s1, 728
    %v1377 = vld [vmem:[%s1376] sm:$0xff]
    %v1378 = vlaneseq
    %v1379 = vshrl.u32 %v1378, 7
    %v1380 = vadd.s32 %v1379, 32
    %vm1381 = vcmp.lt.s32.totalorder %v1380, 81
    %v1382 = vsel %vm1381, %v1377, %v8
    %v1383 = vlaneseq
    %v1384 = vand.u32 %v1383, 127
    %v1385 = vadd.s32 %v1384, 1920
    %vm1386 = vcmp.lt.s32.totalorder %v1385, 2376
    %v1387 = vsel %vm1386, %v1382, %v8
    %s1388 = scalar_lea.vmem [#allocation7], 728
    %1390 = vst [vmem:[%s1388] sm:$0xff] %v1387
    %s1391 = scalar_lea.vmem %s1, 736
    %v1392 = vld [vmem:[%s1391] sm:$0xff]
    %v1393 = vlaneseq
    %v1394 = vshrl.u32 %v1393, 7
    %v1395 = vadd.s32 %v1394, 32
    %vm1396 = vcmp.lt.s32.totalorder %v1395, 81
    %v1397 = vsel %vm1396, %v1392, %v8
    %v1398 = vlaneseq
    %v1399 = vand.u32 %v1398, 127
    %v1400 = vadd.s32 %v1399, 2048
    %vm1401 = vcmp.lt.s32.totalorder %v1400, 2376
    %v1402 = vsel %vm1401, %v1397, %v8
    %s1403 = scalar_lea.vmem [#allocation7], 736
    %1405 = vst [vmem:[%s1403] sm:$0xff] %v1402
    %s1406 = scalar_lea.vmem %s1, 744
    %v1407 = vld [vmem:[%s1406] sm:$0xff]
    %v1408 = vlaneseq
    %v1409 = vshrl.u32 %v1408, 7
    %v1410 = vadd.s32 %v1409, 32
    %vm1411 = vcmp.lt.s32.totalorder %v1410, 81
    %v1412 = vsel %vm1411, %v1407, %v8
    %v1413 = vlaneseq
    %v1414 = vand.u32 %v1413, 127
    %v1415 = vadd.s32 %v1414, 2176
    %vm1416 = vcmp.lt.s32.totalorder %v1415, 2376
    %v1417 = vsel %vm1416, %v1412, %v8
    %s1418 = scalar_lea.vmem [#allocation7], 744
    %1420 = vst [vmem:[%s1418] sm:$0xff] %v1417
    %s1421 = scalar_lea.vmem %s1, 752
    %v1422 = vld [vmem:[%s1421] sm:$0xff]
    %v1423 = vlaneseq
    %v1424 = vshrl.u32 %v1423, 7
    %v1425 = vadd.s32 %v1424, 32
    %vm1426 = vcmp.lt.s32.totalorder %v1425, 81
    %v1427 = vsel %vm1426, %v1422, %v8
    %v1428 = vlaneseq
    %v1429 = vand.u32 %v1428, 127
    %v1430 = vadd.s32 %v1429, 2304
    %vm1431 = vcmp.lt.s32.totalorder %v1430, 2376
    %v1432 = vsel %vm1431, %v1427, %v8
    %s1433 = scalar_lea.vmem [#allocation7], 752
    %1435 = vst [vmem:[%s1433] sm:$0xff] %v1432
    %s1436 = scalar_lea.vmem %s1, 760
    %v1437 = vld [vmem:[%s1436] sm:$0xff]
    %v1438 = vlaneseq
    %v1439 = vshrl.u32 %v1438, 7
    %v1440 = vadd.s32 %v1439, 40
    %vm1441 = vcmp.lt.s32.totalorder %v1440, 81
    %v1442 = vsel %vm1441, %v1437, %v8
    %v1443 = vlaneseq
    %v1444 = vand.u32 %v1443, 127
    %vm1446 = vcmp.lt.s32.totalorder %v1444, 2376
    %v1447 = vsel %vm1446, %v1442, %v8
    %s1448 = scalar_lea.vmem [#allocation7], 760
    %1450 = vst [vmem:[%s1448] sm:$0xff] %v1447
    %s1451 = scalar_lea.vmem %s1, 768
    %v1452 = vld [vmem:[%s1451] sm:$0xff]
    %v1453 = vlaneseq
    %v1454 = vshrl.u32 %v1453, 7
    %v1455 = vadd.s32 %v1454, 40
    %vm1456 = vcmp.lt.s32.totalorder %v1455, 81
    %v1457 = vsel %vm1456, %v1452, %v8
    %v1458 = vlaneseq
    %v1459 = vand.u32 %v1458, 127
    %v1460 = vadd.s32 %v1459, 128
    %vm1461 = vcmp.lt.s32.totalorder %v1460, 2376
    %v1462 = vsel %vm1461, %v1457, %v8
    %s1463 = scalar_lea.vmem [#allocation7], 768
    %1465 = vst [vmem:[%s1463] sm:$0xff] %v1462
    %s1466 = scalar_lea.vmem %s1, 776
    %v1467 = vld [vmem:[%s1466] sm:$0xff]
    %v1468 = vlaneseq
    %v1469 = vshrl.u32 %v1468, 7
    %v1470 = vadd.s32 %v1469, 40
    %vm1471 = vcmp.lt.s32.totalorder %v1470, 81
    %v1472 = vsel %vm1471, %v1467, %v8
    %v1473 = vlaneseq
    %v1474 = vand.u32 %v1473, 127
    %v1475 = vadd.s32 %v1474, 256
    %vm1476 = vcmp.lt.s32.totalorder %v1475, 2376
    %v1477 = vsel %vm1476, %v1472, %v8
    %s1478 = scalar_lea.vmem [#allocation7], 776
    %1480 = vst [vmem:[%s1478] sm:$0xff] %v1477
    %s1481 = scalar_lea.vmem %s1, 784
    %v1482 = vld [vmem:[%s1481] sm:$0xff]
    %v1483 = vlaneseq
    %v1484 = vshrl.u32 %v1483, 7
    %v1485 = vadd.s32 %v1484, 40
    %vm1486 = vcmp.lt.s32.totalorder %v1485, 81
    %v1487 = vsel %vm1486, %v1482, %v8
    %v1488 = vlaneseq
    %v1489 = vand.u32 %v1488, 127
    %v1490 = vadd.s32 %v1489, 384
    %vm1491 = vcmp.lt.s32.totalorder %v1490, 2376
    %v1492 = vsel %vm1491, %v1487, %v8
    %s1493 = scalar_lea.vmem [#allocation7], 784
    %1495 = vst [vmem:[%s1493] sm:$0xff] %v1492
    %s1496 = scalar_lea.vmem %s1, 792
    %v1497 = vld [vmem:[%s1496] sm:$0xff]
    %v1498 = vlaneseq
    %v1499 = vshrl.u32 %v1498, 7
    %v1500 = vadd.s32 %v1499, 40
    %vm1501 = vcmp.lt.s32.totalorder %v1500, 81
    %v1502 = vsel %vm1501, %v1497, %v8
    %v1503 = vlaneseq
    %v1504 = vand.u32 %v1503, 127
    %v1505 = vadd.s32 %v1504, 512
    %vm1506 = vcmp.lt.s32.totalorder %v1505, 2376
    %v1507 = vsel %vm1506, %v1502, %v8
    %s1508 = scalar_lea.vmem [#allocation7], 792
    %1510 = vst [vmem:[%s1508] sm:$0xff] %v1507
    %s1511 = scalar_lea.vmem %s1, 800
    %v1512 = vld [vmem:[%s1511] sm:$0xff]
    %v1513 = vlaneseq
    %v1514 = vshrl.u32 %v1513, 7
    %v1515 = vadd.s32 %v1514, 40
    %vm1516 = vcmp.lt.s32.totalorder %v1515, 81
    %v1517 = vsel %vm1516, %v1512, %v8
    %v1518 = vlaneseq
    %v1519 = vand.u32 %v1518, 127
    %v1520 = vadd.s32 %v1519, 640
    %vm1521 = vcmp.lt.s32.totalorder %v1520, 2376
    %v1522 = vsel %vm1521, %v1517, %v8
    %s1523 = scalar_lea.vmem [#allocation7], 800
    %1525 = vst [vmem:[%s1523] sm:$0xff] %v1522
    %s1526 = scalar_lea.vmem %s1, 808
    %v1527 = vld [vmem:[%s1526] sm:$0xff]
    %v1528 = vlaneseq
    %v1529 = vshrl.u32 %v1528, 7
    %v1530 = vadd.s32 %v1529, 40
    %vm1531 = vcmp.lt.s32.totalorder %v1530, 81
    %v1532 = vsel %vm1531, %v1527, %v8
    %v1533 = vlaneseq
    %v1534 = vand.u32 %v1533, 127
    %v1535 = vadd.s32 %v1534, 768
    %vm1536 = vcmp.lt.s32.totalorder %v1535, 2376
    %v1537 = vsel %vm1536, %v1532, %v8
    %s1538 = scalar_lea.vmem [#allocation7], 808
    %1540 = vst [vmem:[%s1538] sm:$0xff] %v1537
    %s1541 = scalar_lea.vmem %s1, 816
    %v1542 = vld [vmem:[%s1541] sm:$0xff]
    %v1543 = vlaneseq
    %v1544 = vshrl.u32 %v1543, 7
    %v1545 = vadd.s32 %v1544, 40
    %vm1546 = vcmp.lt.s32.totalorder %v1545, 81
    %v1547 = vsel %vm1546, %v1542, %v8
    %v1548 = vlaneseq
    %v1549 = vand.u32 %v1548, 127
    %v1550 = vadd.s32 %v1549, 896
    %vm1551 = vcmp.lt.s32.totalorder %v1550, 2376
    %v1552 = vsel %vm1551, %v1547, %v8
    %s1553 = scalar_lea.vmem [#allocation7], 816
    %1555 = vst [vmem:[%s1553] sm:$0xff] %v1552
    %s1556 = scalar_lea.vmem %s1, 824
    %v1557 = vld [vmem:[%s1556] sm:$0xff]
    %v1558 = vlaneseq
    %v1559 = vshrl.u32 %v1558, 7
    %v1560 = vadd.s32 %v1559, 40
    %vm1561 = vcmp.lt.s32.totalorder %v1560, 81
    %v1562 = vsel %vm1561, %v1557, %v8
    %v1563 = vlaneseq
    %v1564 = vand.u32 %v1563, 127
    %v1565 = vadd.s32 %v1564, 1024
    %vm1566 = vcmp.lt.s32.totalorder %v1565, 2376
    %v1567 = vsel %vm1566, %v1562, %v8
    %s1568 = scalar_lea.vmem [#allocation7], 824
    %1570 = vst [vmem:[%s1568] sm:$0xff] %v1567
    %s1571 = scalar_lea.vmem %s1, 832
    %v1572 = vld [vmem:[%s1571] sm:$0xff]
    %v1573 = vlaneseq
    %v1574 = vshrl.u32 %v1573, 7
    %v1575 = vadd.s32 %v1574, 40
    %vm1576 = vcmp.lt.s32.totalorder %v1575, 81
    %v1577 = vsel %vm1576, %v1572, %v8
    %v1578 = vlaneseq
    %v1579 = vand.u32 %v1578, 127
    %v1580 = vadd.s32 %v1579, 1152
    %vm1581 = vcmp.lt.s32.totalorder %v1580, 2376
    %v1582 = vsel %vm1581, %v1577, %v8
    %s1583 = scalar_lea.vmem [#allocation7], 832
    %1585 = vst [vmem:[%s1583] sm:$0xff] %v1582
    %s1586 = scalar_lea.vmem %s1, 840
    %v1587 = vld [vmem:[%s1586] sm:$0xff]
    %v1588 = vlaneseq
    %v1589 = vshrl.u32 %v1588, 7
    %v1590 = vadd.s32 %v1589, 40
    %vm1591 = vcmp.lt.s32.totalorder %v1590, 81
    %v1592 = vsel %vm1591, %v1587, %v8
    %v1593 = vlaneseq
    %v1594 = vand.u32 %v1593, 127
    %v1595 = vadd.s32 %v1594, 1280
    %vm1596 = vcmp.lt.s32.totalorder %v1595, 2376
    %v1597 = vsel %vm1596, %v1592, %v8
    %s1598 = scalar_lea.vmem [#allocation7], 840
    %1600 = vst [vmem:[%s1598] sm:$0xff] %v1597
    %s1601 = scalar_lea.vmem %s1, 848
    %v1602 = vld [vmem:[%s1601] sm:$0xff]
    %v1603 = vlaneseq
    %v1604 = vshrl.u32 %v1603, 7
    %v1605 = vadd.s32 %v1604, 40
    %vm1606 = vcmp.lt.s32.totalorder %v1605, 81
    %v1607 = vsel %vm1606, %v1602, %v8
    %v1608 = vlaneseq
    %v1609 = vand.u32 %v1608, 127
    %v1610 = vadd.s32 %v1609, 1408
    %vm1611 = vcmp.lt.s32.totalorder %v1610, 2376
    %v1612 = vsel %vm1611, %v1607, %v8
    %s1613 = scalar_lea.vmem [#allocation7], 848
    %1615 = vst [vmem:[%s1613] sm:$0xff] %v1612
    %s1616 = scalar_lea.vmem %s1, 856
    %v1617 = vld [vmem:[%s1616] sm:$0xff]
    %v1618 = vlaneseq
    %v1619 = vshrl.u32 %v1618, 7
    %v1620 = vadd.s32 %v1619, 40
    %vm1621 = vcmp.lt.s32.totalorder %v1620, 81
    %v1622 = vsel %vm1621, %v1617, %v8
    %v1623 = vlaneseq
    %v1624 = vand.u32 %v1623, 127
    %v1625 = vadd.s32 %v1624, 1536
    %vm1626 = vcmp.lt.s32.totalorder %v1625, 2376
    %v1627 = vsel %vm1626, %v1622, %v8
    %s1628 = scalar_lea.vmem [#allocation7], 856
    %1630 = vst [vmem:[%s1628] sm:$0xff] %v1627
    %s1631 = scalar_lea.vmem %s1, 864
    %v1632 = vld [vmem:[%s1631] sm:$0xff]
    %v1633 = vlaneseq
    %v1634 = vshrl.u32 %v1633, 7
    %v1635 = vadd.s32 %v1634, 40
    %vm1636 = vcmp.lt.s32.totalorder %v1635, 81
    %v1637 = vsel %vm1636, %v1632, %v8
    %v1638 = vlaneseq
    %v1639 = vand.u32 %v1638, 127
    %v1640 = vadd.s32 %v1639, 1664
    %vm1641 = vcmp.lt.s32.totalorder %v1640, 2376
    %v1642 = vsel %vm1641, %v1637, %v8
    %s1643 = scalar_lea.vmem [#allocation7], 864
    %1645 = vst [vmem:[%s1643] sm:$0xff] %v1642
    %s1646 = scalar_lea.vmem %s1, 872
    %v1647 = vld [vmem:[%s1646] sm:$0xff]
    %v1648 = vlaneseq
    %v1649 = vshrl.u32 %v1648, 7
    %v1650 = vadd.s32 %v1649, 40
    %vm1651 = vcmp.lt.s32.totalorder %v1650, 81
    %v1652 = vsel %vm1651, %v1647, %v8
    %v1653 = vlaneseq
    %v1654 = vand.u32 %v1653, 127
    %v1655 = vadd.s32 %v1654, 1792
    %vm1656 = vcmp.lt.s32.totalorder %v1655, 2376
    %v1657 = vsel %vm1656, %v1652, %v8
    %s1658 = scalar_lea.vmem [#allocation7], 872
    %1660 = vst [vmem:[%s1658] sm:$0xff] %v1657
    %s1661 = scalar_lea.vmem %s1, 880
    %v1662 = vld [vmem:[%s1661] sm:$0xff]
    %v1663 = vlaneseq
    %v1664 = vshrl.u32 %v1663, 7
    %v1665 = vadd.s32 %v1664, 40
    %vm1666 = vcmp.lt.s32.totalorder %v1665, 81
    %v1667 = vsel %vm1666, %v1662, %v8
    %v1668 = vlaneseq
    %v1669 = vand.u32 %v1668, 127
    %v1670 = vadd.s32 %v1669, 1920
    %vm1671 = vcmp.lt.s32.totalorder %v1670, 2376
    %v1672 = vsel %vm1671, %v1667, %v8
    %s1673 = scalar_lea.vmem [#allocation7], 880
    %1675 = vst [vmem:[%s1673] sm:$0xff] %v1672
    %s1676 = scalar_lea.vmem %s1, 888
    %v1677 = vld [vmem:[%s1676] sm:$0xff]
    %v1678 = vlaneseq
    %v1679 = vshrl.u32 %v1678, 7
    %v1680 = vadd.s32 %v1679, 40
    %vm1681 = vcmp.lt.s32.totalorder %v1680, 81
    %v1682 = vsel %vm1681, %v1677, %v8
    %v1683 = vlaneseq
    %v1684 = vand.u32 %v1683, 127
    %v1685 = vadd.s32 %v1684, 2048
    %vm1686 = vcmp.lt.s32.totalorder %v1685, 2376
    %v1687 = vsel %vm1686, %v1682, %v8
    %s1688 = scalar_lea.vmem [#allocation7], 888
    %1690 = vst [vmem:[%s1688] sm:$0xff] %v1687
    %s1691 = scalar_lea.vmem %s1, 896
    %v1692 = vld [vmem:[%s1691] sm:$0xff]
    %v1693 = vlaneseq
    %v1694 = vshrl.u32 %v1693, 7
    %v1695 = vadd.s32 %v1694, 40
    %vm1696 = vcmp.lt.s32.totalorder %v1695, 81
    %v1697 = vsel %vm1696, %v1692, %v8
    %v1698 = vlaneseq
    %v1699 = vand.u32 %v1698, 127
    %v1700 = vadd.s32 %v1699, 2176
    %vm1701 = vcmp.lt.s32.totalorder %v1700, 2376
    %v1702 = vsel %vm1701, %v1697, %v8
    %s1703 = scalar_lea.vmem [#allocation7], 896
    %1705 = vst [vmem:[%s1703] sm:$0xff] %v1702
    %s1706 = scalar_lea.vmem %s1, 904
    %v1707 = vld [vmem:[%s1706] sm:$0xff]
    %v1708 = vlaneseq
    %v1709 = vshrl.u32 %v1708, 7
    %v1710 = vadd.s32 %v1709, 40
    %vm1711 = vcmp.lt.s32.totalorder %v1710, 81
    %v1712 = vsel %vm1711, %v1707, %v8
    %v1713 = vlaneseq
    %v1714 = vand.u32 %v1713, 127
    %v1715 = vadd.s32 %v1714, 2304
    %vm1716 = vcmp.lt.s32.totalorder %v1715, 2376
    %v1717 = vsel %vm1716, %v1712, %v8
    %s1718 = scalar_lea.vmem [#allocation7], 904
    %1720 = vst [vmem:[%s1718] sm:$0xff] %v1717
    %s1721 = scalar_lea.vmem %s1, 912
    %v1722 = vld [vmem:[%s1721] sm:$0xff]
    %v1723 = vlaneseq
    %v1724 = vshrl.u32 %v1723, 7
    %v1725 = vadd.s32 %v1724, 48
    %vm1726 = vcmp.lt.s32.totalorder %v1725, 81
    %v1727 = vsel %vm1726, %v1722, %v8
    %v1728 = vlaneseq
    %v1729 = vand.u32 %v1728, 127
    %vm1731 = vcmp.lt.s32.totalorder %v1729, 2376
    %v1732 = vsel %vm1731, %v1727, %v8
    %s1733 = scalar_lea.vmem [#allocation7], 912
    %1735 = vst [vmem:[%s1733] sm:$0xff] %v1732
    %s1736 = scalar_lea.vmem %s1, 920
    %v1737 = vld [vmem:[%s1736] sm:$0xff]
    %v1738 = vlaneseq
    %v1739 = vshrl.u32 %v1738, 7
    %v1740 = vadd.s32 %v1739, 48
    %vm1741 = vcmp.lt.s32.totalorder %v1740, 81
    %v1742 = vsel %vm1741, %v1737, %v8
    %v1743 = vlaneseq
    %v1744 = vand.u32 %v1743, 127
    %v1745 = vadd.s32 %v1744, 128
    %vm1746 = vcmp.lt.s32.totalorder %v1745, 2376
    %v1747 = vsel %vm1746, %v1742, %v8
    %s1748 = scalar_lea.vmem [#allocation7], 920
    %1750 = vst [vmem:[%s1748] sm:$0xff] %v1747
    %s1751 = scalar_lea.vmem %s1, 928
    %v1752 = vld [vmem:[%s1751] sm:$0xff]
    %v1753 = vlaneseq
    %v1754 = vshrl.u32 %v1753, 7
    %v1755 = vadd.s32 %v1754, 48
    %vm1756 = vcmp.lt.s32.totalorder %v1755, 81
    %v1757 = vsel %vm1756, %v1752, %v8
    %v1758 = vlaneseq
    %v1759 = vand.u32 %v1758, 127
    %v1760 = vadd.s32 %v1759, 256
    %vm1761 = vcmp.lt.s32.totalorder %v1760, 2376
    %v1762 = vsel %vm1761, %v1757, %v8
    %s1763 = scalar_lea.vmem [#allocation7], 928
    %1765 = vst [vmem:[%s1763] sm:$0xff] %v1762
    %s1766 = scalar_lea.vmem %s1, 936
    %v1767 = vld [vmem:[%s1766] sm:$0xff]
    %v1768 = vlaneseq
    %v1769 = vshrl.u32 %v1768, 7
    %v1770 = vadd.s32 %v1769, 48
    %vm1771 = vcmp.lt.s32.totalorder %v1770, 81
    %v1772 = vsel %vm1771, %v1767, %v8
    %v1773 = vlaneseq
    %v1774 = vand.u32 %v1773, 127
    %v1775 = vadd.s32 %v1774, 384
    %vm1776 = vcmp.lt.s32.totalorder %v1775, 2376
    %v1777 = vsel %vm1776, %v1772, %v8
    %s1778 = scalar_lea.vmem [#allocation7], 936
    %1780 = vst [vmem:[%s1778] sm:$0xff] %v1777
    %s1781 = scalar_lea.vmem %s1, 944
    %v1782 = vld [vmem:[%s1781] sm:$0xff]
    %v1783 = vlaneseq
    %v1784 = vshrl.u32 %v1783, 7
    %v1785 = vadd.s32 %v1784, 48
    %vm1786 = vcmp.lt.s32.totalorder %v1785, 81
    %v1787 = vsel %vm1786, %v1782, %v8
    %v1788 = vlaneseq
    %v1789 = vand.u32 %v1788, 127
    %v1790 = vadd.s32 %v1789, 512
    %vm1791 = vcmp.lt.s32.totalorder %v1790, 2376
    %v1792 = vsel %vm1791, %v1787, %v8
    %s1793 = scalar_lea.vmem [#allocation7], 944
    %1795 = vst [vmem:[%s1793] sm:$0xff] %v1792
    %s1796 = scalar_lea.vmem %s1, 952
    %v1797 = vld [vmem:[%s1796] sm:$0xff]
    %v1798 = vlaneseq
    %v1799 = vshrl.u32 %v1798, 7
    %v1800 = vadd.s32 %v1799, 48
    %vm1801 = vcmp.lt.s32.totalorder %v1800, 81
    %v1802 = vsel %vm1801, %v1797, %v8
    %v1803 = vlaneseq
    %v1804 = vand.u32 %v1803, 127
    %v1805 = vadd.s32 %v1804, 640
    %vm1806 = vcmp.lt.s32.totalorder %v1805, 2376
    %v1807 = vsel %vm1806, %v1802, %v8
    %s1808 = scalar_lea.vmem [#allocation7], 952
    %1810 = vst [vmem:[%s1808] sm:$0xff] %v1807
    %s1811 = scalar_lea.vmem %s1, 960
    %v1812 = vld [vmem:[%s1811] sm:$0xff]
    %v1813 = vlaneseq
    %v1814 = vshrl.u32 %v1813, 7
    %v1815 = vadd.s32 %v1814, 48
    %vm1816 = vcmp.lt.s32.totalorder %v1815, 81
    %v1817 = vsel %vm1816, %v1812, %v8
    %v1818 = vlaneseq
    %v1819 = vand.u32 %v1818, 127
    %v1820 = vadd.s32 %v1819, 768
    %vm1821 = vcmp.lt.s32.totalorder %v1820, 2376
    %v1822 = vsel %vm1821, %v1817, %v8
    %s1823 = scalar_lea.vmem [#allocation7], 960
    %1825 = vst [vmem:[%s1823] sm:$0xff] %v1822
    %s1826 = scalar_lea.vmem %s1, 968
    %v1827 = vld [vmem:[%s1826] sm:$0xff]
    %v1828 = vlaneseq
    %v1829 = vshrl.u32 %v1828, 7
    %v1830 = vadd.s32 %v1829, 48
    %vm1831 = vcmp.lt.s32.totalorder %v1830, 81
    %v1832 = vsel %vm1831, %v1827, %v8
    %v1833 = vlaneseq
    %v1834 = vand.u32 %v1833, 127
    %v1835 = vadd.s32 %v1834, 896
    %vm1836 = vcmp.lt.s32.totalorder %v1835, 2376
    %v1837 = vsel %vm1836, %v1832, %v8
    %s1838 = scalar_lea.vmem [#allocation7], 968
    %1840 = vst [vmem:[%s1838] sm:$0xff] %v1837
    %s1841 = scalar_lea.vmem %s1, 976
    %v1842 = vld [vmem:[%s1841] sm:$0xff]
    %v1843 = vlaneseq
    %v1844 = vshrl.u32 %v1843, 7
    %v1845 = vadd.s32 %v1844, 48
    %vm1846 = vcmp.lt.s32.totalorder %v1845, 81
    %v1847 = vsel %vm1846, %v1842, %v8
    %v1848 = vlaneseq
    %v1849 = vand.u32 %v1848, 127
    %v1850 = vadd.s32 %v1849, 1024
    %vm1851 = vcmp.lt.s32.totalorder %v1850, 2376
    %v1852 = vsel %vm1851, %v1847, %v8
    %s1853 = scalar_lea.vmem [#allocation7], 976
    %1855 = vst [vmem:[%s1853] sm:$0xff] %v1852
    %s1856 = scalar_lea.vmem %s1, 984
    %v1857 = vld [vmem:[%s1856] sm:$0xff]
    %v1858 = vlaneseq
    %v1859 = vshrl.u32 %v1858, 7
    %v1860 = vadd.s32 %v1859, 48
    %vm1861 = vcmp.lt.s32.totalorder %v1860, 81
    %v1862 = vsel %vm1861, %v1857, %v8
    %v1863 = vlaneseq
    %v1864 = vand.u32 %v1863, 127
    %v1865 = vadd.s32 %v1864, 1152
    %vm1866 = vcmp.lt.s32.totalorder %v1865, 2376
    %v1867 = vsel %vm1866, %v1862, %v8
    %s1868 = scalar_lea.vmem [#allocation7], 984
    %1870 = vst [vmem:[%s1868] sm:$0xff] %v1867
    %s1871 = scalar_lea.vmem %s1, 992
    %v1872 = vld [vmem:[%s1871] sm:$0xff]
    %v1873 = vlaneseq
    %v1874 = vshrl.u32 %v1873, 7
    %v1875 = vadd.s32 %v1874, 48
    %vm1876 = vcmp.lt.s32.totalorder %v1875, 81
    %v1877 = vsel %vm1876, %v1872, %v8
    %v1878 = vlaneseq
    %v1879 = vand.u32 %v1878, 127
    %v1880 = vadd.s32 %v1879, 1280
    %vm1881 = vcmp.lt.s32.totalorder %v1880, 2376
    %v1882 = vsel %vm1881, %v1877, %v8
    %s1883 = scalar_lea.vmem [#allocation7], 992
    %1885 = vst [vmem:[%s1883] sm:$0xff] %v1882
    %s1886 = scalar_lea.vmem %s1, 1000
    %v1887 = vld [vmem:[%s1886] sm:$0xff]
    %v1888 = vlaneseq
    %v1889 = vshrl.u32 %v1888, 7
    %v1890 = vadd.s32 %v1889, 48
    %vm1891 = vcmp.lt.s32.totalorder %v1890, 81
    %v1892 = vsel %vm1891, %v1887, %v8
    %v1893 = vlaneseq
    %v1894 = vand.u32 %v1893, 127
    %v1895 = vadd.s32 %v1894, 1408
    %vm1896 = vcmp.lt.s32.totalorder %v1895, 2376
    %v1897 = vsel %vm1896, %v1892, %v8
    %s1898 = scalar_lea.vmem [#allocation7], 1000
    %1900 = vst [vmem:[%s1898] sm:$0xff] %v1897
    %s1901 = scalar_lea.vmem %s1, 1008
    %v1902 = vld [vmem:[%s1901] sm:$0xff]
    %v1903 = vlaneseq
    %v1904 = vshrl.u32 %v1903, 7
    %v1905 = vadd.s32 %v1904, 48
    %vm1906 = vcmp.lt.s32.totalorder %v1905, 81
    %v1907 = vsel %vm1906, %v1902, %v8
    %v1908 = vlaneseq
    %v1909 = vand.u32 %v1908, 127
    %v1910 = vadd.s32 %v1909, 1536
    %vm1911 = vcmp.lt.s32.totalorder %v1910, 2376
    %v1912 = vsel %vm1911, %v1907, %v8
    %s1913 = scalar_lea.vmem [#allocation7], 1008
    %1915 = vst [vmem:[%s1913] sm:$0xff] %v1912
    %s1916 = scalar_lea.vmem %s1, 1016
    %v1917 = vld [vmem:[%s1916] sm:$0xff]
    %v1918 = vlaneseq
    %v1919 = vshrl.u32 %v1918, 7
    %v1920 = vadd.s32 %v1919, 48
    %vm1921 = vcmp.lt.s32.totalorder %v1920, 81
    %v1922 = vsel %vm1921, %v1917, %v8
    %v1923 = vlaneseq
    %v1924 = vand.u32 %v1923, 127
    %v1925 = vadd.s32 %v1924, 1664
    %vm1926 = vcmp.lt.s32.totalorder %v1925, 2376
    %v1927 = vsel %vm1926, %v1922, %v8
    %s1928 = scalar_lea.vmem [#allocation7], 1016
    %1930 = vst [vmem:[%s1928] sm:$0xff] %v1927
    %s1931 = scalar_lea.vmem %s1, 1024
    %v1932 = vld [vmem:[%s1931] sm:$0xff]
    %v1933 = vlaneseq
    %v1934 = vshrl.u32 %v1933, 7
    %v1935 = vadd.s32 %v1934, 48
    %vm1936 = vcmp.lt.s32.totalorder %v1935, 81
    %v1937 = vsel %vm1936, %v1932, %v8
    %v1938 = vlaneseq
    %v1939 = vand.u32 %v1938, 127
    %v1940 = vadd.s32 %v1939, 1792
    %vm1941 = vcmp.lt.s32.totalorder %v1940, 2376
    %v1942 = vsel %vm1941, %v1937, %v8
    %s1943 = scalar_lea.vmem [#allocation7], 1024
    %1945 = vst [vmem:[%s1943] sm:$0xff] %v1942
    %s1946 = scalar_lea.vmem %s1, 1032
    %v1947 = vld [vmem:[%s1946] sm:$0xff]
    %v1948 = vlaneseq
    %v1949 = vshrl.u32 %v1948, 7
    %v1950 = vadd.s32 %v1949, 48
    %vm1951 = vcmp.lt.s32.totalorder %v1950, 81
    %v1952 = vsel %vm1951, %v1947, %v8
    %v1953 = vlaneseq
    %v1954 = vand.u32 %v1953, 127
    %v1955 = vadd.s32 %v1954, 1920
    %vm1956 = vcmp.lt.s32.totalorder %v1955, 2376
    %v1957 = vsel %vm1956, %v1952, %v8
    %s1958 = scalar_lea.vmem [#allocation7], 1032
    %1960 = vst [vmem:[%s1958] sm:$0xff] %v1957
    %s1961 = scalar_lea.vmem %s1, 1040
    %v1962 = vld [vmem:[%s1961] sm:$0xff]
    %v1963 = vlaneseq
    %v1964 = vshrl.u32 %v1963, 7
    %v1965 = vadd.s32 %v1964, 48
    %vm1966 = vcmp.lt.s32.totalorder %v1965, 81
    %v1967 = vsel %vm1966, %v1962, %v8
    %v1968 = vlaneseq
    %v1969 = vand.u32 %v1968, 127
    %v1970 = vadd.s32 %v1969, 2048
    %vm1971 = vcmp.lt.s32.totalorder %v1970, 2376
    %v1972 = vsel %vm1971, %v1967, %v8
    %s1973 = scalar_lea.vmem [#allocation7], 1040
    %1975 = vst [vmem:[%s1973] sm:$0xff] %v1972
    %s1976 = scalar_lea.vmem %s1, 1048
    %v1977 = vld [vmem:[%s1976] sm:$0xff]
    %v1978 = vlaneseq
    %v1979 = vshrl.u32 %v1978, 7
    %v1980 = vadd.s32 %v1979, 48
    %vm1981 = vcmp.lt.s32.totalorder %v1980, 81
    %v1982 = vsel %vm1981, %v1977, %v8
    %v1983 = vlaneseq
    %v1984 = vand.u32 %v1983, 127
    %v1985 = vadd.s32 %v1984, 2176
    %vm1986 = vcmp.lt.s32.totalorder %v1985, 2376
    %v1987 = vsel %vm1986, %v1982, %v8
    %s1988 = scalar_lea.vmem [#allocation7], 1048
    %1990 = vst [vmem:[%s1988] sm:$0xff] %v1987
    %s1991 = scalar_lea.vmem %s1, 1056
    %v1992 = vld [vmem:[%s1991] sm:$0xff]
    %v1993 = vlaneseq
    %v1994 = vshrl.u32 %v1993, 7
    %v1995 = vadd.s32 %v1994, 48
    %vm1996 = vcmp.lt.s32.totalorder %v1995, 81
    %v1997 = vsel %vm1996, %v1992, %v8
    %v1998 = vlaneseq
    %v1999 = vand.u32 %v1998, 127
    %v2000 = vadd.s32 %v1999, 2304
    %vm2001 = vcmp.lt.s32.totalorder %v2000, 2376
    %v2002 = vsel %vm2001, %v1997, %v8
    %s2003 = scalar_lea.vmem [#allocation7], 1056
    %2005 = vst [vmem:[%s2003] sm:$0xff] %v2002
    %s2006 = scalar_lea.vmem %s1, 1064
    %v2007 = vld [vmem:[%s2006] sm:$0xff]
    %v2008 = vlaneseq
    %v2009 = vshrl.u32 %v2008, 7
    %v2010 = vadd.s32 %v2009, 56
    %vm2011 = vcmp.lt.s32.totalorder %v2010, 81
    %v2012 = vsel %vm2011, %v2007, %v8
    %v2013 = vlaneseq
    %v2014 = vand.u32 %v2013, 127
    %vm2016 = vcmp.lt.s32.totalorder %v2014, 2376
    %v2017 = vsel %vm2016, %v2012, %v8
    %s2018 = scalar_lea.vmem [#allocation7], 1064
    %2020 = vst [vmem:[%s2018] sm:$0xff] %v2017
    %s2021 = scalar_lea.vmem %s1, 1072
    %v2022 = vld [vmem:[%s2021] sm:$0xff]
    %v2023 = vlaneseq
    %v2024 = vshrl.u32 %v2023, 7
    %v2025 = vadd.s32 %v2024, 56
    %vm2026 = vcmp.lt.s32.totalorder %v2025, 81
    %v2027 = vsel %vm2026, %v2022, %v8
    %v2028 = vlaneseq
    %v2029 = vand.u32 %v2028, 127
    %v2030 = vadd.s32 %v2029, 128
    %vm2031 = vcmp.lt.s32.totalorder %v2030, 2376
    %v2032 = vsel %vm2031, %v2027, %v8
    %s2033 = scalar_lea.vmem [#allocation7], 1072
    %2035 = vst [vmem:[%s2033] sm:$0xff] %v2032
    %s2036 = scalar_lea.vmem %s1, 1080
    %v2037 = vld [vmem:[%s2036] sm:$0xff]
    %v2038 = vlaneseq
    %v2039 = vshrl.u32 %v2038, 7
    %v2040 = vadd.s32 %v2039, 56
    %vm2041 = vcmp.lt.s32.totalorder %v2040, 81
    %v2042 = vsel %vm2041, %v2037, %v8
    %v2043 = vlaneseq
    %v2044 = vand.u32 %v2043, 127
    %v2045 = vadd.s32 %v2044, 256
    %vm2046 = vcmp.lt.s32.totalorder %v2045, 2376
    %v2047 = vsel %vm2046, %v2042, %v8
    %s2048 = scalar_lea.vmem [#allocation7], 1080
    %2050 = vst [vmem:[%s2048] sm:$0xff] %v2047
    %s2051 = scalar_lea.vmem %s1, 1088
    %v2052 = vld [vmem:[%s2051] sm:$0xff]
    %v2053 = vlaneseq
    %v2054 = vshrl.u32 %v2053, 7
    %v2055 = vadd.s32 %v2054, 56
    %vm2056 = vcmp.lt.s32.totalorder %v2055, 81
    %v2057 = vsel %vm2056, %v2052, %v8
    %v2058 = vlaneseq
    %v2059 = vand.u32 %v2058, 127
    %v2060 = vadd.s32 %v2059, 384
    %vm2061 = vcmp.lt.s32.totalorder %v2060, 2376
    %v2062 = vsel %vm2061, %v2057, %v8
    %s2063 = scalar_lea.vmem [#allocation7], 1088
    %2065 = vst [vmem:[%s2063] sm:$0xff] %v2062
    %s2066 = scalar_lea.vmem %s1, 1096
    %v2067 = vld [vmem:[%s2066] sm:$0xff]
    %v2068 = vlaneseq
    %v2069 = vshrl.u32 %v2068, 7
    %v2070 = vadd.s32 %v2069, 56
    %vm2071 = vcmp.lt.s32.totalorder %v2070, 81
    %v2072 = vsel %vm2071, %v2067, %v8
    %v2073 = vlaneseq
    %v2074 = vand.u32 %v2073, 127
    %v2075 = vadd.s32 %v2074, 512
    %vm2076 = vcmp.lt.s32.totalorder %v2075, 2376
    %v2077 = vsel %vm2076, %v2072, %v8
    %s2078 = scalar_lea.vmem [#allocation7], 1096
    %2080 = vst [vmem:[%s2078] sm:$0xff] %v2077
    %s2081 = scalar_lea.vmem %s1, 1104
    %v2082 = vld [vmem:[%s2081] sm:$0xff]
    %v2083 = vlaneseq
    %v2084 = vshrl.u32 %v2083, 7
    %v2085 = vadd.s32 %v2084, 56
    %vm2086 = vcmp.lt.s32.totalorder %v2085, 81
    %v2087 = vsel %vm2086, %v2082, %v8
    %v2088 = vlaneseq
    %v2089 = vand.u32 %v2088, 127
    %v2090 = vadd.s32 %v2089, 640
    %vm2091 = vcmp.lt.s32.totalorder %v2090, 2376
    %v2092 = vsel %vm2091, %v2087, %v8
    %s2093 = scalar_lea.vmem [#allocation7], 1104
    %2095 = vst [vmem:[%s2093] sm:$0xff] %v2092
    %s2096 = scalar_lea.vmem %s1, 1112
    %v2097 = vld [vmem:[%s2096] sm:$0xff]
    %v2098 = vlaneseq
    %v2099 = vshrl.u32 %v2098, 7
    %v2100 = vadd.s32 %v2099, 56
    %vm2101 = vcmp.lt.s32.totalorder %v2100, 81
    %v2102 = vsel %vm2101, %v2097, %v8
    %v2103 = vlaneseq
    %v2104 = vand.u32 %v2103, 127
    %v2105 = vadd.s32 %v2104, 768
    %vm2106 = vcmp.lt.s32.totalorder %v2105, 2376
    %v2107 = vsel %vm2106, %v2102, %v8
    %s2108 = scalar_lea.vmem [#allocation7], 1112
    %2110 = vst [vmem:[%s2108] sm:$0xff] %v2107
    %s2111 = scalar_lea.vmem %s1, 1120
    %v2112 = vld [vmem:[%s2111] sm:$0xff]
    %v2113 = vlaneseq
    %v2114 = vshrl.u32 %v2113, 7
    %v2115 = vadd.s32 %v2114, 56
    %vm2116 = vcmp.lt.s32.totalorder %v2115, 81
    %v2117 = vsel %vm2116, %v2112, %v8
    %v2118 = vlaneseq
    %v2119 = vand.u32 %v2118, 127
    %v2120 = vadd.s32 %v2119, 896
    %vm2121 = vcmp.lt.s32.totalorder %v2120, 2376
    %v2122 = vsel %vm2121, %v2117, %v8
    %s2123 = scalar_lea.vmem [#allocation7], 1120
    %2125 = vst [vmem:[%s2123] sm:$0xff] %v2122
    %s2126 = scalar_lea.vmem %s1, 1128
    %v2127 = vld [vmem:[%s2126] sm:$0xff]
    %v2128 = vlaneseq
    %v2129 = vshrl.u32 %v2128, 7
    %v2130 = vadd.s32 %v2129, 56
    %vm2131 = vcmp.lt.s32.totalorder %v2130, 81
    %v2132 = vsel %vm2131, %v2127, %v8
    %v2133 = vlaneseq
    %v2134 = vand.u32 %v2133, 127
    %v2135 = vadd.s32 %v2134, 1024
    %vm2136 = vcmp.lt.s32.totalorder %v2135, 2376
    %v2137 = vsel %vm2136, %v2132, %v8
    %s2138 = scalar_lea.vmem [#allocation7], 1128
    %2140 = vst [vmem:[%s2138] sm:$0xff] %v2137
    %s2141 = scalar_lea.vmem %s1, 1136
    %v2142 = vld [vmem:[%s2141] sm:$0xff]
    %v2143 = vlaneseq
    %v2144 = vshrl.u32 %v2143, 7
    %v2145 = vadd.s32 %v2144, 56
    %vm2146 = vcmp.lt.s32.totalorder %v2145, 81
    %v2147 = vsel %vm2146, %v2142, %v8
    %v2148 = vlaneseq
    %v2149 = vand.u32 %v2148, 127
    %v2150 = vadd.s32 %v2149, 1152
    %vm2151 = vcmp.lt.s32.totalorder %v2150, 2376
    %v2152 = vsel %vm2151, %v2147, %v8
    %s2153 = scalar_lea.vmem [#allocation7], 1136
    %2155 = vst [vmem:[%s2153] sm:$0xff] %v2152
    %s2156 = scalar_lea.vmem %s1, 1144
    %v2157 = vld [vmem:[%s2156] sm:$0xff]
    %v2158 = vlaneseq
    %v2159 = vshrl.u32 %v2158, 7
    %v2160 = vadd.s32 %v2159, 56
    %vm2161 = vcmp.lt.s32.totalorder %v2160, 81
    %v2162 = vsel %vm2161, %v2157, %v8
    %v2163 = vlaneseq
    %v2164 = vand.u32 %v2163, 127
    %v2165 = vadd.s32 %v2164, 1280
    %vm2166 = vcmp.lt.s32.totalorder %v2165, 2376
    %v2167 = vsel %vm2166, %v2162, %v8
    %s2168 = scalar_lea.vmem [#allocation7], 1144
    %2170 = vst [vmem:[%s2168] sm:$0xff] %v2167
    %s2171 = scalar_lea.vmem %s1, 1152
    %v2172 = vld [vmem:[%s2171] sm:$0xff]
    %v2173 = vlaneseq
    %v2174 = vshrl.u32 %v2173, 7
    %v2175 = vadd.s32 %v2174, 56
    %vm2176 = vcmp.lt.s32.totalorder %v2175, 81
    %v2177 = vsel %vm2176, %v2172, %v8
    %v2178 = vlaneseq
    %v2179 = vand.u32 %v2178, 127
    %v2180 = vadd.s32 %v2179, 1408
    %vm2181 = vcmp.lt.s32.totalorder %v2180, 2376
    %v2182 = vsel %vm2181, %v2177, %v8
    %s2183 = scalar_lea.vmem [#allocation7], 1152
    %2185 = vst [vmem:[%s2183] sm:$0xff] %v2182
    %s2186 = scalar_lea.vmem %s1, 1160
    %v2187 = vld [vmem:[%s2186] sm:$0xff]
    %v2188 = vlaneseq
    %v2189 = vshrl.u32 %v2188, 7
    %v2190 = vadd.s32 %v2189, 56
    %vm2191 = vcmp.lt.s32.totalorder %v2190, 81
    %v2192 = vsel %vm2191, %v2187, %v8
    %v2193 = vlaneseq
    %v2194 = vand.u32 %v2193, 127
    %v2195 = vadd.s32 %v2194, 1536
    %vm2196 = vcmp.lt.s32.totalorder %v2195, 2376
    %v2197 = vsel %vm2196, %v2192, %v8
    %s2198 = scalar_lea.vmem [#allocation7], 1160
    %2200 = vst [vmem:[%s2198] sm:$0xff] %v2197
    %s2201 = scalar_lea.vmem %s1, 1168
    %v2202 = vld [vmem:[%s2201] sm:$0xff]
    %v2203 = vlaneseq
    %v2204 = vshrl.u32 %v2203, 7
    %v2205 = vadd.s32 %v2204, 56
    %vm2206 = vcmp.lt.s32.totalorder %v2205, 81
    %v2207 = vsel %vm2206, %v2202, %v8
    %v2208 = vlaneseq
    %v2209 = vand.u32 %v2208, 127
    %v2210 = vadd.s32 %v2209, 1664
    %vm2211 = vcmp.lt.s32.totalorder %v2210, 2376
    %v2212 = vsel %vm2211, %v2207, %v8
    %s2213 = scalar_lea.vmem [#allocation7], 1168
    %2215 = vst [vmem:[%s2213] sm:$0xff] %v2212
    %s2216 = scalar_lea.vmem %s1, 1176
    %v2217 = vld [vmem:[%s2216] sm:$0xff]
    %v2218 = vlaneseq
    %v2219 = vshrl.u32 %v2218, 7
    %v2220 = vadd.s32 %v2219, 56
    %vm2221 = vcmp.lt.s32.totalorder %v2220, 81
    %v2222 = vsel %vm2221, %v2217, %v8
    %v2223 = vlaneseq
    %v2224 = vand.u32 %v2223, 127
    %v2225 = vadd.s32 %v2224, 1792
    %vm2226 = vcmp.lt.s32.totalorder %v2225, 2376
    %v2227 = vsel %vm2226, %v2222, %v8
    %s2228 = scalar_lea.vmem [#allocation7], 1176
    %2230 = vst [vmem:[%s2228] sm:$0xff] %v2227
    %s2231 = scalar_lea.vmem %s1, 1184
    %v2232 = vld [vmem:[%s2231] sm:$0xff]
    %v2233 = vlaneseq
    %v2234 = vshrl.u32 %v2233, 7
    %v2235 = vadd.s32 %v2234, 56
    %vm2236 = vcmp.lt.s32.totalorder %v2235, 81
    %v2237 = vsel %vm2236, %v2232, %v8
    %v2238 = vlaneseq
    %v2239 = vand.u32 %v2238, 127
    %v2240 = vadd.s32 %v2239, 1920
    %vm2241 = vcmp.lt.s32.totalorder %v2240, 2376
    %v2242 = vsel %vm2241, %v2237, %v8
    %s2243 = scalar_lea.vmem [#allocation7], 1184
    %2245 = vst [vmem:[%s2243] sm:$0xff] %v2242
    %s2246 = scalar_lea.vmem %s1, 1192
    %v2247 = vld [vmem:[%s2246] sm:$0xff]
    %v2248 = vlaneseq
    %v2249 = vshrl.u32 %v2248, 7
    %v2250 = vadd.s32 %v2249, 56
    %vm2251 = vcmp.lt.s32.totalorder %v2250, 81
    %v2252 = vsel %vm2251, %v2247, %v8
    %v2253 = vlaneseq
    %v2254 = vand.u32 %v2253, 127
    %v2255 = vadd.s32 %v2254, 2048
    %vm2256 = vcmp.lt.s32.totalorder %v2255, 2376
    %v2257 = vsel %vm2256, %v2252, %v8
    %s2258 = scalar_lea.vmem [#allocation7], 1192
    %2260 = vst [vmem:[%s2258] sm:$0xff] %v2257
    %s2261 = scalar_lea.vmem %s1, 1200
    %v2262 = vld [vmem:[%s2261] sm:$0xff]
    %v2263 = vlaneseq
    %v2264 = vshrl.u32 %v2263, 7
    %v2265 = vadd.s32 %v2264, 56
    %vm2266 = vcmp.lt.s32.totalorder %v2265, 81
    %v2267 = vsel %vm2266, %v2262, %v8
    %v2268 = vlaneseq
    %v2269 = vand.u32 %v2268, 127
    %v2270 = vadd.s32 %v2269, 2176
    %vm2271 = vcmp.lt.s32.totalorder %v2270, 2376
    %v2272 = vsel %vm2271, %v2267, %v8
    %s2273 = scalar_lea.vmem [#allocation7], 1200
    %2275 = vst [vmem:[%s2273] sm:$0xff] %v2272
    %s2276 = scalar_lea.vmem %s1, 1208
    %v2277 = vld [vmem:[%s2276] sm:$0xff]
    %v2278 = vlaneseq
    %v2279 = vshrl.u32 %v2278, 7
    %v2280 = vadd.s32 %v2279, 56
    %vm2281 = vcmp.lt.s32.totalorder %v2280, 81
    %v2282 = vsel %vm2281, %v2277, %v8
    %v2283 = vlaneseq
    %v2284 = vand.u32 %v2283, 127
    %v2285 = vadd.s32 %v2284, 2304
    %vm2286 = vcmp.lt.s32.totalorder %v2285, 2376
    %v2287 = vsel %vm2286, %v2282, %v8
    %s2288 = scalar_lea.vmem [#allocation7], 1208
    %2290 = vst [vmem:[%s2288] sm:$0xff] %v2287
    %s2291 = scalar_lea.vmem %s1, 1216
    %v2292 = vld [vmem:[%s2291] sm:$0xff]
    %v2293 = vlaneseq
    %v2294 = vshrl.u32 %v2293, 7
    %v2295 = vadd.s32 %v2294, 64
    %vm2296 = vcmp.lt.s32.totalorder %v2295, 81
    %v2297 = vsel %vm2296, %v2292, %v8
    %v2298 = vlaneseq
    %v2299 = vand.u32 %v2298, 127
    %vm2301 = vcmp.lt.s32.totalorder %v2299, 2376
    %v2302 = vsel %vm2301, %v2297, %v8
    %s2303 = scalar_lea.vmem [#allocation7], 1216
    %2305 = vst [vmem:[%s2303] sm:$0xff] %v2302
    %s2306 = scalar_lea.vmem %s1, 1224
    %v2307 = vld [vmem:[%s2306] sm:$0xff]
    %v2308 = vlaneseq
    %v2309 = vshrl.u32 %v2308, 7
    %v2310 = vadd.s32 %v2309, 64
    %vm2311 = vcmp.lt.s32.totalorder %v2310, 81
    %v2312 = vsel %vm2311, %v2307, %v8
    %v2313 = vlaneseq
    %v2314 = vand.u32 %v2313, 127
    %v2315 = vadd.s32 %v2314, 128
    %vm2316 = vcmp.lt.s32.totalorder %v2315, 2376
    %v2317 = vsel %vm2316, %v2312, %v8
    %s2318 = scalar_lea.vmem [#allocation7], 1224
    %2320 = vst [vmem:[%s2318] sm:$0xff] %v2317
    %s2321 = scalar_lea.vmem %s1, 1232
    %v2322 = vld [vmem:[%s2321] sm:$0xff]
    %v2323 = vlaneseq
    %v2324 = vshrl.u32 %v2323, 7
    %v2325 = vadd.s32 %v2324, 64
    %vm2326 = vcmp.lt.s32.totalorder %v2325, 81
    %v2327 = vsel %vm2326, %v2322, %v8
    %v2328 = vlaneseq
    %v2329 = vand.u32 %v2328, 127
    %v2330 = vadd.s32 %v2329, 256
    %vm2331 = vcmp.lt.s32.totalorder %v2330, 2376
    %v2332 = vsel %vm2331, %v2327, %v8
    %s2333 = scalar_lea.vmem [#allocation7], 1232
    %2335 = vst [vmem:[%s2333] sm:$0xff] %v2332
    %s2336 = scalar_lea.vmem %s1, 1240
    %v2337 = vld [vmem:[%s2336] sm:$0xff]
    %v2338 = vlaneseq
    %v2339 = vshrl.u32 %v2338, 7
    %v2340 = vadd.s32 %v2339, 64
    %vm2341 = vcmp.lt.s32.totalorder %v2340, 81
    %v2342 = vsel %vm2341, %v2337, %v8
    %v2343 = vlaneseq
    %v2344 = vand.u32 %v2343, 127
    %v2345 = vadd.s32 %v2344, 384
    %vm2346 = vcmp.lt.s32.totalorder %v2345, 2376
    %v2347 = vsel %vm2346, %v2342, %v8
    %s2348 = scalar_lea.vmem [#allocation7], 1240
    %2350 = vst [vmem:[%s2348] sm:$0xff] %v2347
    %s2351 = scalar_lea.vmem %s1, 1248
    %v2352 = vld [vmem:[%s2351] sm:$0xff]
    %v2353 = vlaneseq
    %v2354 = vshrl.u32 %v2353, 7
    %v2355 = vadd.s32 %v2354, 64
    %vm2356 = vcmp.lt.s32.totalorder %v2355, 81
    %v2357 = vsel %vm2356, %v2352, %v8
    %v2358 = vlaneseq
    %v2359 = vand.u32 %v2358, 127
    %v2360 = vadd.s32 %v2359, 512
    %vm2361 = vcmp.lt.s32.totalorder %v2360, 2376
    %v2362 = vsel %vm2361, %v2357, %v8
    %s2363 = scalar_lea.vmem [#allocation7], 1248
    %2365 = vst [vmem:[%s2363] sm:$0xff] %v2362
    %s2366 = scalar_lea.vmem %s1, 1256
    %v2367 = vld [vmem:[%s2366] sm:$0xff]
    %v2368 = vlaneseq
    %v2369 = vshrl.u32 %v2368, 7
    %v2370 = vadd.s32 %v2369, 64
    %vm2371 = vcmp.lt.s32.totalorder %v2370, 81
    %v2372 = vsel %vm2371, %v2367, %v8
    %v2373 = vlaneseq
    %v2374 = vand.u32 %v2373, 127
    %v2375 = vadd.s32 %v2374, 640
    %vm2376 = vcmp.lt.s32.totalorder %v2375, 2376
    %v2377 = vsel %vm2376, %v2372, %v8
    %s2378 = scalar_lea.vmem [#allocation7], 1256
    %2380 = vst [vmem:[%s2378] sm:$0xff] %v2377
    %s2381 = scalar_lea.vmem %s1, 1264
    %v2382 = vld [vmem:[%s2381] sm:$0xff]
    %v2383 = vlaneseq
    %v2384 = vshrl.u32 %v2383, 7
    %v2385 = vadd.s32 %v2384, 64
    %vm2386 = vcmp.lt.s32.totalorder %v2385, 81
    %v2387 = vsel %vm2386, %v2382, %v8
    %v2388 = vlaneseq
    %v2389 = vand.u32 %v2388, 127
    %v2390 = vadd.s32 %v2389, 768
    %vm2391 = vcmp.lt.s32.totalorder %v2390, 2376
    %v2392 = vsel %vm2391, %v2387, %v8
    %s2393 = scalar_lea.vmem [#allocation7], 1264
    %2395 = vst [vmem:[%s2393] sm:$0xff] %v2392
    %s2396 = scalar_lea.vmem %s1, 1272
    %v2397 = vld [vmem:[%s2396] sm:$0xff]
    %v2398 = vlaneseq
    %v2399 = vshrl.u32 %v2398, 7
    %v2400 = vadd.s32 %v2399, 64
    %vm2401 = vcmp.lt.s32.totalorder %v2400, 81
    %v2402 = vsel %vm2401, %v2397, %v8
    %v2403 = vlaneseq
    %v2404 = vand.u32 %v2403, 127
    %v2405 = vadd.s32 %v2404, 896
    %vm2406 = vcmp.lt.s32.totalorder %v2405, 2376
    %v2407 = vsel %vm2406, %v2402, %v8
    %s2408 = scalar_lea.vmem [#allocation7], 1272
    %2410 = vst [vmem:[%s2408] sm:$0xff] %v2407
    %s2411 = scalar_lea.vmem %s1, 1280
    %v2412 = vld [vmem:[%s2411] sm:$0xff]
    %v2413 = vlaneseq
    %v2414 = vshrl.u32 %v2413, 7
    %v2415 = vadd.s32 %v2414, 64
    %vm2416 = vcmp.lt.s32.totalorder %v2415, 81
    %v2417 = vsel %vm2416, %v2412, %v8
    %v2418 = vlaneseq
    %v2419 = vand.u32 %v2418, 127
    %v2420 = vadd.s32 %v2419, 1024
    %vm2421 = vcmp.lt.s32.totalorder %v2420, 2376
    %v2422 = vsel %vm2421, %v2417, %v8
    %s2423 = scalar_lea.vmem [#allocation7], 1280
    %2425 = vst [vmem:[%s2423] sm:$0xff] %v2422
    %s2426 = scalar_lea.vmem %s1, 1288
    %v2427 = vld [vmem:[%s2426] sm:$0xff]
    %v2428 = vlaneseq
    %v2429 = vshrl.u32 %v2428, 7
    %v2430 = vadd.s32 %v2429, 64
    %vm2431 = vcmp.lt.s32.totalorder %v2430, 81
    %v2432 = vsel %vm2431, %v2427, %v8
    %v2433 = vlaneseq
    %v2434 = vand.u32 %v2433, 127
    %v2435 = vadd.s32 %v2434, 1152
    %vm2436 = vcmp.lt.s32.totalorder %v2435, 2376
    %v2437 = vsel %vm2436, %v2432, %v8
    %s2438 = scalar_lea.vmem [#allocation7], 1288
    %2440 = vst [vmem:[%s2438] sm:$0xff] %v2437
    %s2441 = scalar_lea.vmem %s1, 1296
    %v2442 = vld [vmem:[%s2441] sm:$0xff]
    %v2443 = vlaneseq
    %v2444 = vshrl.u32 %v2443, 7
    %v2445 = vadd.s32 %v2444, 64
    %vm2446 = vcmp.lt.s32.totalorder %v2445, 81
    %v2447 = vsel %vm2446, %v2442, %v8
    %v2448 = vlaneseq
    %v2449 = vand.u32 %v2448, 127
    %v2450 = vadd.s32 %v2449, 1280
    %vm2451 = vcmp.lt.s32.totalorder %v2450, 2376
    %v2452 = vsel %vm2451, %v2447, %v8
    %s2453 = scalar_lea.vmem [#allocation7], 1296
    %2455 = vst [vmem:[%s2453] sm:$0xff] %v2452
    %s2456 = scalar_lea.vmem %s1, 1304
    %v2457 = vld [vmem:[%s2456] sm:$0xff]
    %v2458 = vlaneseq
    %v2459 = vshrl.u32 %v2458, 7
    %v2460 = vadd.s32 %v2459, 64
    %vm2461 = vcmp.lt.s32.totalorder %v2460, 81
    %v2462 = vsel %vm2461, %v2457, %v8
    %v2463 = vlaneseq
    %v2464 = vand.u32 %v2463, 127
    %v2465 = vadd.s32 %v2464, 1408
    %vm2466 = vcmp.lt.s32.totalorder %v2465, 2376
    %v2467 = vsel %vm2466, %v2462, %v8
    %s2468 = scalar_lea.vmem [#allocation7], 1304
    %2470 = vst [vmem:[%s2468] sm:$0xff] %v2467
    %s2471 = scalar_lea.vmem %s1, 1312
    %v2472 = vld [vmem:[%s2471] sm:$0xff]
    %v2473 = vlaneseq
    %v2474 = vshrl.u32 %v2473, 7
    %v2475 = vadd.s32 %v2474, 64
    %vm2476 = vcmp.lt.s32.totalorder %v2475, 81
    %v2477 = vsel %vm2476, %v2472, %v8
    %v2478 = vlaneseq
    %v2479 = vand.u32 %v2478, 127
    %v2480 = vadd.s32 %v2479, 1536
    %vm2481 = vcmp.lt.s32.totalorder %v2480, 2376
    %v2482 = vsel %vm2481, %v2477, %v8
    %s2483 = scalar_lea.vmem [#allocation7], 1312
    %2485 = vst [vmem:[%s2483] sm:$0xff] %v2482
    %s2486 = scalar_lea.vmem %s1, 1320
    %v2487 = vld [vmem:[%s2486] sm:$0xff]
    %v2488 = vlaneseq
    %v2489 = vshrl.u32 %v2488, 7
    %v2490 = vadd.s32 %v2489, 64
    %vm2491 = vcmp.lt.s32.totalorder %v2490, 81
    %v2492 = vsel %vm2491, %v2487, %v8
    %v2493 = vlaneseq
    %v2494 = vand.u32 %v2493, 127
    %v2495 = vadd.s32 %v2494, 1664
    %vm2496 = vcmp.lt.s32.totalorder %v2495, 2376
    %v2497 = vsel %vm2496, %v2492, %v8
    %s2498 = scalar_lea.vmem [#allocation7], 1320
    %2500 = vst [vmem:[%s2498] sm:$0xff] %v2497
    %s2501 = scalar_lea.vmem %s1, 1328
    %v2502 = vld [vmem:[%s2501] sm:$0xff]
    %v2503 = vlaneseq
    %v2504 = vshrl.u32 %v2503, 7
    %v2505 = vadd.s32 %v2504, 64
    %vm2506 = vcmp.lt.s32.totalorder %v2505, 81
    %v2507 = vsel %vm2506, %v2502, %v8
    %v2508 = vlaneseq
    %v2509 = vand.u32 %v2508, 127
    %v2510 = vadd.s32 %v2509, 1792
    %vm2511 = vcmp.lt.s32.totalorder %v2510, 2376
    %v2512 = vsel %vm2511, %v2507, %v8
    %s2513 = scalar_lea.vmem [#allocation7], 1328
    %2515 = vst [vmem:[%s2513] sm:$0xff] %v2512
    %s2516 = scalar_lea.vmem %s1, 1336
    %v2517 = vld [vmem:[%s2516] sm:$0xff]
    %v2518 = vlaneseq
    %v2519 = vshrl.u32 %v2518, 7
    %v2520 = vadd.s32 %v2519, 64
    %vm2521 = vcmp.lt.s32.totalorder %v2520, 81
    %v2522 = vsel %vm2521, %v2517, %v8
    %v2523 = vlaneseq
    %v2524 = vand.u32 %v2523, 127
    %v2525 = vadd.s32 %v2524, 1920
    %vm2526 = vcmp.lt.s32.totalorder %v2525, 2376
    %v2527 = vsel %vm2526, %v2522, %v8
    %s2528 = scalar_lea.vmem [#allocation7], 1336
    %2530 = vst [vmem:[%s2528] sm:$0xff] %v2527
    %s2531 = scalar_lea.vmem %s1, 1344
    %v2532 = vld [vmem:[%s2531] sm:$0xff]
    %v2533 = vlaneseq
    %v2534 = vshrl.u32 %v2533, 7
    %v2535 = vadd.s32 %v2534, 64
    %vm2536 = vcmp.lt.s32.totalorder %v2535, 81
    %v2537 = vsel %vm2536, %v2532, %v8
    %v2538 = vlaneseq
    %v2539 = vand.u32 %v2538, 127
    %v2540 = vadd.s32 %v2539, 2048
    %vm2541 = vcmp.lt.s32.totalorder %v2540, 2376
    %v2542 = vsel %vm2541, %v2537, %v8
    %s2543 = scalar_lea.vmem [#allocation7], 1344
    %2545 = vst [vmem:[%s2543] sm:$0xff] %v2542
    %s2546 = scalar_lea.vmem %s1, 1352
    %v2547 = vld [vmem:[%s2546] sm:$0xff]
    %v2548 = vlaneseq
    %v2549 = vshrl.u32 %v2548, 7
    %v2550 = vadd.s32 %v2549, 64
    %vm2551 = vcmp.lt.s32.totalorder %v2550, 81
    %v2552 = vsel %vm2551, %v2547, %v8
    %v2553 = vlaneseq
    %v2554 = vand.u32 %v2553, 127
    %v2555 = vadd.s32 %v2554, 2176
    %vm2556 = vcmp.lt.s32.totalorder %v2555, 2376
    %v2557 = vsel %vm2556, %v2552, %v8
    %s2558 = scalar_lea.vmem [#allocation7], 1352
    %2560 = vst [vmem:[%s2558] sm:$0xff] %v2557
    %s2561 = scalar_lea.vmem %s1, 1360
    %v2562 = vld [vmem:[%s2561] sm:$0xff]
    %v2563 = vlaneseq
    %v2564 = vshrl.u32 %v2563, 7
    %v2565 = vadd.s32 %v2564, 64
    %vm2566 = vcmp.lt.s32.totalorder %v2565, 81
    %v2567 = vsel %vm2566, %v2562, %v8
    %v2568 = vlaneseq
    %v2569 = vand.u32 %v2568, 127
    %v2570 = vadd.s32 %v2569, 2304
    %vm2571 = vcmp.lt.s32.totalorder %v2570, 2376
    %v2572 = vsel %vm2571, %v2567, %v8
    %s2573 = scalar_lea.vmem [#allocation7], 1360
    %2575 = vst [vmem:[%s2573] sm:$0xff] %v2572
    %s2576 = scalar_lea.vmem %s1, 1368
    %v2577 = vld [vmem:[%s2576] sm:$0xff]
    %v2578 = vlaneseq
    %v2579 = vshrl.u32 %v2578, 7
    %v2580 = vadd.s32 %v2579, 72
    %vm2581 = vcmp.lt.s32.totalorder %v2580, 81
    %v2582 = vsel %vm2581, %v2577, %v8
    %v2583 = vlaneseq
    %v2584 = vand.u32 %v2583, 127
    %vm2586 = vcmp.lt.s32.totalorder %v2584, 2376
    %v2587 = vsel %vm2586, %v2582, %v8
    %s2588 = scalar_lea.vmem [#allocation7], 1368
    %2590 = vst [vmem:[%s2588] sm:$0xff] %v2587
    %s2591 = scalar_lea.vmem %s1, 1376
    %v2592 = vld [vmem:[%s2591] sm:$0xff]
    %v2593 = vlaneseq
    %v2594 = vshrl.u32 %v2593, 7
    %v2595 = vadd.s32 %v2594, 72
    %vm2596 = vcmp.lt.s32.totalorder %v2595, 81
    %v2597 = vsel %vm2596, %v2592, %v8
    %v2598 = vlaneseq
    %v2599 = vand.u32 %v2598, 127
    %v2600 = vadd.s32 %v2599, 128
    %vm2601 = vcmp.lt.s32.totalorder %v2600, 2376
    %v2602 = vsel %vm2601, %v2597, %v8
    %s2603 = scalar_lea.vmem [#allocation7], 1376
    %2605 = vst [vmem:[%s2603] sm:$0xff] %v2602
    %s2606 = scalar_lea.vmem %s1, 1384
    %v2607 = vld [vmem:[%s2606] sm:$0xff]
    %v2608 = vlaneseq
    %v2609 = vshrl.u32 %v2608, 7
    %v2610 = vadd.s32 %v2609, 72
    %vm2611 = vcmp.lt.s32.totalorder %v2610, 81
    %v2612 = vsel %vm2611, %v2607, %v8
    %v2613 = vlaneseq
    %v2614 = vand.u32 %v2613, 127
    %v2615 = vadd.s32 %v2614, 256
    %vm2616 = vcmp.lt.s32.totalorder %v2615, 2376
    %v2617 = vsel %vm2616, %v2612, %v8
    %s2618 = scalar_lea.vmem [#allocation7], 1384
    %2620 = vst [vmem:[%s2618] sm:$0xff] %v2617
    %s2621 = scalar_lea.vmem %s1, 1392
    %v2622 = vld [vmem:[%s2621] sm:$0xff]
    %v2623 = vlaneseq
    %v2624 = vshrl.u32 %v2623, 7
    %v2625 = vadd.s32 %v2624, 72
    %vm2626 = vcmp.lt.s32.totalorder %v2625, 81
    %v2627 = vsel %vm2626, %v2622, %v8
    %v2628 = vlaneseq
    %v2629 = vand.u32 %v2628, 127
    %v2630 = vadd.s32 %v2629, 384
    %vm2631 = vcmp.lt.s32.totalorder %v2630, 2376
    %v2632 = vsel %vm2631, %v2627, %v8
    %s2633 = scalar_lea.vmem [#allocation7], 1392
    %2635 = vst [vmem:[%s2633] sm:$0xff] %v2632
    %s2636 = scalar_lea.vmem %s1, 1400
    %v2637 = vld [vmem:[%s2636] sm:$0xff]
    %v2638 = vlaneseq
    %v2639 = vshrl.u32 %v2638, 7
    %v2640 = vadd.s32 %v2639, 72
    %vm2641 = vcmp.lt.s32.totalorder %v2640, 81
    %v2642 = vsel %vm2641, %v2637, %v8
    %v2643 = vlaneseq
    %v2644 = vand.u32 %v2643, 127
    %v2645 = vadd.s32 %v2644, 512
    %vm2646 = vcmp.lt.s32.totalorder %v2645, 2376
    %v2647 = vsel %vm2646, %v2642, %v8
    %s2648 = scalar_lea.vmem [#allocation7], 1400
    %2650 = vst [vmem:[%s2648] sm:$0xff] %v2647
    %s2651 = scalar_lea.vmem %s1, 1408
    %v2652 = vld [vmem:[%s2651] sm:$0xff]
    %v2653 = vlaneseq
    %v2654 = vshrl.u32 %v2653, 7
    %v2655 = vadd.s32 %v2654, 72
    %vm2656 = vcmp.lt.s32.totalorder %v2655, 81
    %v2657 = vsel %vm2656, %v2652, %v8
    %v2658 = vlaneseq
    %v2659 = vand.u32 %v2658, 127
    %v2660 = vadd.s32 %v2659, 640
    %vm2661 = vcmp.lt.s32.totalorder %v2660, 2376
    %v2662 = vsel %vm2661, %v2657, %v8
    %s2663 = scalar_lea.vmem [#allocation7], 1408
    %2665 = vst [vmem:[%s2663] sm:$0xff] %v2662
    %s2666 = scalar_lea.vmem %s1, 1416
    %v2667 = vld [vmem:[%s2666] sm:$0xff]
    %v2668 = vlaneseq
    %v2669 = vshrl.u32 %v2668, 7
    %v2670 = vadd.s32 %v2669, 72
    %vm2671 = vcmp.lt.s32.totalorder %v2670, 81
    %v2672 = vsel %vm2671, %v2667, %v8
    %v2673 = vlaneseq
    %v2674 = vand.u32 %v2673, 127
    %v2675 = vadd.s32 %v2674, 768
    %vm2676 = vcmp.lt.s32.totalorder %v2675, 2376
    %v2677 = vsel %vm2676, %v2672, %v8
    %s2678 = scalar_lea.vmem [#allocation7], 1416
    %2680 = vst [vmem:[%s2678] sm:$0xff] %v2677
    %s2681 = scalar_lea.vmem %s1, 1424
    %v2682 = vld [vmem:[%s2681] sm:$0xff]
    %v2683 = vlaneseq
    %v2684 = vshrl.u32 %v2683, 7
    %v2685 = vadd.s32 %v2684, 72
    %vm2686 = vcmp.lt.s32.totalorder %v2685, 81
    %v2687 = vsel %vm2686, %v2682, %v8
    %v2688 = vlaneseq
    %v2689 = vand.u32 %v2688, 127
    %v2690 = vadd.s32 %v2689, 896
    %vm2691 = vcmp.lt.s32.totalorder %v2690, 2376
    %v2692 = vsel %vm2691, %v2687, %v8
    %s2693 = scalar_lea.vmem [#allocation7], 1424
    %2695 = vst [vmem:[%s2693] sm:$0xff] %v2692
    %s2696 = scalar_lea.vmem %s1, 1432
    %v2697 = vld [vmem:[%s2696] sm:$0xff]
    %v2698 = vlaneseq
    %v2699 = vshrl.u32 %v2698, 7
    %v2700 = vadd.s32 %v2699, 72
    %vm2701 = vcmp.lt.s32.totalorder %v2700, 81
    %v2702 = vsel %vm2701, %v2697, %v8
    %v2703 = vlaneseq
    %v2704 = vand.u32 %v2703, 127
    %v2705 = vadd.s32 %v2704, 1024
    %vm2706 = vcmp.lt.s32.totalorder %v2705, 2376
    %v2707 = vsel %vm2706, %v2702, %v8
    %s2708 = scalar_lea.vmem [#allocation7], 1432
    %2710 = vst [vmem:[%s2708] sm:$0xff] %v2707
    %s2711 = scalar_lea.vmem %s1, 1440
    %v2712 = vld [vmem:[%s2711] sm:$0xff]
    %v2713 = vlaneseq
    %v2714 = vshrl.u32 %v2713, 7
    %v2715 = vadd.s32 %v2714, 72
    %vm2716 = vcmp.lt.s32.totalorder %v2715, 81
    %v2717 = vsel %vm2716, %v2712, %v8
    %v2718 = vlaneseq
    %v2719 = vand.u32 %v2718, 127
    %v2720 = vadd.s32 %v2719, 1152
    %vm2721 = vcmp.lt.s32.totalorder %v2720, 2376
    %v2722 = vsel %vm2721, %v2717, %v8
    %s2723 = scalar_lea.vmem [#allocation7], 1440
    %2725 = vst [vmem:[%s2723] sm:$0xff] %v2722
    %s2726 = scalar_lea.vmem %s1, 1448
    %v2727 = vld [vmem:[%s2726] sm:$0xff]
    %v2728 = vlaneseq
    %v2729 = vshrl.u32 %v2728, 7
    %v2730 = vadd.s32 %v2729, 72
    %vm2731 = vcmp.lt.s32.totalorder %v2730, 81
    %v2732 = vsel %vm2731, %v2727, %v8
    %v2733 = vlaneseq
    %v2734 = vand.u32 %v2733, 127
    %v2735 = vadd.s32 %v2734, 1280
    %vm2736 = vcmp.lt.s32.totalorder %v2735, 2376
    %v2737 = vsel %vm2736, %v2732, %v8
    %s2738 = scalar_lea.vmem [#allocation7], 1448
    %2740 = vst [vmem:[%s2738] sm:$0xff] %v2737
    %s2741 = scalar_lea.vmem %s1, 1456
    %v2742 = vld [vmem:[%s2741] sm:$0xff]
    %v2743 = vlaneseq
    %v2744 = vshrl.u32 %v2743, 7
    %v2745 = vadd.s32 %v2744, 72
    %vm2746 = vcmp.lt.s32.totalorder %v2745, 81
    %v2747 = vsel %vm2746, %v2742, %v8
    %v2748 = vlaneseq
    %v2749 = vand.u32 %v2748, 127
    %v2750 = vadd.s32 %v2749, 1408
    %vm2751 = vcmp.lt.s32.totalorder %v2750, 2376
    %v2752 = vsel %vm2751, %v2747, %v8
    %s2753 = scalar_lea.vmem [#allocation7], 1456
    %2755 = vst [vmem:[%s2753] sm:$0xff] %v2752
    %s2756 = scalar_lea.vmem %s1, 1464
    %v2757 = vld [vmem:[%s2756] sm:$0xff]
    %v2758 = vlaneseq
    %v2759 = vshrl.u32 %v2758, 7
    %v2760 = vadd.s32 %v2759, 72
    %vm2761 = vcmp.lt.s32.totalorder %v2760, 81
    %v2762 = vsel %vm2761, %v2757, %v8
    %v2763 = vlaneseq
    %v2764 = vand.u32 %v2763, 127
    %v2765 = vadd.s32 %v2764, 1536
    %vm2766 = vcmp.lt.s32.totalorder %v2765, 2376
    %v2767 = vsel %vm2766, %v2762, %v8
    %s2768 = scalar_lea.vmem [#allocation7], 1464
    %2770 = vst [vmem:[%s2768] sm:$0xff] %v2767
    %s2771 = scalar_lea.vmem %s1, 1472
    %v2772 = vld [vmem:[%s2771] sm:$0xff]
    %v2773 = vlaneseq
    %v2774 = vshrl.u32 %v2773, 7
    %v2775 = vadd.s32 %v2774, 72
    %vm2776 = vcmp.lt.s32.totalorder %v2775, 81
    %v2777 = vsel %vm2776, %v2772, %v8
    %v2778 = vlaneseq
    %v2779 = vand.u32 %v2778, 127
    %v2780 = vadd.s32 %v2779, 1664
    %vm2781 = vcmp.lt.s32.totalorder %v2780, 2376
    %v2782 = vsel %vm2781, %v2777, %v8
    %s2783 = scalar_lea.vmem [#allocation7], 1472
    %2785 = vst [vmem:[%s2783] sm:$0xff] %v2782
    %s2786 = scalar_lea.vmem %s1, 1480
    %v2787 = vld [vmem:[%s2786] sm:$0xff]
    %v2788 = vlaneseq
    %v2789 = vshrl.u32 %v2788, 7
    %v2790 = vadd.s32 %v2789, 72
    %vm2791 = vcmp.lt.s32.totalorder %v2790, 81
    %v2792 = vsel %vm2791, %v2787, %v8
    %v2793 = vlaneseq
    %v2794 = vand.u32 %v2793, 127
    %v2795 = vadd.s32 %v2794, 1792
    %vm2796 = vcmp.lt.s32.totalorder %v2795, 2376
    %v2797 = vsel %vm2796, %v2792, %v8
    %s2798 = scalar_lea.vmem [#allocation7], 1480
    %2800 = vst [vmem:[%s2798] sm:$0xff] %v2797
    %s2801 = scalar_lea.vmem %s1, 1488
    %v2802 = vld [vmem:[%s2801] sm:$0xff]
    %v2803 = vlaneseq
    %v2804 = vshrl.u32 %v2803, 7
    %v2805 = vadd.s32 %v2804, 72
    %vm2806 = vcmp.lt.s32.totalorder %v2805, 81
    %v2807 = vsel %vm2806, %v2802, %v8
    %v2808 = vlaneseq
    %v2809 = vand.u32 %v2808, 127
    %v2810 = vadd.s32 %v2809, 1920
    %vm2811 = vcmp.lt.s32.totalorder %v2810, 2376
    %v2812 = vsel %vm2811, %v2807, %v8
    %s2813 = scalar_lea.vmem [#allocation7], 1488
    %2815 = vst [vmem:[%s2813] sm:$0xff] %v2812
    %s2816 = scalar_lea.vmem %s1, 1496
    %v2817 = vld [vmem:[%s2816] sm:$0xff]
    %v2818 = vlaneseq
    %v2819 = vshrl.u32 %v2818, 7
    %v2820 = vadd.s32 %v2819, 72
    %vm2821 = vcmp.lt.s32.totalorder %v2820, 81
    %v2822 = vsel %vm2821, %v2817, %v8
    %v2823 = vlaneseq
    %v2824 = vand.u32 %v2823, 127
    %v2825 = vadd.s32 %v2824, 2048
    %vm2826 = vcmp.lt.s32.totalorder %v2825, 2376
    %v2827 = vsel %vm2826, %v2822, %v8
    %s2828 = scalar_lea.vmem [#allocation7], 1496
    %2830 = vst [vmem:[%s2828] sm:$0xff] %v2827
    %s2831 = scalar_lea.vmem %s1, 1504
    %v2832 = vld [vmem:[%s2831] sm:$0xff]
    %v2833 = vlaneseq
    %v2834 = vshrl.u32 %v2833, 7
    %v2835 = vadd.s32 %v2834, 72
    %vm2836 = vcmp.lt.s32.totalorder %v2835, 81
    %v2837 = vsel %vm2836, %v2832, %v8
    %v2838 = vlaneseq
    %v2839 = vand.u32 %v2838, 127
    %v2840 = vadd.s32 %v2839, 2176
    %vm2841 = vcmp.lt.s32.totalorder %v2840, 2376
    %v2842 = vsel %vm2841, %v2837, %v8
    %s2843 = scalar_lea.vmem [#allocation7], 1504
    %2845 = vst [vmem:[%s2843] sm:$0xff] %v2842
    %s2846 = scalar_lea.vmem %s1, 1512
    %v2847 = vld [vmem:[%s2846] sm:$0xff]
    %v2848 = vlaneseq
    %v2849 = vshrl.u32 %v2848, 7
    %v2850 = vadd.s32 %v2849, 72
    %vm2851 = vcmp.lt.s32.totalorder %v2850, 81
    %v2852 = vsel %vm2851, %v2847, %v8
    %v2853 = vlaneseq
    %v2854 = vand.u32 %v2853, 127
    %v2855 = vadd.s32 %v2854, 2304
    %vm2856 = vcmp.lt.s32.totalorder %v2855, 2376
    %v2857 = vsel %vm2856, %v2852, %v8
    %s2858 = scalar_lea.vmem [#allocation7], 1512
    %2860 = vst [vmem:[%s2858] sm:$0xff] %v2857
    %s2861 = scalar_lea.vmem %s1, 1520
    %v2862 = vld [vmem:[%s2861] sm:$0xff]
    %v2863 = vlaneseq
    %v2864 = vshrl.u32 %v2863, 7
    %v2865 = vadd.s32 %v2864, 80
    %vm2866 = vcmp.lt.s32.totalorder %v2865, 81
    %v2867 = vsel %vm2866, %v2862, %v8
    %v2868 = vlaneseq
    %v2869 = vand.u32 %v2868, 127
    %vm2871 = vcmp.lt.s32.totalorder %v2869, 2376
    %v2872 = vsel %vm2871, %v2867, %v8
    %s2873 = scalar_lea.vmem [#allocation7], 1520
    %2875 = vst [vmem:[%s2873] sm:$0xff] %v2872
    %s2876 = scalar_lea.vmem %s1, 1528
    %v2877 = vld [vmem:[%s2876] sm:$0xff]
    %v2878 = vlaneseq
    %v2879 = vshrl.u32 %v2878, 7
    %v2880 = vadd.s32 %v2879, 80
    %vm2881 = vcmp.lt.s32.totalorder %v2880, 81
    %v2882 = vsel %vm2881, %v2877, %v8
    %v2883 = vlaneseq
    %v2884 = vand.u32 %v2883, 127
    %v2885 = vadd.s32 %v2884, 128
    %vm2886 = vcmp.lt.s32.totalorder %v2885, 2376
    %v2887 = vsel %vm2886, %v2882, %v8
    %s2888 = scalar_lea.vmem [#allocation7], 1528
    %2890 = vst [vmem:[%s2888] sm:$0xff] %v2887
    %s2891 = scalar_lea.vmem %s1, 1536
    %v2892 = vld [vmem:[%s2891] sm:$0xff]
    %v2893 = vlaneseq
    %v2894 = vshrl.u32 %v2893, 7
    %v2895 = vadd.s32 %v2894, 80
    %vm2896 = vcmp.lt.s32.totalorder %v2895, 81
    %v2897 = vsel %vm2896, %v2892, %v8
    %v2898 = vlaneseq
    %v2899 = vand.u32 %v2898, 127
    %v2900 = vadd.s32 %v2899, 256
    %vm2901 = vcmp.lt.s32.totalorder %v2900, 2376
    %v2902 = vsel %vm2901, %v2897, %v8
    %s2903 = scalar_lea.vmem [#allocation7], 1536
    %2905 = vst [vmem:[%s2903] sm:$0xff] %v2902
    %s2906 = scalar_lea.vmem %s1, 1544
    %v2907 = vld [vmem:[%s2906] sm:$0xff]
    %v2908 = vlaneseq
    %v2909 = vshrl.u32 %v2908, 7
    %v2910 = vadd.s32 %v2909, 80
    %vm2911 = vcmp.lt.s32.totalorder %v2910, 81
    %v2912 = vsel %vm2911, %v2907, %v8
    %v2913 = vlaneseq
    %v2914 = vand.u32 %v2913, 127
    %v2915 = vadd.s32 %v2914, 384
    %vm2916 = vcmp.lt.s32.totalorder %v2915, 2376
    %v2917 = vsel %vm2916, %v2912, %v8
    %s2918 = scalar_lea.vmem [#allocation7], 1544
    %2920 = vst [vmem:[%s2918] sm:$0xff] %v2917
    %s2921 = scalar_lea.vmem %s1, 1552
    %v2922 = vld [vmem:[%s2921] sm:$0xff]
    %v2923 = vlaneseq
    %v2924 = vshrl.u32 %v2923, 7
    %v2925 = vadd.s32 %v2924, 80
    %vm2926 = vcmp.lt.s32.totalorder %v2925, 81
    %v2927 = vsel %vm2926, %v2922, %v8
    %v2928 = vlaneseq
    %v2929 = vand.u32 %v2928, 127
    %v2930 = vadd.s32 %v2929, 512
    %vm2931 = vcmp.lt.s32.totalorder %v2930, 2376
    %v2932 = vsel %vm2931, %v2927, %v8
    %s2933 = scalar_lea.vmem [#allocation7], 1552
    %2935 = vst [vmem:[%s2933] sm:$0xff] %v2932
    %s2936 = scalar_lea.vmem %s1, 1560
    %v2937 = vld [vmem:[%s2936] sm:$0xff]
    %v2938 = vlaneseq
    %v2939 = vshrl.u32 %v2938, 7
    %v2940 = vadd.s32 %v2939, 80
    %vm2941 = vcmp.lt.s32.totalorder %v2940, 81
    %v2942 = vsel %vm2941, %v2937, %v8
    %v2943 = vlaneseq
    %v2944 = vand.u32 %v2943, 127
    %v2945 = vadd.s32 %v2944, 640
    %vm2946 = vcmp.lt.s32.totalorder %v2945, 2376
    %v2947 = vsel %vm2946, %v2942, %v8
    %s2948 = scalar_lea.vmem [#allocation7], 1560
    %2950 = vst [vmem:[%s2948] sm:$0xff] %v2947
    %s2951 = scalar_lea.vmem %s1, 1568
    %v2952 = vld [vmem:[%s2951] sm:$0xff]
    %v2953 = vlaneseq
    %v2954 = vshrl.u32 %v2953, 7
    %v2955 = vadd.s32 %v2954, 80
    %vm2956 = vcmp.lt.s32.totalorder %v2955, 81
    %v2957 = vsel %vm2956, %v2952, %v8
    %v2958 = vlaneseq
    %v2959 = vand.u32 %v2958, 127
    %v2960 = vadd.s32 %v2959, 768
    %vm2961 = vcmp.lt.s32.totalorder %v2960, 2376
    %v2962 = vsel %vm2961, %v2957, %v8
    %s2963 = scalar_lea.vmem [#allocation7], 1568
    %2965 = vst [vmem:[%s2963] sm:$0xff] %v2962
    %s2966 = scalar_lea.vmem %s1, 1576
    %v2967 = vld [vmem:[%s2966] sm:$0xff]
    %v2968 = vlaneseq
    %v2969 = vshrl.u32 %v2968, 7
    %v2970 = vadd.s32 %v2969, 80
    %vm2971 = vcmp.lt.s32.totalorder %v2970, 81
    %v2972 = vsel %vm2971, %v2967, %v8
    %v2973 = vlaneseq
    %v2974 = vand.u32 %v2973, 127
    %v2975 = vadd.s32 %v2974, 896
    %vm2976 = vcmp.lt.s32.totalorder %v2975, 2376
    %v2977 = vsel %vm2976, %v2972, %v8
    %s2978 = scalar_lea.vmem [#allocation7], 1576
    %2980 = vst [vmem:[%s2978] sm:$0xff] %v2977
    %s2981 = scalar_lea.vmem %s1, 1584
    %v2982 = vld [vmem:[%s2981] sm:$0xff]
    %v2983 = vlaneseq
    %v2984 = vshrl.u32 %v2983, 7
    %v2985 = vadd.s32 %v2984, 80
    %vm2986 = vcmp.lt.s32.totalorder %v2985, 81
    %v2987 = vsel %vm2986, %v2982, %v8
    %v2988 = vlaneseq
    %v2989 = vand.u32 %v2988, 127
    %v2990 = vadd.s32 %v2989, 1024
    %vm2991 = vcmp.lt.s32.totalorder %v2990, 2376
    %v2992 = vsel %vm2991, %v2987, %v8
    %s2993 = scalar_lea.vmem [#allocation7], 1584
    %2995 = vst [vmem:[%s2993] sm:$0xff] %v2992
    %s2996 = scalar_lea.vmem %s1, 1592
    %v2997 = vld [vmem:[%s2996] sm:$0xff]
    %v2998 = vlaneseq
    %v2999 = vshrl.u32 %v2998, 7
    %v3000 = vadd.s32 %v2999, 80
    %vm3001 = vcmp.lt.s32.totalorder %v3000, 81
    %v3002 = vsel %vm3001, %v2997, %v8
    %v3003 = vlaneseq
    %v3004 = vand.u32 %v3003, 127
    %v3005 = vadd.s32 %v3004, 1152
    %vm3006 = vcmp.lt.s32.totalorder %v3005, 2376
    %v3007 = vsel %vm3006, %v3002, %v8
    %s3008 = scalar_lea.vmem [#allocation7], 1592
    %3010 = vst [vmem:[%s3008] sm:$0xff] %v3007
    %s3011 = scalar_lea.vmem %s1, 1600
    %v3012 = vld [vmem:[%s3011] sm:$0xff]
    %v3013 = vlaneseq
    %v3014 = vshrl.u32 %v3013, 7
    %v3015 = vadd.s32 %v3014, 80
    %vm3016 = vcmp.lt.s32.totalorder %v3015, 81
    %v3017 = vsel %vm3016, %v3012, %v8
    %v3018 = vlaneseq
    %v3019 = vand.u32 %v3018, 127
    %v3020 = vadd.s32 %v3019, 1280
    %vm3021 = vcmp.lt.s32.totalorder %v3020, 2376
    %v3022 = vsel %vm3021, %v3017, %v8
    %s3023 = scalar_lea.vmem [#allocation7], 1600
    %3025 = vst [vmem:[%s3023] sm:$0xff] %v3022
    %s3026 = scalar_lea.vmem %s1, 1608
    %v3027 = vld [vmem:[%s3026] sm:$0xff]
    %v3028 = vlaneseq
    %v3029 = vshrl.u32 %v3028, 7
    %v3030 = vadd.s32 %v3029, 80
    %vm3031 = vcmp.lt.s32.totalorder %v3030, 81
    %v3032 = vsel %vm3031, %v3027, %v8
    %v3033 = vlaneseq
    %v3034 = vand.u32 %v3033, 127
    %v3035 = vadd.s32 %v3034, 1408
    %vm3036 = vcmp.lt.s32.totalorder %v3035, 2376
    %v3037 = vsel %vm3036, %v3032, %v8
    %s3038 = scalar_lea.vmem [#allocation7], 1608
    %3040 = vst [vmem:[%s3038] sm:$0xff] %v3037
    %s3041 = scalar_lea.vmem %s1, 1616
    %v3042 = vld [vmem:[%s3041] sm:$0xff]
    %v3043 = vlaneseq
    %v3044 = vshrl.u32 %v3043, 7
    %v3045 = vadd.s32 %v3044, 80
    %vm3046 = vcmp.lt.s32.totalorder %v3045, 81
    %v3047 = vsel %vm3046, %v3042, %v8
    %v3048 = vlaneseq
    %v3049 = vand.u32 %v3048, 127
    %v3050 = vadd.s32 %v3049, 1536
    %vm3051 = vcmp.lt.s32.totalorder %v3050, 2376
    %v3052 = vsel %vm3051, %v3047, %v8
    %s3053 = scalar_lea.vmem [#allocation7], 1616
    %3055 = vst [vmem:[%s3053] sm:$0xff] %v3052
    %s3056 = scalar_lea.vmem %s1, 1624
    %v3057 = vld [vmem:[%s3056] sm:$0xff]
    %v3058 = vlaneseq
    %v3059 = vshrl.u32 %v3058, 7
    %v3060 = vadd.s32 %v3059, 80
    %vm3061 = vcmp.lt.s32.totalorder %v3060, 81
    %v3062 = vsel %vm3061, %v3057, %v8
    %v3063 = vlaneseq
    %v3064 = vand.u32 %v3063, 127
    %v3065 = vadd.s32 %v3064, 1664
    %vm3066 = vcmp.lt.s32.totalorder %v3065, 2376
    %v3067 = vsel %vm3066, %v3062, %v8
    %s3068 = scalar_lea.vmem [#allocation7], 1624
    %3070 = vst [vmem:[%s3068] sm:$0xff] %v3067
    %s3071 = scalar_lea.vmem %s1, 1632
    %v3072 = vld [vmem:[%s3071] sm:$0xff]
    %v3073 = vlaneseq
    %v3074 = vshrl.u32 %v3073, 7
    %v3075 = vadd.s32 %v3074, 80
    %vm3076 = vcmp.lt.s32.totalorder %v3075, 81
    %v3077 = vsel %vm3076, %v3072, %v8
    %v3078 = vlaneseq
    %v3079 = vand.u32 %v3078, 127
    %v3080 = vadd.s32 %v3079, 1792
    %vm3081 = vcmp.lt.s32.totalorder %v3080, 2376
    %v3082 = vsel %vm3081, %v3077, %v8
    %s3083 = scalar_lea.vmem [#allocation7], 1632
    %3085 = vst [vmem:[%s3083] sm:$0xff] %v3082
    %s3086 = scalar_lea.vmem %s1, 1640
    %v3087 = vld [vmem:[%s3086] sm:$0xff]
    %v3088 = vlaneseq
    %v3089 = vshrl.u32 %v3088, 7
    %v3090 = vadd.s32 %v3089, 80
    %vm3091 = vcmp.lt.s32.totalorder %v3090, 81
    %v3092 = vsel %vm3091, %v3087, %v8
    %v3093 = vlaneseq
    %v3094 = vand.u32 %v3093, 127
    %v3095 = vadd.s32 %v3094, 1920
    %vm3096 = vcmp.lt.s32.totalorder %v3095, 2376
    %v3097 = vsel %vm3096, %v3092, %v8
    %s3098 = scalar_lea.vmem [#allocation7], 1640
    %3100 = vst [vmem:[%s3098] sm:$0xff] %v3097
    %s3101 = scalar_lea.vmem %s1, 1648
    %v3102 = vld [vmem:[%s3101] sm:$0xff]
    %v3103 = vlaneseq
    %v3104 = vshrl.u32 %v3103, 7
    %v3105 = vadd.s32 %v3104, 80
    %vm3106 = vcmp.lt.s32.totalorder %v3105, 81
    %v3107 = vsel %vm3106, %v3102, %v8
    %v3108 = vlaneseq
    %v3109 = vand.u32 %v3108, 127
    %v3110 = vadd.s32 %v3109, 2048
    %vm3111 = vcmp.lt.s32.totalorder %v3110, 2376
    %v3112 = vsel %vm3111, %v3107, %v8
    %s3113 = scalar_lea.vmem [#allocation7], 1648
    %3115 = vst [vmem:[%s3113] sm:$0xff] %v3112
    %s3116 = scalar_lea.vmem %s1, 1656
    %v3117 = vld [vmem:[%s3116] sm:$0xff]
    %v3118 = vlaneseq
    %v3119 = vshrl.u32 %v3118, 7
    %v3120 = vadd.s32 %v3119, 80
    %vm3121 = vcmp.lt.s32.totalorder %v3120, 81
    %v3122 = vsel %vm3121, %v3117, %v8
    %v3123 = vlaneseq
    %v3124 = vand.u32 %v3123, 127
    %v3125 = vadd.s32 %v3124, 2176
    %vm3126 = vcmp.lt.s32.totalorder %v3125, 2376
    %v3127 = vsel %vm3126, %v3122, %v8
    %s3128 = scalar_lea.vmem [#allocation7], 1656
    %3130 = vst [vmem:[%s3128] sm:$0xff] %v3127
    %s3131 = scalar_lea.vmem %s1, 1664
    %v3132 = vld [vmem:[%s3131] sm:$0xff]
    %v3133 = vlaneseq
    %v3134 = vshrl.u32 %v3133, 7
    %v3135 = vadd.s32 %v3134, 80
    %vm3136 = vcmp.lt.s32.totalorder %v3135, 81
    %v3137 = vsel %vm3136, %v3132, %v8
    %v3138 = vlaneseq
    %v3139 = vand.u32 %v3138, 127
    %v3140 = vadd.s32 %v3139, 2304
    %vm3141 = vcmp.lt.s32.totalorder %v3140, 2376
    %v3142 = vsel %vm3141, %v3137, %v8
    %s3143 = scalar_lea.vmem [#allocation7], 1664
    %3145 = vst [vmem:[%s3143] sm:$0xff] %v3142
    %v3146 = vld [vmem:[%s0] sm:$0x7]
    %v3147 = vld [vmem:[#allocation7] sm:$0xff]
    %v3148 = vld [vmem:[#allocation7 + $0x8] sm:$0xff]
    %v3149 = vld [vmem:[#allocation7 + $0x10] sm:$0xff]
    %v3150 = vld [vmem:[#allocation7 + $0x18] sm:$0xff]
    %v3151 = vld [vmem:[#allocation7 + $0x20] sm:$0xff]
    %v3152 = vld [vmem:[#allocation7 + $0x28] sm:$0xff]
    %v3153 = vld [vmem:[#allocation7 + $0x30] sm:$0xff]
    %v3154 = vld [vmem:[#allocation7 + $0x38] sm:$0xff]
    %v3155 = vld [vmem:[#allocation7 + $0x40] sm:$0xff]
    %v3156 = vld [vmem:[#allocation7 + $0x48] sm:$0xff]
    %v3157 = vld [vmem:[#allocation7 + $0x50] sm:$0xff]
    %v3158 = vld [vmem:[#allocation7 + $0x58] sm:$0xff]
    %v3159 = vld [vmem:[#allocation7 + $0x60] sm:$0xff]
    %v3160 = vld [vmem:[#allocation7 + $0x68] sm:$0xff]
    %v3161 = vld [vmem:[#allocation7 + $0x70] sm:$0xff]
    %v3162 = vld [vmem:[#allocation7 + $0x78] sm:$0xff]
    %v3163 = vld [vmem:[#allocation7 + $0x80] sm:$0xff]
    %v3164 = vld [vmem:[#allocation7 + $0x88] sm:$0xff]
    %v3165 = vld [vmem:[#allocation7 + $0x90] sm:$0xff]
    %v3166 = vld [vmem:[#allocation7 + $0x98] sm:$0xff]
    %v3167 = vld [vmem:[#allocation7 + $0xa0] sm:$0xff]
    %v3168 = vld [vmem:[#allocation7 + $0xa8] sm:$0xff]
    %v3169 = vld [vmem:[#allocation7 + $0xb0] sm:$0xff]
    %v3170 = vld [vmem:[#allocation7 + $0xb8] sm:$0xff]
    %v3171 = vld [vmem:[#allocation7 + $0xc0] sm:$0xff]
    %v3172 = vld [vmem:[#allocation7 + $0xc8] sm:$0xff]
    %v3173 = vld [vmem:[#allocation7 + $0xd0] sm:$0xff]
    %v3174 = vld [vmem:[#allocation7 + $0xd8] sm:$0xff]
    %v3175 = vld [vmem:[#allocation7 + $0xe0] sm:$0xff]
    %v3176 = vld [vmem:[#allocation7 + $0xe8] sm:$0xff]
    %v3177 = vld [vmem:[#allocation7 + $0xf0] sm:$0xff]
    %v3178 = vld [vmem:[#allocation7 + $0xf8] sm:$0xff]
    %v3179 = vld [vmem:[#allocation7 + $0x100] sm:$0xff]
    %v3180 = vld [vmem:[#allocation7 + $0x108] sm:$0xff]
    %v3181 = vld [vmem:[#allocation7 + $0x110] sm:$0xff]
    %v3182 = vld [vmem:[#allocation7 + $0x118] sm:$0xff]
    %v3183 = vld [vmem:[#allocation7 + $0x120] sm:$0xff]
    %v3184 = vld [vmem:[#allocation7 + $0x128] sm:$0xff]
    %v3185 = vld [vmem:[#allocation7 + $0x130] sm:$0xff]
    %v3186 = vld [vmem:[#allocation7 + $0x138] sm:$0xff]
    %v3187 = vld [vmem:[#allocation7 + $0x140] sm:$0xff]
    %v3188 = vld [vmem:[#allocation7 + $0x148] sm:$0xff]
    %v3189 = vld [vmem:[#allocation7 + $0x150] sm:$0xff]
    %v3190 = vld [vmem:[#allocation7 + $0x158] sm:$0xff]
    %v3191 = vld [vmem:[#allocation7 + $0x160] sm:$0xff]
    %v3192 = vld [vmem:[#allocation7 + $0x168] sm:$0xff]
    %v3193 = vld [vmem:[#allocation7 + $0x170] sm:$0xff]
    %v3194 = vld [vmem:[#allocation7 + $0x178] sm:$0xff]
    %v3195 = vld [vmem:[#allocation7 + $0x180] sm:$0xff]
    %v3196 = vld [vmem:[#allocation7 + $0x188] sm:$0xff]
    %v3197 = vld [vmem:[#allocation7 + $0x190] sm:$0xff]
    %v3198 = vld [vmem:[#allocation7 + $0x198] sm:$0xff]
    %v3199 = vld [vmem:[#allocation7 + $0x1a0] sm:$0xff]
    %v3200 = vld [vmem:[#allocation7 + $0x1a8] sm:$0xff]
    %v3201 = vld [vmem:[#allocation7 + $0x1b0] sm:$0xff]
    %v3202 = vld [vmem:[#allocation7 + $0x1b8] sm:$0xff]
    %v3203 = vld [vmem:[#allocation7 + $0x1c0] sm:$0xff]
    %v3204 = vld [vmem:[#allocation7 + $0x1c8] sm:$0xff]
    %v3205 = vld [vmem:[#allocation7 + $0x1d0] sm:$0xff]
    %v3206 = vld [vmem:[#allocation7 + $0x1d8] sm:$0xff]
    %v3207 = vld [vmem:[#allocation7 + $0x1e0] sm:$0xff]
    %v3208 = vld [vmem:[#allocation7 + $0x1e8] sm:$0xff]
    %v3209 = vld [vmem:[#allocation7 + $0x1f0] sm:$0xff]
    %v3210 = vld [vmem:[#allocation7 + $0x1f8] sm:$0xff]
    %v3211 = vld [vmem:[#allocation7 + $0x200] sm:$0xff]
    %v3212 = vld [vmem:[#allocation7 + $0x208] sm:$0xff]
    %v3213 = vld [vmem:[#allocation7 + $0x210] sm:$0xff]
    %v3214 = vld [vmem:[#allocation7 + $0x218] sm:$0xff]
    %v3215 = vld [vmem:[#allocation7 + $0x220] sm:$0xff]
    %v3216 = vld [vmem:[#allocation7 + $0x228] sm:$0xff]
    %v3217 = vld [vmem:[#allocation7 + $0x230] sm:$0xff]
    %v3218 = vld [vmem:[#allocation7 + $0x238] sm:$0xff]
    %v3219 = vld [vmem:[#allocation7 + $0x240] sm:$0xff]
    %v3220 = vld [vmem:[#allocation7 + $0x248] sm:$0xff]
    %v3221 = vld [vmem:[#allocation7 + $0x250] sm:$0xff]
    %v3222 = vld [vmem:[#allocation7 + $0x258] sm:$0xff]
    %v3223 = vld [vmem:[#allocation7 + $0x260] sm:$0xff]
    %v3224 = vld [vmem:[#allocation7 + $0x268] sm:$0xff]
    %v3225 = vld [vmem:[#allocation7 + $0x270] sm:$0xff]
    %v3226 = vld [vmem:[#allocation7 + $0x278] sm:$0xff]
    %v3227 = vld [vmem:[#allocation7 + $0x280] sm:$0xff]
    %v3228 = vld [vmem:[#allocation7 + $0x288] sm:$0xff]
    %v3229 = vld [vmem:[#allocation7 + $0x290] sm:$0xff]
    %v3230 = vld [vmem:[#allocation7 + $0x298] sm:$0xff]
    %v3231 = vld [vmem:[#allocation7 + $0x2a0] sm:$0xff]
    %v3232 = vld [vmem:[#allocation7 + $0x2a8] sm:$0xff]
    %v3233 = vld [vmem:[#allocation7 + $0x2b0] sm:$0xff]
    %v3234 = vld [vmem:[#allocation7 + $0x2b8] sm:$0xff]
    %v3235 = vld [vmem:[#allocation7 + $0x2c0] sm:$0xff]
    %v3236 = vld [vmem:[#allocation7 + $0x2c8] sm:$0xff]
    %v3237 = vld [vmem:[#allocation7 + $0x2d0] sm:$0xff]
    %v3238 = vld [vmem:[#allocation7 + $0x2d8] sm:$0xff]
    %v3239 = vld [vmem:[#allocation7 + $0x2e0] sm:$0xff]
    %v3240 = vld [vmem:[#allocation7 + $0x2e8] sm:$0xff]
    %v3241 = vld [vmem:[#allocation7 + $0x2f0] sm:$0xff]
    %v3242 = vld [vmem:[#allocation7 + $0x2f8] sm:$0xff]
    %v3243 = vld [vmem:[#allocation7 + $0x300] sm:$0xff]
    %v3244 = vld [vmem:[#allocation7 + $0x308] sm:$0xff]
    %v3245 = vld [vmem:[#allocation7 + $0x310] sm:$0xff]
    %v3246 = vld [vmem:[#allocation7 + $0x318] sm:$0xff]
    %v3247 = vld [vmem:[#allocation7 + $0x320] sm:$0xff]
    %v3248 = vld [vmem:[#allocation7 + $0x328] sm:$0xff]
    %v3249 = vld [vmem:[#allocation7 + $0x330] sm:$0xff]
    %v3250 = vld [vmem:[#allocation7 + $0x338] sm:$0xff]
    %v3251 = vld [vmem:[#allocation7 + $0x340] sm:$0xff]
    %v3252 = vld [vmem:[#allocation7 + $0x348] sm:$0xff]
    %v3253 = vld [vmem:[#allocation7 + $0x350] sm:$0xff]
    %v3254 = vld [vmem:[#allocation7 + $0x358] sm:$0xff]
    %v3255 = vld [vmem:[#allocation7 + $0x360] sm:$0xff]
    %v3256 = vld [vmem:[#allocation7 + $0x368] sm:$0xff]
    %v3257 = vld [vmem:[#allocation7 + $0x370] sm:$0xff]
    %v3258 = vld [vmem:[#allocation7 + $0x378] sm:$0xff]
    %v3259 = vld [vmem:[#allocation7 + $0x380] sm:$0xff]
    %v3260 = vld [vmem:[#allocation7 + $0x388] sm:$0xff]
    %v3261 = vld [vmem:[#allocation7 + $0x390] sm:$0xff]
    %v3262 = vld [vmem:[#allocation7 + $0x398] sm:$0xff]
    %v3263 = vld [vmem:[#allocation7 + $0x3a0] sm:$0xff]
    %v3264 = vld [vmem:[#allocation7 + $0x3a8] sm:$0xff]
    %v3265 = vld [vmem:[#allocation7 + $0x3b0] sm:$0xff]
    %v3266 = vld [vmem:[#allocation7 + $0x3b8] sm:$0xff]
    %v3267 = vld [vmem:[#allocation7 + $0x3c0] sm:$0xff]
    %v3268 = vld [vmem:[#allocation7 + $0x3c8] sm:$0xff]
    %v3269 = vld [vmem:[#allocation7 + $0x3d0] sm:$0xff]
    %v3270 = vld [vmem:[#allocation7 + $0x3d8] sm:$0xff]
    %v3271 = vld [vmem:[#allocation7 + $0x3e0] sm:$0xff]
    %v3272 = vld [vmem:[#allocation7 + $0x3e8] sm:$0xff]
    %v3273 = vld [vmem:[#allocation7 + $0x3f0] sm:$0xff]
    %v3274 = vld [vmem:[#allocation7 + $0x3f8] sm:$0xff]
    %v3275 = vld [vmem:[#allocation7 + $0x400] sm:$0xff]
    %v3276 = vld [vmem:[#allocation7 + $0x408] sm:$0xff]
    %v3277 = vld [vmem:[#allocation7 + $0x410] sm:$0xff]
    %v3278 = vld [vmem:[#allocation7 + $0x418] sm:$0xff]
    %v3279 = vld [vmem:[#allocation7 + $0x420] sm:$0xff]
    %v3280 = vld [vmem:[#allocation7 + $0x428] sm:$0xff]
    %v3281 = vld [vmem:[#allocation7 + $0x430] sm:$0xff]
    %v3282 = vld [vmem:[#allocation7 + $0x438] sm:$0xff]
    %v3283 = vld [vmem:[#allocation7 + $0x440] sm:$0xff]
    %v3284 = vld [vmem:[#allocation7 + $0x448] sm:$0xff]
    %v3285 = vld [vmem:[#allocation7 + $0x450] sm:$0xff]
    %v3286 = vld [vmem:[#allocation7 + $0x458] sm:$0xff]
    %v3287 = vld [vmem:[#allocation7 + $0x460] sm:$0xff]
    %v3288 = vld [vmem:[#allocation7 + $0x468] sm:$0xff]
    %v3289 = vld [vmem:[#allocation7 + $0x470] sm:$0xff]
    %v3290 = vld [vmem:[#allocation7 + $0x478] sm:$0xff]
    %v3291 = vld [vmem:[#allocation7 + $0x480] sm:$0xff]
    %v3292 = vld [vmem:[#allocation7 + $0x488] sm:$0xff]
    %v3293 = vld [vmem:[#allocation7 + $0x490] sm:$0xff]
    %v3294 = vld [vmem:[#allocation7 + $0x498] sm:$0xff]
    %v3295 = vld [vmem:[#allocation7 + $0x4a0] sm:$0xff]
    %v3296 = vld [vmem:[#allocation7 + $0x4a8] sm:$0xff]
    %v3297 = vld [vmem:[#allocation7 + $0x4b0] sm:$0xff]
    %v3298 = vld [vmem:[#allocation7 + $0x4b8] sm:$0xff]
    %v3299 = vld [vmem:[#allocation7 + $0x4c0] sm:$0xff]
    %v3300 = vld [vmem:[#allocation7 + $0x4c8] sm:$0xff]
    %v3301 = vld [vmem:[#allocation7 + $0x4d0] sm:$0xff]
    %v3302 = vld [vmem:[#allocation7 + $0x4d8] sm:$0xff]
    %v3303 = vld [vmem:[#allocation7 + $0x4e0] sm:$0xff]
    %v3304 = vld [vmem:[#allocation7 + $0x4e8] sm:$0xff]
    %v3305 = vld [vmem:[#allocation7 + $0x4f0] sm:$0xff]
    %v3306 = vld [vmem:[#allocation7 + $0x4f8] sm:$0xff]
    %v3307 = vld [vmem:[#allocation7 + $0x500] sm:$0xff]
    %v3308 = vld [vmem:[#allocation7 + $0x508] sm:$0xff]
    %v3309 = vld [vmem:[#allocation7 + $0x510] sm:$0xff]
    %v3310 = vld [vmem:[#allocation7 + $0x518] sm:$0xff]
    %v3311 = vld [vmem:[#allocation7 + $0x520] sm:$0xff]
    %v3312 = vld [vmem:[#allocation7 + $0x528] sm:$0xff]
    %v3313 = vld [vmem:[#allocation7 + $0x530] sm:$0xff]
    %v3314 = vld [vmem:[#allocation7 + $0x538] sm:$0xff]
    %v3315 = vld [vmem:[#allocation7 + $0x540] sm:$0xff]
    %v3316 = vld [vmem:[#allocation7 + $0x548] sm:$0xff]
    %v3317 = vld [vmem:[#allocation7 + $0x550] sm:$0xff]
    %v3318 = vld [vmem:[#allocation7 + $0x558] sm:$0xff]
    %v3319 = vld [vmem:[#allocation7 + $0x560] sm:$0xff]
    %v3320 = vld [vmem:[#allocation7 + $0x568] sm:$0xff]
    %v3321 = vld [vmem:[#allocation7 + $0x570] sm:$0xff]
    %v3322 = vld [vmem:[#allocation7 + $0x578] sm:$0xff]
    %v3323 = vld [vmem:[#allocation7 + $0x580] sm:$0xff]
    %v3324 = vld [vmem:[#allocation7 + $0x588] sm:$0xff]
    %v3325 = vld [vmem:[#allocation7 + $0x590] sm:$0xff]
    %v3326 = vld [vmem:[#allocation7 + $0x598] sm:$0xff]
    %v3327 = vld [vmem:[#allocation7 + $0x5a0] sm:$0xff]
    %v3328 = vld [vmem:[#allocation7 + $0x5a8] sm:$0xff]
    %v3329 = vld [vmem:[#allocation7 + $0x5b0] sm:$0xff]
    %v3330 = vld [vmem:[#allocation7 + $0x5b8] sm:$0xff]
    %v3331 = vld [vmem:[#allocation7 + $0x5c0] sm:$0xff]
    %v3332 = vld [vmem:[#allocation7 + $0x5c8] sm:$0xff]
    %v3333 = vld [vmem:[#allocation7 + $0x5d0] sm:$0xff]
    %v3334 = vld [vmem:[#allocation7 + $0x5d8] sm:$0xff]
    %v3335 = vld [vmem:[#allocation7 + $0x5e0] sm:$0xff]
    %v3336 = vld [vmem:[#allocation7 + $0x5e8] sm:$0xff]
    %v3337 = vld [vmem:[#allocation7 + $0x5f0] sm:$0xff]
    %v3338 = vld [vmem:[#allocation7 + $0x5f8] sm:$0xff]
    %v3339 = vld [vmem:[#allocation7 + $0x600] sm:$0xff]
    %v3340 = vld [vmem:[#allocation7 + $0x608] sm:$0xff]
    %v3341 = vld [vmem:[#allocation7 + $0x610] sm:$0xff]
    %v3342 = vld [vmem:[#allocation7 + $0x618] sm:$0xff]
    %v3343 = vld [vmem:[#allocation7 + $0x620] sm:$0xff]
    %v3344 = vld [vmem:[#allocation7 + $0x628] sm:$0xff]
    %v3345 = vld [vmem:[#allocation7 + $0x630] sm:$0xff]
    %v3346 = vld [vmem:[#allocation7 + $0x638] sm:$0xff]
    %v3347 = vld [vmem:[#allocation7 + $0x640] sm:$0xff]
    %v3348 = vld [vmem:[#allocation7 + $0x648] sm:$0xff]
    %v3349 = vld [vmem:[#allocation7 + $0x650] sm:$0xff]
    %v3350 = vld [vmem:[#allocation7 + $0x658] sm:$0xff]
    %v3351 = vld [vmem:[#allocation7 + $0x660] sm:$0xff]
    %v3352 = vld [vmem:[#allocation7 + $0x668] sm:$0xff]
    %v3353 = vld [vmem:[#allocation7 + $0x670] sm:$0xff]
    %v3354 = vld [vmem:[#allocation7 + $0x678] sm:$0xff]
    %v3355 = vld [vmem:[#allocation7 + $0x680] sm:$0xff]
    %vm3356 = vcmask 719872
    %v3358 = vsel %vm3356, %v3146, 0
    %3360 = vmatprep.subr.mxu0 %v3148
    %3361 = vmatpush1.msra.mxu0 %v3147
    %3362 = vmatprep.subr.mxu0 %v3167
    %3363 = vmatpush1.msra.mxu0 %v3166
    %3364 = vmatprep.subr.mxu0 %v3186
    %3365 = vmatpush1.msra.mxu0 %v3185
    %3366 = vmatprep.subr.mxu0 %v3205
    %3367 = vmatpush1.msra.mxu0 %v3204
    %3368 = vmatprep.subr.mxu0 %v3224
    %3369 = vmatpush1.msra.mxu0 %v3223
    %3370 = vmatprep.subr.mxu0 %v3243
    %3371 = vmatpush1.msra.mxu0 %v3242
    %3372 = vmatprep.subr.mxu0 %v3262
    %3373 = vmatpush1.msra.mxu0 %v3261
    %3374 = vmatprep.subr.mxu0 %v3281
    %3375 = vmatpush1.msra.mxu0 %v3280
    %3376 = vmatprep.subr.mxu0 %v3300
    %3377 = vmatpush1.msra.mxu0 %v3299
    %3378 = vmatprep.subr.mxu0 %v3319
    %3379 = vmatpush1.msra.mxu0 %v3318
    %3380 = vmatprep.subr.mxu0 %v3338
    %3381 = vmatpush1.msra.mxu0 %v3337
    %3382 = vmatprep.subr.mxu0 0.0
    %3383 = vmatpush1.msra.mxu0 0.0
    %3384 = vmatprep.subr.mxu0 0.0
    %3385 = vmatpush1.msra.mxu0 0.0
    %3386 = vmatprep.subr.mxu0 0.0
    %3387 = vmatpush1.msra.mxu0 0.0
    %3388 = vmatprep.subr.mxu0 0.0
    %3389 = vmatpush1.msra.mxu0 0.0
    %3390 = vmatprep.subr.mxu0 0.0
    %3391 = vmatpush1.msra.mxu0 0.0
    %3392 = vmatprep.subr.mxu0 0.0
    %3393 = vmatpush1.msra.mxu0 0.0
    %3394 = vmatprep.subr.mxu0 0.0
    %3395 = vmatpush1.msra.mxu0 0.0
    %3396 = vmatprep.subr.mxu0 0.0
    %3397 = vmatpush1.msra.mxu0 0.0
    %3398 = vmatprep.subr.mxu0 0.0
    %3399 = vmatpush1.msra.mxu0 0.0
    %3400 = vmatprep.subr.mxu0 0.0
    %3401 = vmatpush1.msra.mxu0 0.0
    %3402 = vmatprep.subr.mxu0 0.0
    %3403 = vmatpush1.msra.mxu0 0.0
    %3404 = vmatprep.subr.mxu0 0.0
    %3405 = vmatpush1.msra.mxu0 0.0
    %3406 = vmatprep.subr.mxu0 0.0
    %3407 = vmatpush1.msra.mxu0 0.0
    %3408 = vmatprep.subr.mxu0 0.0
    %3409 = vmatpush1.msra.mxu0 0.0
    %3410 = vmatprep.subr.mxu0 0.0
    %3411 = vmatpush1.msra.mxu0 0.0
    %3412 = vmatprep.subr.mxu0 0.0
    %3413 = vmatpush1.msra.mxu0 0.0
    %3414 = vmatprep.subr.mxu0 0.0
    %3415 = vmatpush1.msra.mxu0 0.0
    %3416 = vmatprep.subr.mxu0 0.0
    %3417 = vmatpush1.msra.mxu0 0.0
    %3418 = vmatprep.subr.mxu0 0.0
    %3419 = vmatpush1.msra.mxu0 0.0
    %3420 = vmatprep.subr.mxu0 0.0
    %3421 = vmatpush1.msra.mxu0 0.0
    %3422 = vmatprep.subr.mxu0 0.0
    %3423 = vmatpush1.msra.mxu0 0.0
    %3424 = vmatprep.mubr.f32.mxu0 0.0
    %3425 = vmatmul.mubr.f32.gmra.mrb[0].mxu0 %v3358
    %v3426 = vpop.f32.mrb[0].mxu0
    %v3427 = vadd.f32 0.0, %v3426
    %v3428 = vpop.f32.mrb[0].mxu0
    %v3429 = vadd.f32 0.0, %v3428
    %3430 = vdwg.mxu0
    %3431 = vmatprep.subr.mxu0 %v3150
    %3432 = vmatpush1.msra.mxu0 %v3149
    %3433 = vmatprep.subr.mxu0 %v3169
    %3434 = vmatpush1.msra.mxu0 %v3168
    %3435 = vmatprep.subr.mxu0 %v3188
    %3436 = vmatpush1.msra.mxu0 %v3187
    %3437 = vmatprep.subr.mxu0 %v3207
    %3438 = vmatpush1.msra.mxu0 %v3206
    %3439 = vmatprep.subr.mxu0 %v3226
    %3440 = vmatpush1.msra.mxu0 %v3225
    %3441 = vmatprep.subr.mxu0 %v3245
    %3442 = vmatpush1.msra.mxu0 %v3244
    %3443 = vmatprep.subr.mxu0 %v3264
    %3444 = vmatpush1.msra.mxu0 %v3263
    %3445 = vmatprep.subr.mxu0 %v3283
    %3446 = vmatpush1.msra.mxu0 %v3282
    %3447 = vmatprep.subr.mxu0 %v3302
    %3448 = vmatpush1.msra.mxu0 %v3301
    %3449 = vmatprep.subr.mxu0 %v3321
    %3450 = vmatpush1.msra.mxu0 %v3320
    %3451 = vmatprep.subr.mxu0 %v3340
    %3452 = vmatpush1.msra.mxu0 %v3339
    %3453 = vmatprep.subr.mxu0 0.0
    %3454 = vmatpush1.msra.mxu0 0.0
    %3455 = vmatprep.subr.mxu0 0.0
    %3456 = vmatpush1.msra.mxu0 0.0
    %3457 = vmatprep.subr.mxu0 0.0
    %3458 = vmatpush1.msra.mxu0 0.0
    %3459 = vmatprep.subr.mxu0 0.0
    %3460 = vmatpush1.msra.mxu0 0.0
    %3461 = vmatprep.subr.mxu0 0.0
    %3462 = vmatpush1.msra.mxu0 0.0
    %3463 = vmatprep.subr.mxu0 0.0
    %3464 = vmatpush1.msra.mxu0 0.0
    %3465 = vmatprep.subr.mxu0 0.0
    %3466 = vmatpush1.msra.mxu0 0.0
    %3467 = vmatprep.subr.mxu0 0.0
    %3468 = vmatpush1.msra.mxu0 0.0
    %3469 = vmatprep.subr.mxu0 0.0
    %3470 = vmatpush1.msra.mxu0 0.0
    %3471 = vmatprep.subr.mxu0 0.0
    %3472 = vmatpush1.msra.mxu0 0.0
    %3473 = vmatprep.subr.mxu0 0.0
    %3474 = vmatpush1.msra.mxu0 0.0
    %3475 = vmatprep.subr.mxu0 0.0
    %3476 = vmatpush1.msra.mxu0 0.0
    %3477 = vmatprep.subr.mxu0 0.0
    %3478 = vmatpush1.msra.mxu0 0.0
    %3479 = vmatprep.subr.mxu0 0.0
    %3480 = vmatpush1.msra.mxu0 0.0
    %3481 = vmatprep.subr.mxu0 0.0
    %3482 = vmatpush1.msra.mxu0 0.0
    %3483 = vmatprep.subr.mxu0 0.0
    %3484 = vmatpush1.msra.mxu0 0.0
    %3485 = vmatprep.subr.mxu0 0.0
    %3486 = vmatpush1.msra.mxu0 0.0
    %3487 = vmatprep.subr.mxu0 0.0
    %3488 = vmatpush1.msra.mxu0 0.0
    %3489 = vmatprep.subr.mxu0 0.0
    %3490 = vmatpush1.msra.mxu0 0.0
    %3491 = vmatprep.subr.mxu0 0.0
    %3492 = vmatpush1.msra.mxu0 0.0
    %3493 = vmatprep.subr.mxu0 0.0
    %3494 = vmatpush1.msra.mxu0 0.0
    %3495 = vmatprep.mubr.f32.mxu0 0.0
    %3496 = vmatmul.mubr.f32.gmra.mrb[0].mxu0 %v3358
    %v3497 = vpop.f32.mrb[0].mxu0
    %v3498 = vadd.f32 0.0, %v3497
    %v3499 = vpop.f32.mrb[0].mxu0
    %v3500 = vadd.f32 0.0, %v3499
    %3501 = vdwg.mxu0
    %3502 = vmatprep.subr.mxu0 %v3152
    %3503 = vmatpush1.msra.mxu0 %v3151
    %3504 = vmatprep.subr.mxu0 %v3171
    %3505 = vmatpush1.msra.mxu0 %v3170
    %3506 = vmatprep.subr.mxu0 %v3190
    %3507 = vmatpush1.msra.mxu0 %v3189
    %3508 = vmatprep.subr.mxu0 %v3209
    %3509 = vmatpush1.msra.mxu0 %v3208
    %3510 = vmatprep.subr.mxu0 %v3228
    %3511 = vmatpush1.msra.mxu0 %v3227
    %3512 = vmatprep.subr.mxu0 %v3247
    %3513 = vmatpush1.msra.mxu0 %v3246
    %3514 = vmatprep.subr.mxu0 %v3266
    %3515 = vmatpush1.msra.mxu0 %v3265
    %3516 = vmatprep.subr.mxu0 %v3285
    %3517 = vmatpush1.msra.mxu0 %v3284
    %3518 = vmatprep.subr.mxu0 %v3304
    %3519 = vmatpush1.msra.mxu0 %v3303
    %3520 = vmatprep.subr.mxu0 %v3323
    %3521 = vmatpush1.msra.mxu0 %v3322
    %3522 = vmatprep.subr.mxu0 %v3342
    %3523 = vmatpush1.msra.mxu0 %v3341
    %3524 = vmatprep.subr.mxu0 0.0
    %3525 = vmatpush1.msra.mxu0 0.0
    %3526 = vmatprep.subr.mxu0 0.0
    %3527 = vmatpush1.msra.mxu0 0.0
    %3528 = vmatprep.subr.mxu0 0.0
    %3529 = vmatpush1.msra.mxu0 0.0
    %3530 = vmatprep.subr.mxu0 0.0
    %3531 = vmatpush1.msra.mxu0 0.0
    %3532 = vmatprep.subr.mxu0 0.0
    %3533 = vmatpush1.msra.mxu0 0.0
    %3534 = vmatprep.subr.mxu0 0.0
    %3535 = vmatpush1.msra.mxu0 0.0
    %3536 = vmatprep.subr.mxu0 0.0
    %3537 = vmatpush1.msra.mxu0 0.0
    %3538 = vmatprep.subr.mxu0 0.0
    %3539 = vmatpush1.msra.mxu0 0.0
    %3540 = vmatprep.subr.mxu0 0.0
    %3541 = vmatpush1.msra.mxu0 0.0
    %3542 = vmatprep.subr.mxu0 0.0
    %3543 = vmatpush1.msra.mxu0 0.0
    %3544 = vmatprep.subr.mxu0 0.0
    %3545 = vmatpush1.msra.mxu0 0.0
    %3546 = vmatprep.subr.mxu0 0.0
    %3547 = vmatpush1.msra.mxu0 0.0
    %3548 = vmatprep.subr.mxu0 0.0
    %3549 = vmatpush1.msra.mxu0 0.0
    %3550 = vmatprep.subr.mxu0 0.0
    %3551 = vmatpush1.msra.mxu0 0.0
    %3552 = vmatprep.subr.mxu0 0.0
    %3553 = vmatpush1.msra.mxu0 0.0
    %3554 = vmatprep.subr.mxu0 0.0
    %3555 = vmatpush1.msra.mxu0 0.0
    %3556 = vmatprep.subr.mxu0 0.0
    %3557 = vmatpush1.msra.mxu0 0.0
    %3558 = vmatprep.subr.mxu0 0.0
    %3559 = vmatpush1.msra.mxu0 0.0
    %3560 = vmatprep.subr.mxu0 0.0
    %3561 = vmatpush1.msra.mxu0 0.0
    %3562 = vmatprep.subr.mxu0 0.0
    %3563 = vmatpush1.msra.mxu0 0.0
    %3564 = vmatprep.subr.mxu0 0.0
    %3565 = vmatpush1.msra.mxu0 0.0
    %3566 = vmatprep.mubr.f32.mxu0 0.0
    %3567 = vmatmul.mubr.f32.gmra.mrb[0].mxu0 %v3358
    %v3568 = vpop.f32.mrb[0].mxu0
    %v3569 = vadd.f32 0.0, %v3568
    %v3570 = vpop.f32.mrb[0].mxu0
    %v3571 = vadd.f32 0.0, %v3570
    %3572 = vdwg.mxu0
    %3573 = vmatprep.subr.mxu0 %v3154
    %3574 = vmatpush1.msra.mxu0 %v3153
    %3575 = vmatprep.subr.mxu0 %v3173
    %3576 = vmatpush1.msra.mxu0 %v3172
    %3577 = vmatprep.subr.mxu0 %v3192
    %3578 = vmatpush1.msra.mxu0 %v3191
    %3579 = vmatprep.subr.mxu0 %v3211
    %3580 = vmatpush1.msra.mxu0 %v3210
    %3581 = vmatprep.subr.mxu0 %v3230
    %3582 = vmatpush1.msra.mxu0 %v3229
    %3583 = vmatprep.subr.mxu0 %v3249
    %3584 = vmatpush1.msra.mxu0 %v3248
    %3585 = vmatprep.subr.mxu0 %v3268
    %3586 = vmatpush1.msra.mxu0 %v3267
    %3587 = vmatprep.subr.mxu0 %v3287
    %3588 = vmatpush1.msra.mxu0 %v3286
    %3589 = vmatprep.subr.mxu0 %v3306
    %3590 = vmatpush1.msra.mxu0 %v3305
    %3591 = vmatprep.subr.mxu0 %v3325
    %3592 = vmatpush1.msra.mxu0 %v3324
    %3593 = vmatprep.subr.mxu0 %v3344
    %3594 = vmatpush1.msra.mxu0 %v3343
    %3595 = vmatprep.subr.mxu0 0.0
    %3596 = vmatpush1.msra.mxu0 0.0
    %3597 = vmatprep.subr.mxu0 0.0
    %3598 = vmatpush1.msra.mxu0 0.0
    %3599 = vmatprep.subr.mxu0 0.0
    %3600 = vmatpush1.msra.mxu0 0.0
    %3601 = vmatprep.subr.mxu0 0.0
    %3602 = vmatpush1.msra.mxu0 0.0
    %3603 = vmatprep.subr.mxu0 0.0
    %3604 = vmatpush1.msra.mxu0 0.0
    %3605 = vmatprep.subr.mxu0 0.0
    %3606 = vmatpush1.msra.mxu0 0.0
    %3607 = vmatprep.subr.mxu0 0.0
    %3608 = vmatpush1.msra.mxu0 0.0
    %3609 = vmatprep.subr.mxu0 0.0
    %3610 = vmatpush1.msra.mxu0 0.0
    %3611 = vmatprep.subr.mxu0 0.0
    %3612 = vmatpush1.msra.mxu0 0.0
    %3613 = vmatprep.subr.mxu0 0.0
    %3614 = vmatpush1.msra.mxu0 0.0
    %3615 = vmatprep.subr.mxu0 0.0
    %3616 = vmatpush1.msra.mxu0 0.0
    %3617 = vmatprep.subr.mxu0 0.0
    %3618 = vmatpush1.msra.mxu0 0.0
    %3619 = vmatprep.subr.mxu0 0.0
    %3620 = vmatpush1.msra.mxu0 0.0
    %3621 = vmatprep.subr.mxu0 0.0
    %3622 = vmatpush1.msra.mxu0 0.0
    %3623 = vmatprep.subr.mxu0 0.0
    %3624 = vmatpush1.msra.mxu0 0.0
    %3625 = vmatprep.subr.mxu0 0.0
    %3626 = vmatpush1.msra.mxu0 0.0
    %3627 = vmatprep.subr.mxu0 0.0
    %3628 = vmatpush1.msra.mxu0 0.0
    %3629 = vmatprep.subr.mxu0 0.0
    %3630 = vmatpush1.msra.mxu0 0.0
    %3631 = vmatprep.subr.mxu0 0.0
    %3632 = vmatpush1.msra.mxu0 0.0
    %3633 = vmatprep.subr.mxu0 0.0
    %3634 = vmatpush1.msra.mxu0 0.0
    %3635 = vmatprep.subr.mxu0 0.0
    %3636 = vmatpush1.msra.mxu0 0.0
    %3637 = vmatprep.mubr.f32.mxu0 0.0
    %3638 = vmatmul.mubr.f32.gmra.mrb[0].mxu0 %v3358
    %v3639 = vpop.f32.mrb[0].mxu0
    %v3640 = vadd.f32 0.0, %v3639
    %v3641 = vpop.f32.mrb[0].mxu0
    %v3642 = vadd.f32 0.0, %v3641
    %3643 = vdwg.mxu0
    %3644 = vmatprep.subr.mxu0 %v3156
    %3645 = vmatpush1.msra.mxu0 %v3155
    %3646 = vmatprep.subr.mxu0 %v3175
    %3647 = vmatpush1.msra.mxu0 %v3174
    %3648 = vmatprep.subr.mxu0 %v3194
    %3649 = vmatpush1.msra.mxu0 %v3193
    %3650 = vmatprep.subr.mxu0 %v3213
    %3651 = vmatpush1.msra.mxu0 %v3212
    %3652 = vmatprep.subr.mxu0 %v3232
    %3653 = vmatpush1.msra.mxu0 %v3231
    %3654 = vmatprep.subr.mxu0 %v3251
    %3655 = vmatpush1.msra.mxu0 %v3250
    %3656 = vmatprep.subr.mxu0 %v3270
    %3657 = vmatpush1.msra.mxu0 %v3269
    %3658 = vmatprep.subr.mxu0 %v3289
    %3659 = vmatpush1.msra.mxu0 %v3288
    %3660 = vmatprep.subr.mxu0 %v3308
    %3661 = vmatpush1.msra.mxu0 %v3307
    %3662 = vmatprep.subr.mxu0 %v3327
    %3663 = vmatpush1.msra.mxu0 %v3326
    %3664 = vmatprep.subr.mxu0 %v3346
    %3665 = vmatpush1.msra.mxu0 %v3345
    %3666 = vmatprep.subr.mxu0 0.0
    %3667 = vmatpush1.msra.mxu0 0.0
    %3668 = vmatprep.subr.mxu0 0.0
    %3669 = vmatpush1.msra.mxu0 0.0
    %3670 = vmatprep.subr.mxu0 0.0
    %3671 = vmatpush1.msra.mxu0 0.0
    %3672 = vmatprep.subr.mxu0 0.0
    %3673 = vmatpush1.msra.mxu0 0.0
    %3674 = vmatprep.subr.mxu0 0.0
    %3675 = vmatpush1.msra.mxu0 0.0
    %3676 = vmatprep.subr.mxu0 0.0
    %3677 = vmatpush1.msra.mxu0 0.0
    %3678 = vmatprep.subr.mxu0 0.0
    %3679 = vmatpush1.msra.mxu0 0.0
    %3680 = vmatprep.subr.mxu0 0.0
    %3681 = vmatpush1.msra.mxu0 0.0
    %3682 = vmatprep.subr.mxu0 0.0
    %3683 = vmatpush1.msra.mxu0 0.0
    %3684 = vmatprep.subr.mxu0 0.0
    %3685 = vmatpush1.msra.mxu0 0.0
    %3686 = vmatprep.subr.mxu0 0.0
    %3687 = vmatpush1.msra.mxu0 0.0
    %3688 = vmatprep.subr.mxu0 0.0
    %3689 = vmatpush1.msra.mxu0 0.0
    %3690 = vmatprep.subr.mxu0 0.0
    %3691 = vmatpush1.msra.mxu0 0.0
    %3692 = vmatprep.subr.mxu0 0.0
    %3693 = vmatpush1.msra.mxu0 0.0
    %3694 = vmatprep.subr.mxu0 0.0
    %3695 = vmatpush1.msra.mxu0 0.0
    %3696 = vmatprep.subr.mxu0 0.0
    %3697 = vmatpush1.msra.mxu0 0.0
    %3698 = vmatprep.subr.mxu0 0.0
    %3699 = vmatpush1.msra.mxu0 0.0
    %3700 = vmatprep.subr.mxu0 0.0
    %3701 = vmatpush1.msra.mxu0 0.0
    %3702 = vmatprep.subr.mxu0 0.0
    %3703 = vmatpush1.msra.mxu0 0.0
    %3704 = vmatprep.subr.mxu0 0.0
    %3705 = vmatpush1.msra.mxu0 0.0
    %3706 = vmatprep.subr.mxu0 0.0
    %3707 = vmatpush1.msra.mxu0 0.0
    %3708 = vmatprep.mubr.f32.mxu0 0.0
    %3709 = vmatmul.mubr.f32.gmra.mrb[0].mxu0 %v3358
    %v3710 = vpop.f32.mrb[0].mxu0
    %v3711 = vadd.f32 0.0, %v3710
    %v3712 = vpop.f32.mrb[0].mxu0
    %v3713 = vadd.f32 0.0, %v3712
    %3714 = vdwg.mxu0
    %3715 = vmatprep.subr.mxu0 %v3158
    %3716 = vmatpush1.msra.mxu0 %v3157
    %3717 = vmatprep.subr.mxu0 %v3177
    %3718 = vmatpush1.msra.mxu0 %v3176
    %3719 = vmatprep.subr.mxu0 %v3196
    %3720 = vmatpush1.msra.mxu0 %v3195
    %3721 = vmatprep.subr.mxu0 %v3215
    %3722 = vmatpush1.msra.mxu0 %v3214
    %3723 = vmatprep.subr.mxu0 %v3234
    %3724 = vmatpush1.msra.mxu0 %v3233
    %3725 = vmatprep.subr.mxu0 %v3253
    %3726 = vmatpush1.msra.mxu0 %v3252
    %3727 = vmatprep.subr.mxu0 %v3272
    %3728 = vmatpush1.msra.mxu0 %v3271
    %3729 = vmatprep.subr.mxu0 %v3291
    %3730 = vmatpush1.msra.mxu0 %v3290
    %3731 = vmatprep.subr.mxu0 %v3310
    %3732 = vmatpush1.msra.mxu0 %v3309
    %3733 = vmatprep.subr.mxu0 %v3329
    %3734 = vmatpush1.msra.mxu0 %v3328
    %3735 = vmatprep.subr.mxu0 %v3348
    %3736 = vmatpush1.msra.mxu0 %v3347
    %3737 = vmatprep.subr.mxu0 0.0
    %3738 = vmatpush1.msra.mxu0 0.0
    %3739 = vmatprep.subr.mxu0 0.0
    %3740 = vmatpush1.msra.mxu0 0.0
    %3741 = vmatprep.subr.mxu0 0.0
    %3742 = vmatpush1.msra.mxu0 0.0
    %3743 = vmatprep.subr.mxu0 0.0
    %3744 = vmatpush1.msra.mxu0 0.0
    %3745 = vmatprep.subr.mxu0 0.0
    %3746 = vmatpush1.msra.mxu0 0.0
    %3747 = vmatprep.subr.mxu0 0.0
    %3748 = vmatpush1.msra.mxu0 0.0
    %3749 = vmatprep.subr.mxu0 0.0
    %3750 = vmatpush1.msra.mxu0 0.0
    %3751 = vmatprep.subr.mxu0 0.0
    %3752 = vmatpush1.msra.mxu0 0.0
    %3753 = vmatprep.subr.mxu0 0.0
    %3754 = vmatpush1.msra.mxu0 0.0
    %3755 = vmatprep.subr.mxu0 0.0
    %3756 = vmatpush1.msra.mxu0 0.0
    %3757 = vmatprep.subr.mxu0 0.0
    %3758 = vmatpush1.msra.mxu0 0.0
    %3759 = vmatprep.subr.mxu0 0.0
    %3760 = vmatpush1.msra.mxu0 0.0
    %3761 = vmatprep.subr.mxu0 0.0
    %3762 = vmatpush1.msra.mxu0 0.0
    %3763 = vmatprep.subr.mxu0 0.0
    %3764 = vmatpush1.msra.mxu0 0.0
    %3765 = vmatprep.subr.mxu0 0.0
    %3766 = vmatpush1.msra.mxu0 0.0
    %3767 = vmatprep.subr.mxu0 0.0
    %3768 = vmatpush1.msra.mxu0 0.0
    %3769 = vmatprep.subr.mxu0 0.0
    %3770 = vmatpush1.msra.mxu0 0.0
    %3771 = vmatprep.subr.mxu0 0.0
    %3772 = vmatpush1.msra.mxu0 0.0
    %3773 = vmatprep.subr.mxu0 0.0
    %3774 = vmatpush1.msra.mxu0 0.0
    %3775 = vmatprep.subr.mxu0 0.0
    %3776 = vmatpush1.msra.mxu0 0.0
    %3777 = vmatprep.subr.mxu0 0.0
    %3778 = vmatpush1.msra.mxu0 0.0
    %3779 = vmatprep.mubr.f32.mxu0 0.0
    %3780 = vmatmul.mubr.f32.gmra.mrb[0].mxu0 %v3358
    %v3781 = vpop.f32.mrb[0].mxu0
    %v3782 = vadd.f32 0.0, %v3781
    %v3783 = vpop.f32.mrb[0].mxu0
    %v3784 = vadd.f32 0.0, %v3783
    %3785 = vdwg.mxu0
    %3786 = vmatprep.subr.mxu0 %v3160
    %3787 = vmatpush1.msra.mxu0 %v3159
    %3788 = vmatprep.subr.mxu0 %v3179
    %3789 = vmatpush1.msra.mxu0 %v3178
    %3790 = vmatprep.subr.mxu0 %v3198
    %3791 = vmatpush1.msra.mxu0 %v3197
    %3792 = vmatprep.subr.mxu0 %v3217
    %3793 = vmatpush1.msra.mxu0 %v3216
    %3794 = vmatprep.subr.mxu0 %v3236
    %3795 = vmatpush1.msra.mxu0 %v3235
    %3796 = vmatprep.subr.mxu0 %v3255
    %3797 = vmatpush1.msra.mxu0 %v3254
    %3798 = vmatprep.subr.mxu0 %v3274
    %3799 = vmatpush1.msra.mxu0 %v3273
    %3800 = vmatprep.subr.mxu0 %v3293
    %3801 = vmatpush1.msra.mxu0 %v3292
    %3802 = vmatprep.subr.mxu0 %v3312
    %3803 = vmatpush1.msra.mxu0 %v3311
    %3804 = vmatprep.subr.mxu0 %v3331
    %3805 = vmatpush1.msra.mxu0 %v3330
    %3806 = vmatprep.subr.mxu0 %v3350
    %3807 = vmatpush1.msra.mxu0 %v3349
    %3808 = vmatprep.subr.mxu0 0.0
    %3809 = vmatpush1.msra.mxu0 0.0
    %3810 = vmatprep.subr.mxu0 0.0
    %3811 = vmatpush1.msra.mxu0 0.0
    %3812 = vmatprep.subr.mxu0 0.0
    %3813 = vmatpush1.msra.mxu0 0.0
    %3814 = vmatprep.subr.mxu0 0.0
    %3815 = vmatpush1.msra.mxu0 0.0
    %3816 = vmatprep.subr.mxu0 0.0
    %3817 = vmatpush1.msra.mxu0 0.0
    %3818 = vmatprep.subr.mxu0 0.0
    %3819 = vmatpush1.msra.mxu0 0.0
    %3820 = vmatprep.subr.mxu0 0.0
    %3821 = vmatpush1.msra.mxu0 0.0
    %3822 = vmatprep.subr.mxu0 0.0
    %3823 = vmatpush1.msra.mxu0 0.0
    %3824 = vmatprep.subr.mxu0 0.0
    %3825 = vmatpush1.msra.mxu0 0.0
    %3826 = vmatprep.subr.mxu0 0.0
    %3827 = vmatpush1.msra.mxu0 0.0
    %3828 = vmatprep.subr.mxu0 0.0
    %3829 = vmatpush1.msra.mxu0 0.0
    %3830 = vmatprep.subr.mxu0 0.0
    %3831 = vmatpush1.msra.mxu0 0.0
    %3832 = vmatprep.subr.mxu0 0.0
    %3833 = vmatpush1.msra.mxu0 0.0
    %3834 = vmatprep.subr.mxu0 0.0
    %3835 = vmatpush1.msra.mxu0 0.0
    %3836 = vmatprep.subr.mxu0 0.0
    %3837 = vmatpush1.msra.mxu0 0.0
    %3838 = vmatprep.subr.mxu0 0.0
    %3839 = vmatpush1.msra.mxu0 0.0
    %3840 = vmatprep.subr.mxu0 0.0
    %3841 = vmatpush1.msra.mxu0 0.0
    %3842 = vmatprep.subr.mxu0 0.0
    %3843 = vmatpush1.msra.mxu0 0.0
    %3844 = vmatprep.subr.mxu0 0.0
    %3845 = vmatpush1.msra.mxu0 0.0
    %3846 = vmatprep.subr.mxu0 0.0
    %3847 = vmatpush1.msra.mxu0 0.0
    %3848 = vmatprep.subr.mxu0 0.0
    %3849 = vmatpush1.msra.mxu0 0.0
    %3850 = vmatprep.mubr.f32.mxu0 0.0
    %3851 = vmatmul.mubr.f32.gmra.mrb[0].mxu0 %v3358
    %v3852 = vpop.f32.mrb[0].mxu0
    %v3853 = vadd.f32 0.0, %v3852
    %v3854 = vpop.f32.mrb[0].mxu0
    %v3855 = vadd.f32 0.0, %v3854
    %3856 = vdwg.mxu0
    %3857 = vmatprep.subr.mxu0 %v3162
    %3858 = vmatpush1.msra.mxu0 %v3161
    %3859 = vmatprep.subr.mxu0 %v3181
    %3860 = vmatpush1.msra.mxu0 %v3180
    %3861 = vmatprep.subr.mxu0 %v3200
    %3862 = vmatpush1.msra.mxu0 %v3199
    %3863 = vmatprep.subr.mxu0 %v3219
    %3864 = vmatpush1.msra.mxu0 %v3218
    %3865 = vmatprep.subr.mxu0 %v3238
    %3866 = vmatpush1.msra.mxu0 %v3237
    %3867 = vmatprep.subr.mxu0 %v3257
    %3868 = vmatpush1.msra.mxu0 %v3256
    %3869 = vmatprep.subr.mxu0 %v3276
    %3870 = vmatpush1.msra.mxu0 %v3275
    %3871 = vmatprep.subr.mxu0 %v3295
    %3872 = vmatpush1.msra.mxu0 %v3294
    %3873 = vmatprep.subr.mxu0 %v3314
    %3874 = vmatpush1.msra.mxu0 %v3313
    %3875 = vmatprep.subr.mxu0 %v3333
    %3876 = vmatpush1.msra.mxu0 %v3332
    %3877 = vmatprep.subr.mxu0 %v3352
    %3878 = vmatpush1.msra.mxu0 %v3351
    %3879 = vmatprep.subr.mxu0 0.0
    %3880 = vmatpush1.msra.mxu0 0.0
    %3881 = vmatprep.subr.mxu0 0.0
    %3882 = vmatpush1.msra.mxu0 0.0
    %3883 = vmatprep.subr.mxu0 0.0
    %3884 = vmatpush1.msra.mxu0 0.0
    %3885 = vmatprep.subr.mxu0 0.0
    %3886 = vmatpush1.msra.mxu0 0.0
    %3887 = vmatprep.subr.mxu0 0.0
    %3888 = vmatpush1.msra.mxu0 0.0
    %3889 = vmatprep.subr.mxu0 0.0
    %3890 = vmatpush1.msra.mxu0 0.0
    %3891 = vmatprep.subr.mxu0 0.0
    %3892 = vmatpush1.msra.mxu0 0.0
    %3893 = vmatprep.subr.mxu0 0.0
    %3894 = vmatpush1.msra.mxu0 0.0
    %3895 = vmatprep.subr.mxu0 0.0
    %3896 = vmatpush1.msra.mxu0 0.0
    %3897 = vmatprep.subr.mxu0 0.0
    %3898 = vmatpush1.msra.mxu0 0.0
    %3899 = vmatprep.subr.mxu0 0.0
    %3900 = vmatpush1.msra.mxu0 0.0
    %3901 = vmatprep.subr.mxu0 0.0
    %3902 = vmatpush1.msra.mxu0 0.0
    %3903 = vmatprep.subr.mxu0 0.0
    %3904 = vmatpush1.msra.mxu0 0.0
    %3905 = vmatprep.subr.mxu0 0.0
    %3906 = vmatpush1.msra.mxu0 0.0
    %3907 = vmatprep.subr.mxu0 0.0
    %3908 = vmatpush1.msra.mxu0 0.0
    %3909 = vmatprep.subr.mxu0 0.0
    %3910 = vmatpush1.msra.mxu0 0.0
    %3911 = vmatprep.subr.mxu0 0.0
    %3912 = vmatpush1.msra.mxu0 0.0
    %3913 = vmatprep.subr.mxu0 0.0
    %3914 = vmatpush1.msra.mxu0 0.0
    %3915 = vmatprep.subr.mxu0 0.0
    %3916 = vmatpush1.msra.mxu0 0.0
    %3917 = vmatprep.subr.mxu0 0.0
    %3918 = vmatpush1.msra.mxu0 0.0
    %3919 = vmatprep.subr.mxu0 0.0
    %3920 = vmatpush1.msra.mxu0 0.0
    %3921 = vmatprep.mubr.f32.mxu0 0.0
    %3922 = vmatmul.mubr.f32.gmra.mrb[0].mxu0 %v3358
    %v3923 = vpop.f32.mrb[0].mxu0
    %v3924 = vadd.f32 0.0, %v3923
    %v3925 = vpop.f32.mrb[0].mxu0
    %v3926 = vadd.f32 0.0, %v3925
    %3927 = vdwg.mxu0
    %3928 = vmatprep.subr.mxu0 %v3164
    %3929 = vmatpush1.msra.mxu0 %v3163
    %3930 = vmatprep.subr.mxu0 %v3183
    %3931 = vmatpush1.msra.mxu0 %v3182
    %3932 = vmatprep.subr.mxu0 %v3202
    %3933 = vmatpush1.msra.mxu0 %v3201
    %3934 = vmatprep.subr.mxu0 %v3221
    %3935 = vmatpush1.msra.mxu0 %v3220
    %3936 = vmatprep.subr.mxu0 %v3240
    %3937 = vmatpush1.msra.mxu0 %v3239
    %3938 = vmatprep.subr.mxu0 %v3259
    %3939 = vmatpush1.msra.mxu0 %v3258
    %3940 = vmatprep.subr.mxu0 %v3278
    %3941 = vmatpush1.msra.mxu0 %v3277
    %3942 = vmatprep.subr.mxu0 %v3297
    %3943 = vmatpush1.msra.mxu0 %v3296
    %3944 = vmatprep.subr.mxu0 %v3316
    %3945 = vmatpush1.msra.mxu0 %v3315
    %3946 = vmatprep.subr.mxu0 %v3335
    %3947 = vmatpush1.msra.mxu0 %v3334
    %3948 = vmatprep.subr.mxu0 %v3354
    %3949 = vmatpush1.msra.mxu0 %v3353
    %3950 = vmatprep.subr.mxu0 0.0
    %3951 = vmatpush1.msra.mxu0 0.0
    %3952 = vmatprep.subr.mxu0 0.0
    %3953 = vmatpush1.msra.mxu0 0.0
    %3954 = vmatprep.subr.mxu0 0.0
    %3955 = vmatpush1.msra.mxu0 0.0
    %3956 = vmatprep.subr.mxu0 0.0
    %3957 = vmatpush1.msra.mxu0 0.0
    %3958 = vmatprep.subr.mxu0 0.0
    %3959 = vmatpush1.msra.mxu0 0.0
    %3960 = vmatprep.subr.mxu0 0.0
    %3961 = vmatpush1.msra.mxu0 0.0
    %3962 = vmatprep.subr.mxu0 0.0
    %3963 = vmatpush1.msra.mxu0 0.0
    %3964 = vmatprep.subr.mxu0 0.0
    %3965 = vmatpush1.msra.mxu0 0.0
    %3966 = vmatprep.subr.mxu0 0.0
    %3967 = vmatpush1.msra.mxu0 0.0
    %3968 = vmatprep.subr.mxu0 0.0
    %3969 = vmatpush1.msra.mxu0 0.0
    %3970 = vmatprep.subr.mxu0 0.0
    %3971 = vmatpush1.msra.mxu0 0.0
    %3972 = vmatprep.subr.mxu0 0.0
    %3973 = vmatpush1.msra.mxu0 0.0
    %3974 = vmatprep.subr.mxu0 0.0
    %3975 = vmatpush1.msra.mxu0 0.0
    %3976 = vmatprep.subr.mxu0 0.0
    %3977 = vmatpush1.msra.mxu0 0.0
    %3978 = vmatprep.subr.mxu0 0.0
    %3979 = vmatpush1.msra.mxu0 0.0
    %3980 = vmatprep.subr.mxu0 0.0
    %3981 = vmatpush1.msra.mxu0 0.0
    %3982 = vmatprep.subr.mxu0 0.0
    %3983 = vmatpush1.msra.mxu0 0.0
    %3984 = vmatprep.subr.mxu0 0.0
    %3985 = vmatpush1.msra.mxu0 0.0
    %3986 = vmatprep.subr.mxu0 0.0
    %3987 = vmatpush1.msra.mxu0 0.0
    %3988 = vmatprep.subr.mxu0 0.0
    %3989 = vmatpush1.msra.mxu0 0.0
    %3990 = vmatprep.subr.mxu0 0.0
    %3991 = vmatpush1.msra.mxu0 0.0
    %3992 = vmatprep.mubr.f32.mxu0 0.0
    %3993 = vmatmul.mubr.f32.gmra.mrb[0].mxu0 %v3358
    %v3994 = vpop.f32.mrb[0].mxu0
    %v3995 = vadd.f32 0.0, %v3994
    %v3996 = vpop.f32.mrb[0].mxu0
    %v3997 = vadd.f32 0.0, %v3996
    %3998 = vdwg.mxu0
    %3999 = vmatprep.subr.mxu0 0.0
    %4000 = vmatpush1.msra.mxu0 %v3165
    %4001 = vmatprep.subr.mxu0 0.0
    %4002 = vmatpush1.msra.mxu0 %v3184
    %4003 = vmatprep.subr.mxu0 0.0
    %4004 = vmatpush1.msra.mxu0 %v3203
    %4005 = vmatprep.subr.mxu0 0.0
    %4006 = vmatpush1.msra.mxu0 %v3222
    %4007 = vmatprep.subr.mxu0 0.0
    %4008 = vmatpush1.msra.mxu0 %v3241
    %4009 = vmatprep.subr.mxu0 0.0
    %4010 = vmatpush1.msra.mxu0 %v3260
    %4011 = vmatprep.subr.mxu0 0.0
    %4012 = vmatpush1.msra.mxu0 %v3279
    %4013 = vmatprep.subr.mxu0 0.0
    %4014 = vmatpush1.msra.mxu0 %v3298
    %4015 = vmatprep.subr.mxu0 0.0
    %4016 = vmatpush1.msra.mxu0 %v3317
    %4017 = vmatprep.subr.mxu0 0.0
    %4018 = vmatpush1.msra.mxu0 %v3336
    %4019 = vmatprep.subr.mxu0 0.0
    %4020 = vmatpush1.msra.mxu0 %v3355
    %4021 = vmatprep.subr.mxu0 0.0
    %4022 = vmatpush1.msra.mxu0 0.0
    %4023 = vmatprep.subr.mxu0 0.0
    %4024 = vmatpush1.msra.mxu0 0.0
    %4025 = vmatprep.subr.mxu0 0.0
    %4026 = vmatpush1.msra.mxu0 0.0
    %4027 = vmatprep.subr.mxu0 0.0
    %4028 = vmatpush1.msra.mxu0 0.0
    %4029 = vmatprep.subr.mxu0 0.0
    %4030 = vmatpush1.msra.mxu0 0.0
    %4031 = vmatprep.subr.mxu0 0.0
    %4032 = vmatpush1.msra.mxu0 0.0
    %4033 = vmatprep.subr.mxu0 0.0
    %4034 = vmatpush1.msra.mxu0 0.0
    %4035 = vmatprep.subr.mxu0 0.0
    %4036 = vmatpush1.msra.mxu0 0.0
    %4037 = vmatprep.subr.mxu0 0.0
    %4038 = vmatpush1.msra.mxu0 0.0
    %4039 = vmatprep.subr.mxu0 0.0
    %4040 = vmatpush1.msra.mxu0 0.0
    %4041 = vmatprep.subr.mxu0 0.0
    %4042 = vmatpush1.msra.mxu0 0.0
    %4043 = vmatprep.subr.mxu0 0.0
    %4044 = vmatpush1.msra.mxu0 0.0
    %4045 = vmatprep.subr.mxu0 0.0
    %4046 = vmatpush1.msra.mxu0 0.0
    %4047 = vmatprep.subr.mxu0 0.0
    %4048 = vmatpush1.msra.mxu0 0.0
    %4049 = vmatprep.subr.mxu0 0.0
    %4050 = vmatpush1.msra.mxu0 0.0
    %4051 = vmatprep.subr.mxu0 0.0
    %4052 = vmatpush1.msra.mxu0 0.0
    %4053 = vmatprep.subr.mxu0 0.0
    %4054 = vmatpush1.msra.mxu0 0.0
    %4055 = vmatprep.subr.mxu0 0.0
    %4056 = vmatpush1.msra.mxu0 0.0
    %4057 = vmatprep.subr.mxu0 0.0
    %4058 = vmatpush1.msra.mxu0 0.0
    %4059 = vmatprep.subr.mxu0 0.0
    %4060 = vmatpush1.msra.mxu0 0.0
    %4061 = vmatprep.subr.mxu0 0.0
    %4062 = vmatpush1.msra.mxu0 0.0
    %4063 = vmatprep.mubr.f32.mxu0 0.0
    %4064 = vmatmul.mubr.f32.gmra.mrb[0].mxu0 %v3358
    %v4065 = vpop.f32.mrb[0].mxu0
    %v4066 = vadd.f32 0.0, %v4065
    %v4067 = vpop.f32.mrb[0].mxu0
    %4068 = vdwg.mxu0
    %v4087 = vcombine.low %v3427, %v3429
    %v4088 = vcombine.low %v3498, %v3500
    %v4089 = vcombine.low %v3569, %v3571
    %v4090 = vcombine.low %v3640, %v3642
    %v4091 = vcombine.low %v3711, %v3713
    %v4092 = vcombine.low %v3782, %v3784
    %v4093 = vcombine.low %v3853, %v3855
    %v4094 = vcombine.low %v3924, %v3926
    %v4095 = vcombine.low %v3995, %v3997
    %4105 = vst [vmem:[%s3] sm:$0x77] %v4087
    %4106 = vst [vmem:[%s3 + $0x8] sm:$0x77] %v4088
    %4107 = vst [vmem:[%s3 + $0x10] sm:$0x77] %v4089
    %4108 = vst [vmem:[%s3 + $0x18] sm:$0x77] %v4090
    %4109 = vst [vmem:[%s3 + $0x20] sm:$0x77] %v4091
    %4110 = vst [vmem:[%s3 + $0x28] sm:$0x77] %v4092
    %4111 = vst [vmem:[%s3 + $0x30] sm:$0x77] %v4093
    %4112 = vst [vmem:[%s3 + $0x38] sm:$0x77] %v4094
    %4113 = vst [vmem:[%s3 + $0x40] sm:$0x77] %v4095
    %4114 = vst [vmem:[%s3 + $0x48] sm:$0x7] %v4066
    // Predicated region
    $region10: #{conv_transpose3d_pallas.2} parent=1 // pred_check
      _
    $region11: #{conv_transpose3d_pallas.2} parent=1 // pred_check_branch
      %4116 = sbr.rel (0) target = $region13
    $region12: #{conv_transpose3d_pallas.2} parent=1 // pred_region
      _
    $region13: #{conv_transpose3d_pallas.2} parent=1 // pred_fallthru
      _
    // Predicated region
    $region14: #{conv_transpose3d_pallas.2} parent=1 // pred_check
      _
    $region15: #{conv_transpose3d_pallas.2} parent=1 // pred_check_branch
      %4118 = sbr.rel (0) target = $region17
    $region16: #{conv_transpose3d_pallas.2} parent=1 // pred_region
      _
    $region17: #{conv_transpose3d_pallas.2} parent=1 // pred_fallthru
      _

</llo_original>
